<compile_context>
chip_gen: v7x
topology: tpu7x:2x2x1
jax: 0.10.0
libtpu: 0.0.40
codegen_flags: <defaults>
</compile_context>

<pallas_src>
import jax
import jax.numpy as jnp
from jax.experimental import pallas as pl
from jax.experimental.pallas import tpu as pltpu


# ----------------------------------------------------------------------------
# Pallas kernels
# ----------------------------------------------------------------------------
def _conv_pool_kernel(p00_ref, p01_ref, p10_ref, p11_ref, w_ref, b_ref, o_ref):
    """Fused conv(+bias) + 2x2/stride-2 maxpool.

    Each p?? ref holds the im2col patch rows of ONE 2x2-pool position,
    shape (TILE_M, K) bf16; w_ref is (K, Np) bf16; b_ref (1, Np) f32.
    Running max over the four MXU matmuls keeps only two live f32 (TILE_M, Np)
    temporaries.  Bias is per output channel, so adding it after the max is
    exact.
    """
    w = w_ref[...]
    y = jnp.dot(p00_ref[...], w, preferred_element_type=jnp.float32)
    y = jnp.maximum(y, jnp.dot(p01_ref[...], w, preferred_element_type=jnp.float32))
    y = jnp.maximum(y, jnp.dot(p10_ref[...], w, preferred_element_type=jnp.float32))
    y = jnp.maximum(y, jnp.dot(p11_ref[...], w, preferred_element_type=jnp.float32))
    o_ref[...] = (y + b_ref[...]).astype(o_ref.dtype)


def _fc_fused_kernel(x_ref, w1_ref, b1_ref, w2_ref, b2_ref, o_ref):
    """relu(relu(x @ w1 + b1) @ w2 + b2); hidden activation never leaves VMEM."""
    h = jnp.dot(x_ref[...], w1_ref[...], preferred_element_type=jnp.float32)
    h = jnp.maximum(h + b1_ref[...], 0.0).astype(jnp.bfloat16)
    out = jnp.dot(h, w2_ref[...], preferred_element_type=jnp.float32)
    o_ref[...] = jnp.maximum(out + b2_ref[...], 0.0).astype(o_ref.dtype)


# ----------------------------------------------------------------------------
# Wrappers
# ----------------------------------------------------------------------------
def _tile_rows(m, cap):
    """Row-tile size: the full extent if it fits, else the 8-aligned cap."""
    if m <= cap:
        return m
    return max(8, (cap // 8) * 8)


def conv_pool(x_cl, w_flat, b_pad, *, kh, kw, tile_cap):
    """Fused valid (kh,kw) conv + bias + 2x2/stride-2 maxpool.

    x_cl   : (B, H, W, C) channel-last activations (C = REAL channel count).
    w_flat : (Kp, Np) bf16 weight, rows ordered (kh, kw, c) zero-padded to Kp;
             Np is the 128-padded output-channel count.
    b_pad  : (1, Np) f32 bias (zero-padded).
    Returns (B, PH, PW, Np) bf16 channel-last pooled output (lane-dense).
    """
    B, H, W, C = x_cl.shape
    OH, OW = H - kh + 1, W - kw + 1
    PH, PW = OH // 2, OW // 2
    K = kh * kw * C
    Kp, Np = w_flat.shape

    # im2col over the REAL channels only (no 128-channel pad in the
    # contraction); contiguous slices, then one small zero-pad up to Kp.
    # TODO(synk): move this im2col inside the kernel (per-offset matmul
    # accumulation) to avoid materializing the patch matrices in HBM.
    cols = [x_cl[:, i:i + OH, j:j + OW, :] for i in range(kh) for j in range(kw)]
    patches = jnp.stack(cols, axis=3).reshape(B, OH, OW, K)
    if Kp > K:
        patches = jnp.pad(patches, ((0, 0), (0, 0), (0, 0), (0, Kp - K)))
    patches = patches.astype(jnp.bfloat16)

    Mp = B * PH * PW

    def pool_pos(py, px):
        # Patch rows of one 2x2 pool position; strided only on H/W (XLA side),
        # lanes stay dense.
        return patches[:, py::2, px::2, :].reshape(Mp, Kp)

    p00, p01, p10, p11 = (pool_pos(0, 0), pool_pos(0, 1),
                          pool_pos(1, 0), pool_pos(1, 1))

    tile_m = _tile_rows(Mp, tile_cap)
    grid = (pl.cdiv(Mp, tile_m),)

    out = pl.pallas_call(
        _conv_pool_kernel,
        out_shape=jax.ShapeDtypeStruct((Mp, Np), jnp.bfloat16),
        grid=grid,
        in_specs=[pl.BlockSpec((tile_m, Kp), lambda i: (i, 0))] * 4 + [
            pl.BlockSpec((Kp, Np), lambda i: (0, 0)),
            pl.BlockSpec((1, Np), lambda i: (0, 0)),
        ],
        out_specs=pl.BlockSpec((tile_m, Np), lambda i: (i, 0)),
        compiler_params=pltpu.CompilerParams(
            dimension_semantics=("parallel",)),
    )(p00, p01, p10, p11, w_flat, b_pad)

    return out.reshape(B, PH, PW, Np)


def fc_fused(x_flat, wf1p, bf1p, wf2p, bf2p, *, tile_cap=256):
    """Fused Linear+ReLU+Linear+ReLU, tiled over the batch dimension."""
    B, K1 = x_flat.shape
    K1w, N1 = wf1p.shape
    K2, N2 = wf2p.shape
    assert K1 == K1w and N1 == K2
    x_flat = x_flat.astype(jnp.bfloat16)

    tile_b = _tile_rows(B, tile_cap)
    grid = (pl.cdiv(B, tile_b),)

    return pl.pallas_call(
        _fc_fused_kernel,
        out_shape=jax.ShapeDtypeStruct((B, N2), jnp.float32),
        grid=grid,
        in_specs=[
            pl.BlockSpec((tile_b, K1), lambda i: (i, 0)),
            pl.BlockSpec((K1, N1), lambda i: (0, 0)),
            pl.BlockSpec((1, N1), lambda i: (0, 0)),
            pl.BlockSpec((K2, N2), lambda i: (0, 0)),
            pl.BlockSpec((1, N2), lambda i: (0, 0)),
        ],
        out_specs=pl.BlockSpec((tile_b, N2), lambda i: (i, 0)),
        compiler_params=pltpu.CompilerParams(
            dimension_semantics=("parallel",)),
    )(x_flat, wf1p, bf1p, wf2p, bf2p)


# ----------------------------------------------------------------------------
# Parameters: torch-shaped init, then one-time pre-transpose / pad / bf16 cast
# ----------------------------------------------------------------------------
def init_lenet_params(key):
    ks = jax.random.split(key, 8)
    f32 = jnp.float32

    def rnd(k, shape, fan_in):
        return jax.random.normal(k, shape, f32) * (1.0 / jnp.sqrt(fan_in))

    return {
        "w1": rnd(ks[0], (20, 1, 5, 5), 1 * 5 * 5),      # Conv2d(1, 20, 5)
        "b1": rnd(ks[1], (20,), 1 * 5 * 5),
        "w2": rnd(ks[2], (50, 20, 5, 5), 20 * 5 * 5),    # Conv2d(20, 50, 5)
        "b2": rnd(ks[3], (50,), 20 * 5 * 5),
        "wf1": rnd(ks[4], (500, 800), 800),              # Linear(800, 500)
        "bf1": rnd(ks[5], (500,), 800),
        "wf2": rnd(ks[6], (10, 500), 500),               # Linear(500, 10)
        "bf2": rnd(ks[7], (10,), 500),
    }


def prepare_params(raw):
    """One-time weight re-layout: pre-transposed, channel-last, minimally padded, bf16."""
    f32, bf16 = jnp.float32, jnp.bfloat16

    def pad_to(a, shape):
        return jnp.pad(a, [(0, t - s) for s, t in zip(a.shape, shape)])

    # conv1: OIHW (20,1,5,5) -> rows (kh,kw,c); K 25 -> 32 (NOT 128), OC 20 -> 128.
    w1 = raw["w1"].transpose(2, 3, 1, 0).reshape(5 * 5 * 1, 20)
    w1p = pad_to(w1, (32, 128)).astype(bf16)
    b1p = pad_to(raw["b1"].reshape(1, 20), (1, 128)).astype(f32)

    # conv2: OIHW (50,20,5,5) -> rows (kh,kw,c) over the 20 REAL channels;
    # K 500 -> 512 (NOT 3200), OC 50 -> 128.
    w2 = raw["w2"].transpose(2, 3, 1, 0).reshape(5 * 5 * 20, 50)
    w2p = pad_to(w2, (512, 128)).astype(bf16)
    b2p = pad_to(raw["b2"].reshape(1, 50), (1, 128)).astype(f32)

    # fc1: torch (500, 800) with input order (c,h,w); our flatten order is
    # (h, w, c_pad64) over the channel-last pooled conv2 output -> K = 1024.
    wf1 = raw["wf1"].reshape(500, 50, 4, 4).transpose(2, 3, 1, 0)   # (4,4,50,500)
    wf1 = pad_to(wf1, (4, 4, 64, 512))
    wf1p = wf1.reshape(4 * 4 * 64, 512).astype(bf16)                # (1024, 512)
    bf1p = pad_to(raw["bf1"].reshape(1, 500), (1, 512)).astype(f32)

    # fc2: torch (10, 500) -> (in,out) padded (512, 128).
    wf2p = pad_to(raw["wf2"].T, (512, 128)).astype(bf16)
    bf2p = pad_to(raw["bf2"].reshape(1, 10), (1, 128)).astype(f32)

    return {"w1p": w1p, "b1p": b1p, "w2p": w2p, "b2p": b2p,
            "wf1p": wf1p, "bf1p": bf1p, "wf2p": wf2p, "bf2p": bf2p}


# ----------------------------------------------------------------------------
# LeNet forward (3 pallas_calls)
# ----------------------------------------------------------------------------
C1_REAL = 20   # real conv1 output channels
C2_PAD = 64    # conv2 channels kept for the fc1 flatten (50 real + 14 zero)


def lenet_forward(p, x):
    # TODO(synk): at tiny batch the whole network could be one pallas_call
    # (all weights ~1.6 MiB bf16 fit VMEM); kept as 3 calls for robustness.
    B = x.shape[0]
    # NCHW (B,1,28,28) -> channel-last; C == 1 so this is a pure reshape.
    x_cl = x.reshape(B, 28, 28, 1)
    # Layer1: Conv2d(1->20, 5) + MaxPool2d(2,2)   -> (B,12,12,128) bf16
    s1 = conv_pool(x_cl, p["w1p"], p["b1p"], kh=5, kw=5, tile_cap=1024)
    # Drop the channel pad BEFORE the conv2 im2col: contraction K = 512, not 3200.
    s1 = s1[..., :C1_REAL]
    # Layer2: Conv2d(20->50, 5) + MaxPool2d(2,2)  -> (B,4,4,128) bf16
    s2 = conv_pool(s1, p["w2p"], p["b2p"], kh=5, kw=5, tile_cap=512)
    # Keep 64 channels before flatten: fc1 K = 1024, not 2048.  fc1 weight rows
    # were permuted/padded at init so this matches torch's NCHW .view(B,-1).
    xf = s2[..., :C2_PAD].reshape(B, 4 * 4 * C2_PAD)
    # LayerFC: Linear(800->500)+ReLU+Linear(500->10)+ReLU, fused, batch-tiled.
    out = fc_fused(xf, p["wf1p"], p["bf1p"], p["wf2p"], p["bf2p"])  # (B,128) f32
    return out[:, :10]


if __name__ == "__main__":
    key = jax.random.PRNGKey(0)
    k_params, k_x = jax.random.split(key)
    params = prepare_params(init_lenet_params(k_params))
    # MNIST-shaped input (the 4*4*50 FC layer forces 28x28); small batch of 2.
    x = jax.random.uniform(k_x, (2, 1, 28, 28), dtype=jnp.float32)

    fwd = jax.jit(lenet_forward)
    out = jax.block_until_ready(fwd(params, x))
    assert out.shape == (2, 10) and out.dtype == jnp.float32
    assert bool(jnp.all(jnp.isfinite(out)))
    print("KERNEL_OK")
</pallas_src>

<mosaic_0001>
module attributes {stable_mosaic.version = 11 : i64} {
  func.func @_conv_pool_kernel(%arg0: i32, %arg1: memref<288x32xbf16, #tpu.memory_space<vmem>>, %arg2: memref<288x32xbf16, #tpu.memory_space<vmem>>, %arg3: memref<288x32xbf16, #tpu.memory_space<vmem>>, %arg4: memref<288x32xbf16, #tpu.memory_space<vmem>>, %arg5: memref<32x128xbf16, #tpu.memory_space<vmem>>, %arg6: memref<1x128xf32, #tpu.memory_space<vmem>>, %arg7: memref<288x128xbf16, #tpu.memory_space<vmem>>) attributes {dimension_semantics = [#tpu.dimension_semantics<parallel>], iteration_bounds = array<i64: 1>, scalar_prefetch = 0 : i64, scratch_operands = 0 : i64, tpu.core_type = #tpu.core_type<tc>, window_params = [{transform_indices = @transform_0, window_bounds = array<i64: 288, 32>}, {transform_indices = @transform_1, window_bounds = array<i64: 288, 32>}, {transform_indices = @transform_2, window_bounds = array<i64: 288, 32>}, {transform_indices = @transform_3, window_bounds = array<i64: 288, 32>}, {pipeline_mode = #tpu.pipeline_mode<synchronous>, transform_indices = @transform_4, window_bounds = array<i64: 32, 128>}, {pipeline_mode = #tpu.pipeline_mode<synchronous>, transform_indices = @transform_5, window_bounds = array<i64: 1, 128>}, {transform_indices = @transform_6, window_bounds = array<i64: 288, 128>}]} {
    %c0 = arith.constant 0 : index
    %c0_0 = arith.constant 0 : index
    %0 = vector.load %arg5[%c0, %c0_0] : memref<32x128xbf16, #tpu.memory_space<vmem>>, vector<32x128xbf16>
    %c0_1 = arith.constant 0 : index
    %c0_2 = arith.constant 0 : index
    %1 = vector.load %arg1[%c0_1, %c0_2] : memref<288x32xbf16, #tpu.memory_space<vmem>>, vector<288x32xbf16>
    %cst = arith.constant dense<0.000000e+00> : vector<288x128xf32>
    %2 = tpu.matmul %1, %0, %cst {dimension_numbers = #tpu.dot_dimension_numbers<[1], [0], [0], [1], [0, 0, 1, 1], [], []>} : vector<288x32xbf16>, vector<32x128xbf16>, vector<288x128xf32> -> vector<288x128xf32>
    %c0_3 = arith.constant 0 : index
    %c0_4 = arith.constant 0 : index
    %3 = vector.load %arg2[%c0_3, %c0_4] : memref<288x32xbf16, #tpu.memory_space<vmem>>, vector<288x32xbf16>
    %cst_5 = arith.constant dense<0.000000e+00> : vector<288x128xf32>
    %4 = tpu.matmul %3, %0, %cst_5 {dimension_numbers = #tpu.dot_dimension_numbers<[1], [0], [0], [1], [0, 0, 1, 1], [], []>} : vector<288x32xbf16>, vector<32x128xbf16>, vector<288x128xf32> -> vector<288x128xf32>
    %5 = arith.maximumf %2, %4 : vector<288x128xf32>
    %c0_6 = arith.constant 0 : index
    %c0_7 = arith.constant 0 : index
    %6 = vector.load %arg3[%c0_6, %c0_7] : memref<288x32xbf16, #tpu.memory_space<vmem>>, vector<288x32xbf16>
    %cst_8 = arith.constant dense<0.000000e+00> : vector<288x128xf32>
    %7 = tpu.matmul %6, %0, %cst_8 {dimension_numbers = #tpu.dot_dimension_numbers<[1], [0], [0], [1], [0, 0, 1, 1], [], []>} : vector<288x32xbf16>, vector<32x128xbf16>, vector<288x128xf32> -> vector<288x128xf32>
    %8 = arith.maximumf %5, %7 : vector<288x128xf32>
    %c0_9 = arith.constant 0 : index
    %c0_10 = arith.constant 0 : index
    %9 = vector.load %arg4[%c0_9, %c0_10] : memref<288x32xbf16, #tpu.memory_space<vmem>>, vector<288x32xbf16>
    %cst_11 = arith.constant dense<0.000000e+00> : vector<288x128xf32>
    %10 = tpu.matmul %9, %0, %cst_11 {dimension_numbers = #tpu.dot_dimension_numbers<[1], [0], [0], [1], [0, 0, 1, 1], [], []>} : vector<288x32xbf16>, vector<32x128xbf16>, vector<288x128xf32> -> vector<288x128xf32>
    %11 = arith.maximumf %8, %10 : vector<288x128xf32>
    %c0_12 = arith.constant 0 : index
    %c0_13 = arith.constant 0 : index
    %12 = vector.load %arg6[%c0_12, %c0_13] : memref<1x128xf32, #tpu.memory_space<vmem>>, vector<1x128xf32>
    %13 = vector.broadcast %12 : vector<1x128xf32> to vector<288x128xf32>
    %14 = arith.addf %11, %13 : vector<288x128xf32>
    %15 = arith.truncf %14 : vector<288x128xf32> to vector<288x128xbf16>
    %c0_14 = arith.constant 0 : index
    %c0_15 = arith.constant 0 : index
    %16 = vector.load %arg7[%c0_14, %c0_15] : memref<288x128xbf16, #tpu.memory_space<vmem>>, vector<288x128xbf16>
    tpu.vector_store %arg7[%c0_14, %c0_15], %15 {strides = array<i32>} : memref<288x128xbf16, #tpu.memory_space<vmem>>, vector<288x128xbf16>,
    return
  }
  func.func @transform_0(%arg0: i32) -> (i32, i32) {
    %c0_i32 = arith.constant 0 : i32
    %c0_i32_0 = arith.constant 0 : i32
    return %arg0, %c0_i32 : i32, i32
  }
  func.func @transform_1(%arg0: i32) -> (i32, i32) {
    %c0_i32 = arith.constant 0 : i32
    %c0_i32_0 = arith.constant 0 : i32
    return %arg0, %c0_i32 : i32, i32
  }
  func.func @transform_2(%arg0: i32) -> (i32, i32) {
    %c0_i32 = arith.constant 0 : i32
    %c0_i32_0 = arith.constant 0 : i32
    return %arg0, %c0_i32 : i32, i32
  }
  func.func @transform_3(%arg0: i32) -> (i32, i32) {
    %c0_i32 = arith.constant 0 : i32
    %c0_i32_0 = arith.constant 0 : i32
    return %arg0, %c0_i32 : i32, i32
  }
  func.func @transform_4(%arg0: i32) -> (i32, i32) {
    %c0_i32 = arith.constant 0 : i32
    %c0_i32_0 = arith.constant 0 : i32
    %c0_i32_1 = arith.constant 0 : i32
    return %c0_i32, %c0_i32_0 : i32, i32
  }
  func.func @transform_5(%arg0: i32) -> (i32, i32) {
    %c0_i32 = arith.constant 0 : i32
    %c0_i32_0 = arith.constant 0 : i32
    %c0_i32_1 = arith.constant 0 : i32
    return %c0_i32, %c0_i32_0 : i32, i32
  }
  func.func @transform_6(%arg0: i32) -> (i32, i32) {
    %c0_i32 = arith.constant 0 : i32
    %c0_i32_0 = arith.constant 0 : i32
    return %arg0, %c0_i32 : i32, i32
  }
}

module attributes {stable_mosaic.version = 11 : i64} {
  func.func @_conv_pool_kernel(%arg0: i32, %arg1: memref<32x512xbf16, #tpu.memory_space<vmem>>, %arg2: memref<32x512xbf16, #tpu.memory_space<vmem>>, %arg3: memref<32x512xbf16, #tpu.memory_space<vmem>>, %arg4: memref<32x512xbf16, #tpu.memory_space<vmem>>, %arg5: memref<512x128xbf16, #tpu.memory_space<vmem>>, %arg6: memref<1x128xf32, #tpu.memory_space<vmem>>, %arg7: memref<32x128xbf16, #tpu.memory_space<vmem>>) attributes {dimension_semantics = [#tpu.dimension_semantics<parallel>], iteration_bounds = array<i64: 1>, scalar_prefetch = 0 : i64, scratch_operands = 0 : i64, tpu.core_type = #tpu.core_type<tc>, window_params = [{transform_indices = @transform_0, window_bounds = array<i64: 32, 512>}, {transform_indices = @transform_1, window_bounds = array<i64: 32, 512>}, {transform_indices = @transform_2, window_bounds = array<i64: 32, 512>}, {transform_indices = @transform_3, window_bounds = array<i64: 32, 512>}, {pipeline_mode = #tpu.pipeline_mode<synchronous>, transform_indices = @transform_4, window_bounds = array<i64: 512, 128>}, {pipeline_mode = #tpu.pipeline_mode<synchronous>, transform_indices = @transform_5, window_bounds = array<i64: 1, 128>}, {transform_indices = @transform_6, window_bounds = array<i64: 32, 128>}]} {
    %c0 = arith.constant 0 : index
    %c0_0 = arith.constant 0 : index
    %0 = vector.load %arg5[%c0, %c0_0] : memref<512x128xbf16, #tpu.memory_space<vmem>>, vector<512x128xbf16>
    %c0_1 = arith.constant 0 : index
    %c0_2 = arith.constant 0 : index
    %1 = vector.load %arg1[%c0_1, %c0_2] : memref<32x512xbf16, #tpu.memory_space<vmem>>, vector<32x512xbf16>
    %cst = arith.constant dense<0.000000e+00> : vector<32x128xf32>
    %2 = tpu.matmul %1, %0, %cst {dimension_numbers = #tpu.dot_dimension_numbers<[1], [0], [0], [1], [0, 0, 1, 1], [], []>} : vector<32x512xbf16>, vector<512x128xbf16>, vector<32x128xf32> -> vector<32x128xf32>
    %c0_3 = arith.constant 0 : index
    %c0_4 = arith.constant 0 : index
    %3 = vector.load %arg2[%c0_3, %c0_4] : memref<32x512xbf16, #tpu.memory_space<vmem>>, vector<32x512xbf16>
    %cst_5 = arith.constant dense<0.000000e+00> : vector<32x128xf32>
    %4 = tpu.matmul %3, %0, %cst_5 {dimension_numbers = #tpu.dot_dimension_numbers<[1], [0], [0], [1], [0, 0, 1, 1], [], []>} : vector<32x512xbf16>, vector<512x128xbf16>, vector<32x128xf32> -> vector<32x128xf32>
    %5 = arith.maximumf %2, %4 : vector<32x128xf32>
    %c0_6 = arith.constant 0 : index
    %c0_7 = arith.constant 0 : index
    %6 = vector.load %arg3[%c0_6, %c0_7] : memref<32x512xbf16, #tpu.memory_space<vmem>>, vector<32x512xbf16>
    %cst_8 = arith.constant dense<0.000000e+00> : vector<32x128xf32>
    %7 = tpu.matmul %6, %0, %cst_8 {dimension_numbers = #tpu.dot_dimension_numbers<[1], [0], [0], [1], [0, 0, 1, 1], [], []>} : vector<32x512xbf16>, vector<512x128xbf16>, vector<32x128xf32> -> vector<32x128xf32>
    %8 = arith.maximumf %5, %7 : vector<32x128xf32>
    %c0_9 = arith.constant 0 : index
    %c0_10 = arith.constant 0 : index
    %9 = vector.load %arg4[%c0_9, %c0_10] : memref<32x512xbf16, #tpu.memory_space<vmem>>, vector<32x512xbf16>
    %cst_11 = arith.constant dense<0.000000e+00> : vector<32x128xf32>
    %10 = tpu.matmul %9, %0, %cst_11 {dimension_numbers = #tpu.dot_dimension_numbers<[1], [0], [0], [1], [0, 0, 1, 1], [], []>} : vector<32x512xbf16>, vector<512x128xbf16>, vector<32x128xf32> -> vector<32x128xf32>
    %11 = arith.maximumf %8, %10 : vector<32x128xf32>
    %c0_12 = arith.constant 0 : index
    %c0_13 = arith.constant 0 : index
    %12 = vector.load %arg6[%c0_12, %c0_13] : memref<1x128xf32, #tpu.memory_space<vmem>>, vector<1x128xf32>
    %13 = vector.broadcast %12 : vector<1x128xf32> to vector<32x128xf32>
    %14 = arith.addf %11, %13 : vector<32x128xf32>
    %15 = arith.truncf %14 : vector<32x128xf32> to vector<32x128xbf16>
    %c0_14 = arith.constant 0 : index
    %c0_15 = arith.constant 0 : index
    %16 = vector.load %arg7[%c0_14, %c0_15] : memref<32x128xbf16, #tpu.memory_space<vmem>>, vector<32x128xbf16>
    tpu.vector_store %arg7[%c0_14, %c0_15], %15 {strides = array<i32>} : memref<32x128xbf16, #tpu.memory_space<vmem>>, vector<32x128xbf16>,
    return
  }
  func.func @transform_0(%arg0: i32) -> (i32, i32) {
    %c0_i32 = arith.constant 0 : i32
    %c0_i32_0 = arith.constant 0 : i32
    return %arg0, %c0_i32 : i32, i32
  }
  func.func @transform_1(%arg0: i32) -> (i32, i32) {
    %c0_i32 = arith.constant 0 : i32
    %c0_i32_0 = arith.constant 0 : i32
    return %arg0, %c0_i32 : i32, i32
  }
  func.func @transform_2(%arg0: i32) -> (i32, i32) {
    %c0_i32 = arith.constant 0 : i32
    %c0_i32_0 = arith.constant 0 : i32
    return %arg0, %c0_i32 : i32, i32
  }
  func.func @transform_3(%arg0: i32) -> (i32, i32) {
    %c0_i32 = arith.constant 0 : i32
    %c0_i32_0 = arith.constant 0 : i32
    return %arg0, %c0_i32 : i32, i32
  }
  func.func @transform_4(%arg0: i32) -> (i32, i32) {
    %c0_i32 = arith.constant 0 : i32
    %c0_i32_0 = arith.constant 0 : i32
    %c0_i32_1 = arith.constant 0 : i32
    return %c0_i32, %c0_i32_0 : i32, i32
  }
  func.func @transform_5(%arg0: i32) -> (i32, i32) {
    %c0_i32 = arith.constant 0 : i32
    %c0_i32_0 = arith.constant 0 : i32
    %c0_i32_1 = arith.constant 0 : i32
    return %c0_i32, %c0_i32_0 : i32, i32
  }
  func.func @transform_6(%arg0: i32) -> (i32, i32) {
    %c0_i32 = arith.constant 0 : i32
    %c0_i32_0 = arith.constant 0 : i32
    return %arg0, %c0_i32 : i32, i32
  }
}

module attributes {stable_mosaic.version = 11 : i64} {
  func.func @_fc_fused_kernel(%arg0: i32, %arg1: memref<2x1024xbf16, #tpu.memory_space<vmem>>, %arg2: memref<1024x512xbf16, #tpu.memory_space<vmem>>, %arg3: memref<1x512xf32, #tpu.memory_space<vmem>>, %arg4: memref<512x128xbf16, #tpu.memory_space<vmem>>, %arg5: memref<1x128xf32, #tpu.memory_space<vmem>>, %arg6: memref<2x128xf32, #tpu.memory_space<vmem>>) attributes {dimension_semantics = [#tpu.dimension_semantics<parallel>], iteration_bounds = array<i64: 1>, scalar_prefetch = 0 : i64, scratch_operands = 0 : i64, tpu.core_type = #tpu.core_type<tc>, window_params = [{transform_indices = @transform_0, window_bounds = array<i64: 2, 1024>}, {pipeline_mode = #tpu.pipeline_mode<synchronous>, transform_indices = @transform_1, window_bounds = array<i64: 1024, 512>}, {pipeline_mode = #tpu.pipeline_mode<synchronous>, transform_indices = @transform_2, window_bounds = array<i64: 1, 512>}, {pipeline_mode = #tpu.pipeline_mode<synchronous>, transform_indices = @transform_3, window_bounds = array<i64: 512, 128>}, {pipeline_mode = #tpu.pipeline_mode<synchronous>, transform_indices = @transform_4, window_bounds = array<i64: 1, 128>}, {transform_indices = @transform_5, window_bounds = array<i64: 2, 128>}]} {
    %c0 = arith.constant 0 : index
    %c0_0 = arith.constant 0 : index
    %0 = vector.load %arg1[%c0, %c0_0] : memref<2x1024xbf16, #tpu.memory_space<vmem>>, vector<2x1024xbf16>
    %c0_1 = arith.constant 0 : index
    %c0_2 = arith.constant 0 : index
    %1 = vector.load %arg2[%c0_1, %c0_2] : memref<1024x512xbf16, #tpu.memory_space<vmem>>, vector<1024x512xbf16>
    %cst = arith.constant dense<0.000000e+00> : vector<2x512xf32>
    %2 = tpu.matmul %0, %1, %cst {dimension_numbers = #tpu.dot_dimension_numbers<[1], [0], [0], [1], [0, 0, 1, 1], [], []>} : vector<2x1024xbf16>, vector<1024x512xbf16>, vector<2x512xf32> -> vector<2x512xf32>
    %c0_3 = arith.constant 0 : index
    %c0_4 = arith.constant 0 : index
    %3 = vector.load %arg3[%c0_3, %c0_4] : memref<1x512xf32, #tpu.memory_space<vmem>>, vector<1x512xf32>
    %4 = vector.broadcast %3 : vector<1x512xf32> to vector<2x512xf32>
    %5 = arith.addf %2, %4 : vector<2x512xf32>
    %cst_5 = arith.constant 0.000000e+00 : f32
    %6 = vector.broadcast %cst_5 : f32 to vector<2x512xf32>
    %7 = arith.maximumf %5, %6 : vector<2x512xf32>
    %8 = arith.truncf %7 : vector<2x512xf32> to vector<2x512xbf16>
    %c0_6 = arith.constant 0 : index
    %c0_7 = arith.constant 0 : index
    %9 = vector.load %arg4[%c0_6, %c0_7] : memref<512x128xbf16, #tpu.memory_space<vmem>>, vector<512x128xbf16>
    %cst_8 = arith.constant dense<0.000000e+00> : vector<2x128xf32>
    %10 = tpu.matmul %8, %9, %cst_8 {dimension_numbers = #tpu.dot_dimension_numbers<[1], [0], [0], [1], [0, 0, 1, 1], [], []>} : vector<2x512xbf16>, vector<512x128xbf16>, vector<2x128xf32> -> vector<2x128xf32>
    %c0_9 = arith.constant 0 : index
    %c0_10 = arith.constant 0 : index
    %11 = vector.load %arg5[%c0_9, %c0_10] : memref<1x128xf32, #tpu.memory_space<vmem>>, vector<1x128xf32>
    %12 = vector.broadcast %11 : vector<1x128xf32> to vector<2x128xf32>
    %13 = arith.addf %10, %12 : vector<2x128xf32>
    %cst_11 = arith.constant 0.000000e+00 : f32
    %14 = vector.broadcast %cst_11 : f32 to vector<2x128xf32>
    %15 = arith.maximumf %13, %14 : vector<2x128xf32>
    %c0_12 = arith.constant 0 : index
    %c0_13 = arith.constant 0 : index
    %16 = vector.load %arg6[%c0_12, %c0_13] : memref<2x128xf32, #tpu.memory_space<vmem>>, vector<2x128xf32>
    tpu.vector_store %arg6[%c0_12, %c0_13], %15 {strides = array<i32>} : memref<2x128xf32, #tpu.memory_space<vmem>>, vector<2x128xf32>,
    return
  }
  func.func @transform_0(%arg0: i32) -> (i32, i32) {
    %c0_i32 = arith.constant 0 : i32
    %c0_i32_0 = arith.constant 0 : i32
    return %arg0, %c0_i32 : i32, i32
  }
  func.func @transform_1(%arg0: i32) -> (i32, i32) {
    %c0_i32 = arith.constant 0 : i32
    %c0_i32_0 = arith.constant 0 : i32
    %c0_i32_1 = arith.constant 0 : i32
    return %c0_i32, %c0_i32_0 : i32, i32
  }
  func.func @transform_2(%arg0: i32) -> (i32, i32) {
    %c0_i32 = arith.constant 0 : i32
    %c0_i32_0 = arith.constant 0 : i32
    %c0_i32_1 = arith.constant 0 : i32
    return %c0_i32, %c0_i32_0 : i32, i32
  }
  func.func @transform_3(%arg0: i32) -> (i32, i32) {
    %c0_i32 = arith.constant 0 : i32
    %c0_i32_0 = arith.constant 0 : i32
    %c0_i32_1 = arith.constant 0 : i32
    return %c0_i32, %c0_i32_0 : i32, i32
  }
  func.func @transform_4(%arg0: i32) -> (i32, i32) {
    %c0_i32 = arith.constant 0 : i32
    %c0_i32_0 = arith.constant 0 : i32
    %c0_i32_1 = arith.constant 0 : i32
    return %c0_i32, %c0_i32_0 : i32, i32
  }
  func.func @transform_5(%arg0: i32) -> (i32, i32) {
    %c0_i32 = arith.constant 0 : i32
    %c0_i32_0 = arith.constant 0 : i32
    return %arg0, %c0_i32 : i32, i32
  }
}

</mosaic_0001>

<llo_original>
// kernel: lenet_forward.3
$region0: #{lenet_forward.3}
  #allocation0 [shape = 'u32[]', space=smem, size = 0x4, offset = 0x4, fixed_abs, tag = 'smem constant byte address 0x4 - core index']
  #allocation1 [shape = 'u32[144,128]{1,0:T(1,128)}', space=vmem, size = 0x12000, scoped, tag = 'internal scratch']
  %s0 = inlined_call_operand.vmem [shape: bf16[288,32], index: 0, kind: input, shape index: {}]
  %s1 = inlined_call_operand.vmem [shape: bf16[288,32], index: 1, kind: input, shape index: {}]
  %s2 = inlined_call_operand.vmem [shape: bf16[288,32], index: 2, kind: input, shape index: {}]
  %s3 = inlined_call_operand.vmem [shape: bf16[288,32], index: 3, kind: input, shape index: {}]
  %s4 = inlined_call_operand.vmem [shape: bf16[32,128], index: 4, kind: input, shape index: {}]
  %s5 = inlined_call_operand.vmem [shape: f32[1,128], index: 5, kind: input, shape index: {}]
  %s6 = inlined_call_operand.vmem [shape: bf16[288,128], index: 6, kind: output, shape index: {}]
  %s7 = sld [smem:[#allocation0]]
  $region34: #{lenet_forward.3} parent=0
    _
  %s9 = ssub.s32 1, %s7
  %s10 = scalar_select 0, %s9, %s7
  // Predicated region
  $region2: #{lenet_forward.3} parent=0 // pred_check
    _
  $region3: #{lenet_forward.3} parent=0 // pred_check_branch
    %12 = sbr.rel (0) target = $region5
  $region4: #{lenet_forward.3} parent=0 // pred_region
    _
  $region5: #{lenet_forward.3} parent=0 // pred_fallthru
    _
  // Predicated region
  $region6: #{lenet_forward.3} parent=0 // pred_check
    _
  $region7: #{lenet_forward.3} parent=0 // pred_check_branch
    %14 = sbr.rel (0) target = $region9
  $region8: #{lenet_forward.3} parent=0 // pred_region
    _
  $region9: #{lenet_forward.3} parent=0 // pred_fallthru
    _
  // Predicated region
  $region10: #{lenet_forward.3} parent=0 // pred_check
    _
  $region11: #{lenet_forward.3} parent=0 // pred_check_branch
    %16 = sbr.rel (0) target = $region13
  $region12: #{lenet_forward.3} parent=0 // pred_region
    _
  $region13: #{lenet_forward.3} parent=0 // pred_fallthru
    _
  // Predicated region
  $region14: #{lenet_forward.3} parent=0 // pred_check
    _
  $region15: #{lenet_forward.3} parent=0 // pred_check_branch
    %18 = sbr.rel (0) target = $region17
  $region16: #{lenet_forward.3} parent=0 // pred_region
    _
  $region17: #{lenet_forward.3} parent=0 // pred_fallthru
    _
  // Predicated region
  $region18: #{lenet_forward.3} parent=0 // pred_check
    _
  $region19: #{lenet_forward.3} parent=0 // pred_check_branch
    %20 = sbr.rel (0) target = $region21
  $region20: #{lenet_forward.3} parent=0 // pred_region
    _
  $region21: #{lenet_forward.3} parent=0 // pred_fallthru
    _
  // Predicated region
  $region22: #{lenet_forward.3} parent=0 // pred_check
    _
  $region23: #{lenet_forward.3} parent=0 // pred_check_branch
    %22 = sbr.rel (0) target = $region25
  $region24: #{lenet_forward.3} parent=0 // pred_region
    _
  $region25: #{lenet_forward.3} parent=0 // pred_fallthru
    _
  %v24 = vld [vmem:[%s4] sm:$0xf]
  %v25 = vld [vmem:[%s4 + $0x4] sm:$0xf]
  %v26 = vld [vmem:[%s4 + $0x8] sm:$0xf]
  %v27 = vld [vmem:[%s4 + $0xc] sm:$0xf]
  %v28 = vld [vmem:[%s0] sm:$0xf]
  %v29 = vld [vmem:[%s0 + $0x4] sm:$0xf]
  %v30 = vld [vmem:[%s0 + $0x8] sm:$0xf]
  %v31 = vld [vmem:[%s0 + $0xc] sm:$0xf]
  %v32 = vld [vmem:[%s0 + $0x10] sm:$0xf]
  %v33 = vld [vmem:[%s0 + $0x14] sm:$0xf]
  %v34 = vld [vmem:[%s0 + $0x18] sm:$0xf]
  %v35 = vld [vmem:[%s0 + $0x1c] sm:$0xf]
  %v36 = vld [vmem:[%s0 + $0x20] sm:$0xf]
  %v37 = vld [vmem:[%s0 + $0x24] sm:$0xf]
  %v38 = vld [vmem:[%s0 + $0x28] sm:$0xf]
  %v39 = vld [vmem:[%s0 + $0x2c] sm:$0xf]
  %v40 = vld [vmem:[%s0 + $0x30] sm:$0xf]
  %v41 = vld [vmem:[%s0 + $0x34] sm:$0xf]
  %v42 = vld [vmem:[%s0 + $0x38] sm:$0xf]
  %v43 = vld [vmem:[%s0 + $0x3c] sm:$0xf]
  %v44 = vld [vmem:[%s0 + $0x40] sm:$0xf]
  %v45 = vld [vmem:[%s0 + $0x44] sm:$0xf]
  %v46 = vld [vmem:[%s0 + $0x48] sm:$0xf]
  %v47 = vld [vmem:[%s0 + $0x4c] sm:$0xf]
  %v48 = vld [vmem:[%s0 + $0x50] sm:$0xf]
  %v49 = vld [vmem:[%s0 + $0x54] sm:$0xf]
  %v50 = vld [vmem:[%s0 + $0x58] sm:$0xf]
  %v51 = vld [vmem:[%s0 + $0x5c] sm:$0xf]
  %v52 = vld [vmem:[%s0 + $0x60] sm:$0xf]
  %v53 = vld [vmem:[%s0 + $0x64] sm:$0xf]
  %v54 = vld [vmem:[%s0 + $0x68] sm:$0xf]
  %v55 = vld [vmem:[%s0 + $0x6c] sm:$0xf]
  %v56 = vld [vmem:[%s0 + $0x70] sm:$0xf]
  %v57 = vld [vmem:[%s0 + $0x74] sm:$0xf]
  %v58 = vld [vmem:[%s0 + $0x78] sm:$0xf]
  %v59 = vld [vmem:[%s0 + $0x7c] sm:$0xf]
  %v60 = vld [vmem:[%s0 + $0x80] sm:$0xf]
  %v61 = vld [vmem:[%s0 + $0x84] sm:$0xf]
  %v62 = vld [vmem:[%s0 + $0x88] sm:$0xf]
  %v63 = vld [vmem:[%s0 + $0x8c] sm:$0xf]
  %v100 = vunpack.c.l.b16 %v28
  %v101 = vunpack.c.l.b16 %v29
  %v102 = vunpack.c.l.b16 %v30
  %v103 = vunpack.c.l.b16 %v31
  %v104 = vunpack.c.l.b16 %v32
  %v105 = vunpack.c.l.b16 %v33
  %v106 = vunpack.c.l.b16 %v34
  %v107 = vunpack.c.l.b16 %v35
  %v108 = vunpack.c.l.b16 %v36
  %v109 = vunpack.c.l.b16 %v37
  %v110 = vunpack.c.l.b16 %v38
  %v111 = vunpack.c.l.b16 %v39
  %v112 = vunpack.c.l.b16 %v40
  %v113 = vunpack.c.l.b16 %v41
  %v114 = vunpack.c.l.b16 %v42
  %v115 = vunpack.c.l.b16 %v43
  %v116 = vunpack.c.l.b16 %v44
  %v117 = vunpack.c.l.b16 %v45
  %v118 = vunpack.c.l.b16 %v46
  %v119 = vunpack.c.l.b16 %v47
  %v120 = vunpack.c.l.b16 %v48
  %v121 = vunpack.c.l.b16 %v49
  %v122 = vunpack.c.l.b16 %v50
  %v123 = vunpack.c.l.b16 %v51
  %v124 = vunpack.c.l.b16 %v52
  %v125 = vunpack.c.l.b16 %v53
  %v126 = vunpack.c.l.b16 %v54
  %v127 = vunpack.c.l.b16 %v55
  %v128 = vunpack.c.l.b16 %v56
  %v129 = vunpack.c.l.b16 %v57
  %v130 = vunpack.c.l.b16 %v58
  %v131 = vunpack.c.l.b16 %v59
  %v132 = vunpack.c.l.b16 %v60
  %v133 = vunpack.c.l.b16 %v61
  %v134 = vunpack.c.l.b16 %v62
  %v135 = vunpack.c.l.b16 %v63
  %v136 = vpack.c.b16 %v101, %v100
  %v137 = vpack.c.b16 %v103, %v102
  %v138 = vpack.c.b16 %v105, %v104
  %v139 = vpack.c.b16 %v107, %v106
  %v140 = vpack.c.b16 %v109, %v108
  %v141 = vpack.c.b16 %v111, %v110
  %v142 = vpack.c.b16 %v113, %v112
  %v143 = vpack.c.b16 %v115, %v114
  %v144 = vpack.c.b16 %v117, %v116
  %v145 = vpack.c.b16 %v119, %v118
  %v146 = vpack.c.b16 %v121, %v120
  %v147 = vpack.c.b16 %v123, %v122
  %v148 = vpack.c.b16 %v125, %v124
  %v149 = vpack.c.b16 %v127, %v126
  %v150 = vpack.c.b16 %v129, %v128
  %v151 = vpack.c.b16 %v131, %v130
  %v152 = vpack.c.b16 %v133, %v132
  %v153 = vpack.c.b16 %v135, %v134
  %v158 = vunpack.c.l.b16 %v24
  %v159 = vunpack.c.l.b16 %v25
  %v160 = vunpack.c.l.b16 %v26
  %v161 = vunpack.c.l.b16 %v27
  %v162 = vpack.c.b16 %v159, %v158
  %v163 = vpack.c.b16 %v161, %v160
  %vm166 = vcmask 261120
  %v168 = vsel %vm166, %v136, 0
  %v171 = vsel %vm166, %v137, 0
  %v174 = vsel %vm166, %v138, 0
  %v177 = vsel %vm166, %v139, 0
  %v180 = vsel %vm166, %v140, 0
  %v183 = vsel %vm166, %v141, 0
  %v186 = vsel %vm166, %v142, 0
  %v189 = vsel %vm166, %v143, 0
  %v192 = vsel %vm166, %v144, 0
  %v195 = vsel %vm166, %v145, 0
  %v198 = vsel %vm166, %v146, 0
  %v201 = vsel %vm166, %v147, 0
  %v204 = vsel %vm166, %v148, 0
  %v207 = vsel %vm166, %v149, 0
  %v210 = vsel %vm166, %v150, 0
  %v213 = vsel %vm166, %v151, 0
  %v216 = vsel %vm166, %v152, 0
  %v219 = vsel %vm166, %v153, 0
  %221 = vmatprep.subr.bf16.mxu0 0
  %222 = vmatpush1.bf16.msra.mxu0 %v162
  %223 = vmatprep.subr.bf16.mxu0 0
  %224 = vmatpush1.bf16.msra.mxu0 %v163
  %225 = vmatprep.subr.bf16.mxu0 0
  %226 = vmatpush1.bf16.msra.mxu0 0
  %227 = vmatprep.subr.bf16.mxu0 0
  %228 = vmatpush1.bf16.msra.mxu0 0
  %229 = vmatprep.subr.bf16.mxu0 0
  %230 = vmatpush1.bf16.msra.mxu0 0
  %231 = vmatprep.subr.bf16.mxu0 0
  %232 = vmatpush1.bf16.msra.mxu0 0
  %233 = vmatprep.subr.bf16.mxu0 0
  %234 = vmatpush1.bf16.msra.mxu0 0
  %235 = vmatprep.subr.bf16.mxu0 0
  %236 = vmatpush1.bf16.msra.mxu0 0
  %237 = vmatprep.subr.bf16.mxu0 0
  %238 = vmatpush1.bf16.msra.mxu0 0
  %239 = vmatprep.subr.bf16.mxu0 0
  %240 = vmatpush1.bf16.msra.mxu0 0
  %241 = vmatprep.subr.bf16.mxu0 0
  %242 = vmatpush1.bf16.msra.mxu0 0
  %243 = vmatprep.subr.bf16.mxu0 0
  %244 = vmatpush1.bf16.msra.mxu0 0
  %245 = vmatprep.subr.bf16.mxu0 0
  %246 = vmatpush1.bf16.msra.mxu0 0
  %247 = vmatprep.subr.bf16.mxu0 0
  %248 = vmatpush1.bf16.msra.mxu0 0
  %249 = vmatprep.subr.bf16.mxu0 0
  %250 = vmatpush1.bf16.msra.mxu0 0
  %251 = vmatprep.subr.bf16.mxu0 0
  %252 = vmatpush1.bf16.msra.mxu0 0
  %253 = vmatprep.mubr.bf16.mxu0 0
  %254 = vmatmul.mubr.bf16.gmra.mrb[0].mxu0 %v168
  %v255 = vpop.f32.mrb[0].mxu0
  %v256 = vadd.f32 0.0, %v255
  %v257 = vpop.f32.mrb[0].mxu0
  %v258 = vpop.f32.mrb[0].mxu0
  %v259 = vadd.f32 0.0, %v258
  %v260 = vpop.f32.mrb[0].mxu0
  %261 = vmatprep.mubr.bf16.mxu0 0
  %262 = vmatmul.mubr.bf16.gmra.mrb[0].mxu0 %v171
  %v263 = vpop.f32.mrb[0].mxu0
  %v264 = vadd.f32 0.0, %v263
  %v265 = vpop.f32.mrb[0].mxu0
  %v266 = vpop.f32.mrb[0].mxu0
  %v267 = vadd.f32 0.0, %v266
  %v268 = vpop.f32.mrb[0].mxu0
  %269 = vmatprep.mubr.bf16.mxu0 0
  %270 = vmatmul.mubr.bf16.gmra.mrb[0].mxu0 %v174
  %v271 = vpop.f32.mrb[0].mxu0
  %v272 = vadd.f32 0.0, %v271
  %v273 = vpop.f32.mrb[0].mxu0
  %v274 = vpop.f32.mrb[0].mxu0
  %v275 = vadd.f32 0.0, %v274
  %v276 = vpop.f32.mrb[0].mxu0
  %277 = vmatprep.mubr.bf16.mxu0 0
  %278 = vmatmul.mubr.bf16.gmra.mrb[0].mxu0 %v177
  %v279 = vpop.f32.mrb[0].mxu0
  %v280 = vadd.f32 0.0, %v279
  %v281 = vpop.f32.mrb[0].mxu0
  %v282 = vpop.f32.mrb[0].mxu0
  %v283 = vadd.f32 0.0, %v282
  %v284 = vpop.f32.mrb[0].mxu0
  %285 = vmatprep.mubr.bf16.mxu0 0
  %286 = vmatmul.mubr.bf16.gmra.mrb[0].mxu0 %v180
  %v287 = vpop.f32.mrb[0].mxu0
  %v288 = vadd.f32 0.0, %v287
  %v289 = vpop.f32.mrb[0].mxu0
  %v290 = vpop.f32.mrb[0].mxu0
  %v291 = vadd.f32 0.0, %v290
  %v292 = vpop.f32.mrb[0].mxu0
  %293 = vmatprep.mubr.bf16.mxu0 0
  %294 = vmatmul.mubr.bf16.gmra.mrb[0].mxu0 %v183
  %v295 = vpop.f32.mrb[0].mxu0
  %v296 = vadd.f32 0.0, %v295
  %v297 = vpop.f32.mrb[0].mxu0
  %v298 = vpop.f32.mrb[0].mxu0
  %v299 = vadd.f32 0.0, %v298
  %v300 = vpop.f32.mrb[0].mxu0
  %301 = vmatprep.mubr.bf16.mxu0 0
  %302 = vmatmul.mubr.bf16.gmra.mrb[0].mxu0 %v186
  %v303 = vpop.f32.mrb[0].mxu0
  %v304 = vadd.f32 0.0, %v303
  %v305 = vpop.f32.mrb[0].mxu0
  %v306 = vpop.f32.mrb[0].mxu0
  %v307 = vadd.f32 0.0, %v306
  %v308 = vpop.f32.mrb[0].mxu0
  %309 = vmatprep.mubr.bf16.mxu0 0
  %310 = vmatmul.mubr.bf16.gmra.mrb[0].mxu0 %v189
  %v311 = vpop.f32.mrb[0].mxu0
  %v312 = vadd.f32 0.0, %v311
  %v313 = vpop.f32.mrb[0].mxu0
  %v314 = vpop.f32.mrb[0].mxu0
  %v315 = vadd.f32 0.0, %v314
  %v316 = vpop.f32.mrb[0].mxu0
  %317 = vmatprep.mubr.bf16.mxu0 0
  %318 = vmatmul.mubr.bf16.gmra.mrb[0].mxu0 %v192
  %v319 = vpop.f32.mrb[0].mxu0
  %v320 = vadd.f32 0.0, %v319
  %v321 = vpop.f32.mrb[0].mxu0
  %v322 = vpop.f32.mrb[0].mxu0
  %v323 = vadd.f32 0.0, %v322
  %v324 = vpop.f32.mrb[0].mxu0
  %325 = vmatprep.mubr.bf16.mxu0 0
  %326 = vmatmul.mubr.bf16.gmra.mrb[0].mxu0 %v195
  %v327 = vpop.f32.mrb[0].mxu0
  %v328 = vadd.f32 0.0, %v327
  %v329 = vpop.f32.mrb[0].mxu0
  %v330 = vpop.f32.mrb[0].mxu0
  %v331 = vadd.f32 0.0, %v330
  %v332 = vpop.f32.mrb[0].mxu0
  %333 = vmatprep.mubr.bf16.mxu0 0
  %334 = vmatmul.mubr.bf16.gmra.mrb[0].mxu0 %v198
  %v335 = vpop.f32.mrb[0].mxu0
  %v336 = vadd.f32 0.0, %v335
  %v337 = vpop.f32.mrb[0].mxu0
  %v338 = vpop.f32.mrb[0].mxu0
  %v339 = vadd.f32 0.0, %v338
  %v340 = vpop.f32.mrb[0].mxu0
  %341 = vmatprep.mubr.bf16.mxu0 0
  %342 = vmatmul.mubr.bf16.gmra.mrb[0].mxu0 %v201
  %v343 = vpop.f32.mrb[0].mxu0
  %v344 = vadd.f32 0.0, %v343
  %v345 = vpop.f32.mrb[0].mxu0
  %v346 = vpop.f32.mrb[0].mxu0
  %v347 = vadd.f32 0.0, %v346
  %v348 = vpop.f32.mrb[0].mxu0
  %349 = vmatprep.mubr.bf16.mxu0 0
  %350 = vmatmul.mubr.bf16.gmra.mrb[0].mxu0 %v204
  %v351 = vpop.f32.mrb[0].mxu0
  %v352 = vadd.f32 0.0, %v351
  %v353 = vpop.f32.mrb[0].mxu0
  %v354 = vpop.f32.mrb[0].mxu0
  %v355 = vadd.f32 0.0, %v354
  %v356 = vpop.f32.mrb[0].mxu0
  %357 = vmatprep.mubr.bf16.mxu0 0
  %358 = vmatmul.mubr.bf16.gmra.mrb[0].mxu0 %v207
  %v359 = vpop.f32.mrb[0].mxu0
  %v360 = vadd.f32 0.0, %v359
  %v361 = vpop.f32.mrb[0].mxu0
  %v362 = vpop.f32.mrb[0].mxu0
  %v363 = vadd.f32 0.0, %v362
  %v364 = vpop.f32.mrb[0].mxu0
  %365 = vmatprep.mubr.bf16.mxu0 0
  %366 = vmatmul.mubr.bf16.gmra.mrb[0].mxu0 %v210
  %v367 = vpop.f32.mrb[0].mxu0
  %v368 = vadd.f32 0.0, %v367
  %v369 = vpop.f32.mrb[0].mxu0
  %v370 = vpop.f32.mrb[0].mxu0
  %v371 = vadd.f32 0.0, %v370
  %v372 = vpop.f32.mrb[0].mxu0
  %373 = vmatprep.mubr.bf16.mxu0 0
  %374 = vmatmul.mubr.bf16.gmra.mrb[0].mxu0 %v213
  %v375 = vpop.f32.mrb[0].mxu0
  %v376 = vadd.f32 0.0, %v375
  %v377 = vpop.f32.mrb[0].mxu0
  %v378 = vpop.f32.mrb[0].mxu0
  %v379 = vadd.f32 0.0, %v378
  %v380 = vpop.f32.mrb[0].mxu0
  %381 = vmatprep.mubr.bf16.mxu0 0
  %382 = vmatmul.mubr.bf16.gmra.mrb[0].mxu0 %v216
  %v383 = vpop.f32.mrb[0].mxu0
  %v384 = vadd.f32 0.0, %v383
  %v385 = vpop.f32.mrb[0].mxu0
  %v386 = vpop.f32.mrb[0].mxu0
  %v387 = vadd.f32 0.0, %v386
  %v388 = vpop.f32.mrb[0].mxu0
  %389 = vmatprep.mubr.bf16.mxu0 0
  %390 = vmatmul.mubr.bf16.gmra.mrb[0].mxu0 %v219
  %v391 = vpop.f32.mrb[0].mxu0
  %v392 = vadd.f32 0.0, %v391
  %v393 = vpop.f32.mrb[0].mxu0
  %v394 = vpop.f32.mrb[0].mxu0
  %v395 = vadd.f32 0.0, %v394
  %v396 = vpop.f32.mrb[0].mxu0
  %397 = vdwg.mxu0
  %v398 = vld [vmem:[%s1] sm:$0xf]
  %v399 = vld [vmem:[%s1 + $0x4] sm:$0xf]
  %v400 = vld [vmem:[%s1 + $0x8] sm:$0xf]
  %v401 = vld [vmem:[%s1 + $0xc] sm:$0xf]
  %v402 = vld [vmem:[%s1 + $0x10] sm:$0xf]
  %v403 = vld [vmem:[%s1 + $0x14] sm:$0xf]
  %v404 = vld [vmem:[%s1 + $0x18] sm:$0xf]
  %v405 = vld [vmem:[%s1 + $0x1c] sm:$0xf]
  %v406 = vld [vmem:[%s1 + $0x20] sm:$0xf]
  %v407 = vld [vmem:[%s1 + $0x24] sm:$0xf]
  %v408 = vld [vmem:[%s1 + $0x28] sm:$0xf]
  %v409 = vld [vmem:[%s1 + $0x2c] sm:$0xf]
  %v410 = vld [vmem:[%s1 + $0x30] sm:$0xf]
  %v411 = vld [vmem:[%s1 + $0x34] sm:$0xf]
  %v412 = vld [vmem:[%s1 + $0x38] sm:$0xf]
  %v413 = vld [vmem:[%s1 + $0x3c] sm:$0xf]
  %v414 = vld [vmem:[%s1 + $0x40] sm:$0xf]
  %v415 = vld [vmem:[%s1 + $0x44] sm:$0xf]
  %v416 = vld [vmem:[%s1 + $0x48] sm:$0xf]
  %v417 = vld [vmem:[%s1 + $0x4c] sm:$0xf]
  %v418 = vld [vmem:[%s1 + $0x50] sm:$0xf]
  %v419 = vld [vmem:[%s1 + $0x54] sm:$0xf]
  %v420 = vld [vmem:[%s1 + $0x58] sm:$0xf]
  %v421 = vld [vmem:[%s1 + $0x5c] sm:$0xf]
  %v422 = vld [vmem:[%s1 + $0x60] sm:$0xf]
  %v423 = vld [vmem:[%s1 + $0x64] sm:$0xf]
  %v424 = vld [vmem:[%s1 + $0x68] sm:$0xf]
  %v425 = vld [vmem:[%s1 + $0x6c] sm:$0xf]
  %v426 = vld [vmem:[%s1 + $0x70] sm:$0xf]
  %v427 = vld [vmem:[%s1 + $0x74] sm:$0xf]
  %v428 = vld [vmem:[%s1 + $0x78] sm:$0xf]
  %v429 = vld [vmem:[%s1 + $0x7c] sm:$0xf]
  %v430 = vld [vmem:[%s1 + $0x80] sm:$0xf]
  %v431 = vld [vmem:[%s1 + $0x84] sm:$0xf]
  %v432 = vld [vmem:[%s1 + $0x88] sm:$0xf]
  %v433 = vld [vmem:[%s1 + $0x8c] sm:$0xf]
  %v470 = vunpack.c.l.b16 %v398
  %v471 = vunpack.c.l.b16 %v399
  %v472 = vunpack.c.l.b16 %v400
  %v473 = vunpack.c.l.b16 %v401
  %v474 = vunpack.c.l.b16 %v402
  %v475 = vunpack.c.l.b16 %v403
  %v476 = vunpack.c.l.b16 %v404
  %v477 = vunpack.c.l.b16 %v405
  %v478 = vunpack.c.l.b16 %v406
  %v479 = vunpack.c.l.b16 %v407
  %v480 = vunpack.c.l.b16 %v408
  %v481 = vunpack.c.l.b16 %v409
  %v482 = vunpack.c.l.b16 %v410
  %v483 = vunpack.c.l.b16 %v411
  %v484 = vunpack.c.l.b16 %v412
  %v485 = vunpack.c.l.b16 %v413
  %v486 = vunpack.c.l.b16 %v414
  %v487 = vunpack.c.l.b16 %v415
  %v488 = vunpack.c.l.b16 %v416
  %v489 = vunpack.c.l.b16 %v417
  %v490 = vunpack.c.l.b16 %v418
  %v491 = vunpack.c.l.b16 %v419
  %v492 = vunpack.c.l.b16 %v420
  %v493 = vunpack.c.l.b16 %v421
  %v494 = vunpack.c.l.b16 %v422
  %v495 = vunpack.c.l.b16 %v423
  %v496 = vunpack.c.l.b16 %v424
  %v497 = vunpack.c.l.b16 %v425
  %v498 = vunpack.c.l.b16 %v426
  %v499 = vunpack.c.l.b16 %v427
  %v500 = vunpack.c.l.b16 %v428
  %v501 = vunpack.c.l.b16 %v429
  %v502 = vunpack.c.l.b16 %v430
  %v503 = vunpack.c.l.b16 %v431
  %v504 = vunpack.c.l.b16 %v432
  %v505 = vunpack.c.l.b16 %v433
  %v506 = vpack.c.b16 %v471, %v470
  %v507 = vpack.c.b16 %v473, %v472
  %v508 = vpack.c.b16 %v475, %v474
  %v509 = vpack.c.b16 %v477, %v476
  %v510 = vpack.c.b16 %v479, %v478
  %v511 = vpack.c.b16 %v481, %v480
  %v512 = vpack.c.b16 %v483, %v482
  %v513 = vpack.c.b16 %v485, %v484
  %v514 = vpack.c.b16 %v487, %v486
  %v515 = vpack.c.b16 %v489, %v488
  %v516 = vpack.c.b16 %v491, %v490
  %v517 = vpack.c.b16 %v493, %v492
  %v518 = vpack.c.b16 %v495, %v494
  %v519 = vpack.c.b16 %v497, %v496
  %v520 = vpack.c.b16 %v499, %v498
  %v521 = vpack.c.b16 %v501, %v500
  %v522 = vpack.c.b16 %v503, %v502
  %v523 = vpack.c.b16 %v505, %v504
  %v525 = vsel %vm166, %v506, 0
  %v528 = vsel %vm166, %v507, 0
  %v531 = vsel %vm166, %v508, 0
  %v534 = vsel %vm166, %v509, 0
  %v537 = vsel %vm166, %v510, 0
  %v540 = vsel %vm166, %v511, 0
  %v543 = vsel %vm166, %v512, 0
  %v546 = vsel %vm166, %v513, 0
  %v549 = vsel %vm166, %v514, 0
  %v552 = vsel %vm166, %v515, 0
  %v555 = vsel %vm166, %v516, 0
  %v558 = vsel %vm166, %v517, 0
  %v561 = vsel %vm166, %v518, 0
  %v564 = vsel %vm166, %v519, 0
  %v567 = vsel %vm166, %v520, 0
  %v570 = vsel %vm166, %v521, 0
  %v573 = vsel %vm166, %v522, 0
  %v576 = vsel %vm166, %v523, 0
  %578 = vmatprep.subr.bf16.mxu0 0
  %579 = vmatpush1.bf16.msra.mxu0 %v162
  %580 = vmatprep.subr.bf16.mxu0 0
  %581 = vmatpush1.bf16.msra.mxu0 %v163
  %582 = vmatprep.subr.bf16.mxu0 0
  %583 = vmatpush1.bf16.msra.mxu0 0
  %584 = vmatprep.subr.bf16.mxu0 0
  %585 = vmatpush1.bf16.msra.mxu0 0
  %586 = vmatprep.subr.bf16.mxu0 0
  %587 = vmatpush1.bf16.msra.mxu0 0
  %588 = vmatprep.subr.bf16.mxu0 0
  %589 = vmatpush1.bf16.msra.mxu0 0
  %590 = vmatprep.subr.bf16.mxu0 0
  %591 = vmatpush1.bf16.msra.mxu0 0
  %592 = vmatprep.subr.bf16.mxu0 0
  %593 = vmatpush1.bf16.msra.mxu0 0
  %594 = vmatprep.subr.bf16.mxu0 0
  %595 = vmatpush1.bf16.msra.mxu0 0
  %596 = vmatprep.subr.bf16.mxu0 0
  %597 = vmatpush1.bf16.msra.mxu0 0
  %598 = vmatprep.subr.bf16.mxu0 0
  %599 = vmatpush1.bf16.msra.mxu0 0
  %600 = vmatprep.subr.bf16.mxu0 0
  %601 = vmatpush1.bf16.msra.mxu0 0
  %602 = vmatprep.subr.bf16.mxu0 0
  %603 = vmatpush1.bf16.msra.mxu0 0
  %604 = vmatprep.subr.bf16.mxu0 0
  %605 = vmatpush1.bf16.msra.mxu0 0
  %606 = vmatprep.subr.bf16.mxu0 0
  %607 = vmatpush1.bf16.msra.mxu0 0
  %608 = vmatprep.subr.bf16.mxu0 0
  %609 = vmatpush1.bf16.msra.mxu0 0
  %610 = vmatprep.mubr.bf16.mxu0 0
  %611 = vmatmul.mubr.bf16.gmra.mrb[0].mxu0 %v525
  %v612 = vpop.f32.mrb[0].mxu0
  %v613 = vadd.f32 0.0, %v612
  %v614 = vpop.f32.mrb[0].mxu0
  %v615 = vpop.f32.mrb[0].mxu0
  %v616 = vadd.f32 0.0, %v615
  %v617 = vpop.f32.mrb[0].mxu0
  %618 = vmatprep.mubr.bf16.mxu0 0
  %619 = vmatmul.mubr.bf16.gmra.mrb[0].mxu0 %v528
  %v620 = vpop.f32.mrb[0].mxu0
  %v621 = vadd.f32 0.0, %v620
  %v622 = vpop.f32.mrb[0].mxu0
  %v623 = vpop.f32.mrb[0].mxu0
  %v624 = vadd.f32 0.0, %v623
  %v625 = vpop.f32.mrb[0].mxu0
  %626 = vmatprep.mubr.bf16.mxu0 0
  %627 = vmatmul.mubr.bf16.gmra.mrb[0].mxu0 %v531
  %v628 = vpop.f32.mrb[0].mxu0
  %v629 = vadd.f32 0.0, %v628
  %v630 = vpop.f32.mrb[0].mxu0
  %v631 = vpop.f32.mrb[0].mxu0
  %v632 = vadd.f32 0.0, %v631
  %v633 = vpop.f32.mrb[0].mxu0
  %634 = vmatprep.mubr.bf16.mxu0 0
  %635 = vmatmul.mubr.bf16.gmra.mrb[0].mxu0 %v534
  %v636 = vpop.f32.mrb[0].mxu0
  %v637 = vadd.f32 0.0, %v636
  %v638 = vpop.f32.mrb[0].mxu0
  %v639 = vpop.f32.mrb[0].mxu0
  %v640 = vadd.f32 0.0, %v639
  %v641 = vpop.f32.mrb[0].mxu0
  %642 = vmatprep.mubr.bf16.mxu0 0
  %643 = vmatmul.mubr.bf16.gmra.mrb[0].mxu0 %v537
  %v644 = vpop.f32.mrb[0].mxu0
  %v645 = vadd.f32 0.0, %v644
  %v646 = vpop.f32.mrb[0].mxu0
  %v647 = vpop.f32.mrb[0].mxu0
  %v648 = vadd.f32 0.0, %v647
  %v649 = vpop.f32.mrb[0].mxu0
  %650 = vmatprep.mubr.bf16.mxu0 0
  %651 = vmatmul.mubr.bf16.gmra.mrb[0].mxu0 %v540
  %v652 = vpop.f32.mrb[0].mxu0
  %v653 = vadd.f32 0.0, %v652
  %v654 = vpop.f32.mrb[0].mxu0
  %v655 = vpop.f32.mrb[0].mxu0
  %v656 = vadd.f32 0.0, %v655
  %v657 = vpop.f32.mrb[0].mxu0
  %658 = vmatprep.mubr.bf16.mxu0 0
  %659 = vmatmul.mubr.bf16.gmra.mrb[0].mxu0 %v543
  %v660 = vpop.f32.mrb[0].mxu0
  %v661 = vadd.f32 0.0, %v660
  %v662 = vpop.f32.mrb[0].mxu0
  %v663 = vpop.f32.mrb[0].mxu0
  %v664 = vadd.f32 0.0, %v663
  %v665 = vpop.f32.mrb[0].mxu0
  %666 = vmatprep.mubr.bf16.mxu0 0
  %667 = vmatmul.mubr.bf16.gmra.mrb[0].mxu0 %v546
  %v668 = vpop.f32.mrb[0].mxu0
  %v669 = vadd.f32 0.0, %v668
  %v670 = vpop.f32.mrb[0].mxu0
  %v671 = vpop.f32.mrb[0].mxu0
  %v672 = vadd.f32 0.0, %v671
  %v673 = vpop.f32.mrb[0].mxu0
  %674 = vmatprep.mubr.bf16.mxu0 0
  %675 = vmatmul.mubr.bf16.gmra.mrb[0].mxu0 %v549
  %v676 = vpop.f32.mrb[0].mxu0
  %v677 = vadd.f32 0.0, %v676
  %v678 = vpop.f32.mrb[0].mxu0
  %v679 = vpop.f32.mrb[0].mxu0
  %v680 = vadd.f32 0.0, %v679
  %v681 = vpop.f32.mrb[0].mxu0
  %682 = vmatprep.mubr.bf16.mxu0 0
  %683 = vmatmul.mubr.bf16.gmra.mrb[0].mxu0 %v552
  %v684 = vpop.f32.mrb[0].mxu0
  %v685 = vadd.f32 0.0, %v684
  %v686 = vpop.f32.mrb[0].mxu0
  %v687 = vpop.f32.mrb[0].mxu0
  %v688 = vadd.f32 0.0, %v687
  %v689 = vpop.f32.mrb[0].mxu0
  %690 = vmatprep.mubr.bf16.mxu0 0
  %691 = vmatmul.mubr.bf16.gmra.mrb[0].mxu0 %v555
  %v692 = vpop.f32.mrb[0].mxu0
  %v693 = vadd.f32 0.0, %v692
  %v694 = vpop.f32.mrb[0].mxu0
  %v695 = vpop.f32.mrb[0].mxu0
  %v696 = vadd.f32 0.0, %v695
  %v697 = vpop.f32.mrb[0].mxu0
  %698 = vmatprep.mubr.bf16.mxu0 0
  %699 = vmatmul.mubr.bf16.gmra.mrb[0].mxu0 %v558
  %v700 = vpop.f32.mrb[0].mxu0
  %v701 = vadd.f32 0.0, %v700
  %v702 = vpop.f32.mrb[0].mxu0
  %v703 = vpop.f32.mrb[0].mxu0
  %v704 = vadd.f32 0.0, %v703
  %v705 = vpop.f32.mrb[0].mxu0
  %706 = vmatprep.mubr.bf16.mxu0 0
  %707 = vmatmul.mubr.bf16.gmra.mrb[0].mxu0 %v561
  %v708 = vpop.f32.mrb[0].mxu0
  %v709 = vadd.f32 0.0, %v708
  %v710 = vpop.f32.mrb[0].mxu0
  %v711 = vpop.f32.mrb[0].mxu0
  %v712 = vadd.f32 0.0, %v711
  %v713 = vpop.f32.mrb[0].mxu0
  %714 = vmatprep.mubr.bf16.mxu0 0
  %715 = vmatmul.mubr.bf16.gmra.mrb[0].mxu0 %v564
  %v716 = vpop.f32.mrb[0].mxu0
  %v717 = vadd.f32 0.0, %v716
  %v718 = vpop.f32.mrb[0].mxu0
  %v719 = vpop.f32.mrb[0].mxu0
  %v720 = vadd.f32 0.0, %v719
  %v721 = vpop.f32.mrb[0].mxu0
  %722 = vmatprep.mubr.bf16.mxu0 0
  %723 = vmatmul.mubr.bf16.gmra.mrb[0].mxu0 %v567
  %v724 = vpop.f32.mrb[0].mxu0
  %v725 = vadd.f32 0.0, %v724
  %v726 = vpop.f32.mrb[0].mxu0
  %v727 = vpop.f32.mrb[0].mxu0
  %v728 = vadd.f32 0.0, %v727
  %v729 = vpop.f32.mrb[0].mxu0
  %730 = vmatprep.mubr.bf16.mxu0 0
  %731 = vmatmul.mubr.bf16.gmra.mrb[0].mxu0 %v570
  %v732 = vpop.f32.mrb[0].mxu0
  %v733 = vadd.f32 0.0, %v732
  %v734 = vpop.f32.mrb[0].mxu0
  %v735 = vpop.f32.mrb[0].mxu0
  %v736 = vadd.f32 0.0, %v735
  %v737 = vpop.f32.mrb[0].mxu0
  %738 = vmatprep.mubr.bf16.mxu0 0
  %739 = vmatmul.mubr.bf16.gmra.mrb[0].mxu0 %v573
  %v740 = vpop.f32.mrb[0].mxu0
  %v741 = vadd.f32 0.0, %v740
  %v742 = vpop.f32.mrb[0].mxu0
  %v743 = vpop.f32.mrb[0].mxu0
  %v744 = vadd.f32 0.0, %v743
  %v745 = vpop.f32.mrb[0].mxu0
  %746 = vmatprep.mubr.bf16.mxu0 0
  %747 = vmatmul.mubr.bf16.gmra.mrb[0].mxu0 %v576
  %v748 = vpop.f32.mrb[0].mxu0
  %v749 = vadd.f32 0.0, %v748
  %v750 = vpop.f32.mrb[0].mxu0
  %v751 = vpop.f32.mrb[0].mxu0
  %v752 = vadd.f32 0.0, %v751
  %v753 = vpop.f32.mrb[0].mxu0
  %754 = vdwg.mxu0
  %v755 = vmax.f32 %v256, %v613
  %v756 = vmax.f32 %v259, %v616
  %v757 = vmax.f32 %v264, %v621
  %v758 = vmax.f32 %v267, %v624
  %v759 = vmax.f32 %v272, %v629
  %v760 = vmax.f32 %v275, %v632
  %v761 = vmax.f32 %v280, %v637
  %v762 = vmax.f32 %v283, %v640
  %v763 = vmax.f32 %v288, %v645
  %v764 = vmax.f32 %v291, %v648
  %v765 = vmax.f32 %v296, %v653
  %v766 = vmax.f32 %v299, %v656
  %v767 = vmax.f32 %v304, %v661
  %v768 = vmax.f32 %v307, %v664
  %v769 = vmax.f32 %v312, %v669
  %v770 = vmax.f32 %v315, %v672
  %v771 = vmax.f32 %v320, %v677
  %v772 = vmax.f32 %v323, %v680
  %v773 = vmax.f32 %v328, %v685
  %v774 = vmax.f32 %v331, %v688
  %v775 = vmax.f32 %v336, %v693
  %v776 = vmax.f32 %v339, %v696
  %v777 = vmax.f32 %v344, %v701
  %v778 = vmax.f32 %v347, %v704
  %v779 = vmax.f32 %v352, %v709
  %v780 = vmax.f32 %v355, %v712
  %v781 = vmax.f32 %v360, %v717
  %v782 = vmax.f32 %v363, %v720
  %v783 = vmax.f32 %v368, %v725
  %v784 = vmax.f32 %v371, %v728
  %v785 = vmax.f32 %v376, %v733
  %v786 = vmax.f32 %v379, %v736
  %v787 = vmax.f32 %v384, %v741
  %v788 = vmax.f32 %v387, %v744
  %v789 = vmax.f32 %v392, %v749
  %v790 = vmax.f32 %v395, %v752
  %v791 = vld [vmem:[%s2] sm:$0xf]
  %v792 = vld [vmem:[%s2 + $0x4] sm:$0xf]
  %v793 = vld [vmem:[%s2 + $0x8] sm:$0xf]
  %v794 = vld [vmem:[%s2 + $0xc] sm:$0xf]
  %v795 = vld [vmem:[%s2 + $0x10] sm:$0xf]
  %v796 = vld [vmem:[%s2 + $0x14] sm:$0xf]
  %v797 = vld [vmem:[%s2 + $0x18] sm:$0xf]
  %v798 = vld [vmem:[%s2 + $0x1c] sm:$0xf]
  %v799 = vld [vmem:[%s2 + $0x20] sm:$0xf]
  %v800 = vld [vmem:[%s2 + $0x24] sm:$0xf]
  %v801 = vld [vmem:[%s2 + $0x28] sm:$0xf]
  %v802 = vld [vmem:[%s2 + $0x2c] sm:$0xf]
  %v803 = vld [vmem:[%s2 + $0x30] sm:$0xf]
  %v804 = vld [vmem:[%s2 + $0x34] sm:$0xf]
  %v805 = vld [vmem:[%s2 + $0x38] sm:$0xf]
  %v806 = vld [vmem:[%s2 + $0x3c] sm:$0xf]
  %v807 = vld [vmem:[%s2 + $0x40] sm:$0xf]
  %v808 = vld [vmem:[%s2 + $0x44] sm:$0xf]
  %v809 = vld [vmem:[%s2 + $0x48] sm:$0xf]
  %v810 = vld [vmem:[%s2 + $0x4c] sm:$0xf]
  %v811 = vld [vmem:[%s2 + $0x50] sm:$0xf]
  %v812 = vld [vmem:[%s2 + $0x54] sm:$0xf]
  %v813 = vld [vmem:[%s2 + $0x58] sm:$0xf]
  %v814 = vld [vmem:[%s2 + $0x5c] sm:$0xf]
  %v815 = vld [vmem:[%s2 + $0x60] sm:$0xf]
  %v816 = vld [vmem:[%s2 + $0x64] sm:$0xf]
  %v817 = vld [vmem:[%s2 + $0x68] sm:$0xf]
  %v818 = vld [vmem:[%s2 + $0x6c] sm:$0xf]
  %v819 = vld [vmem:[%s2 + $0x70] sm:$0xf]
  %v820 = vld [vmem:[%s2 + $0x74] sm:$0xf]
  %v821 = vld [vmem:[%s2 + $0x78] sm:$0xf]
  %v822 = vld [vmem:[%s2 + $0x7c] sm:$0xf]
  %v823 = vld [vmem:[%s2 + $0x80] sm:$0xf]
  %v824 = vld [vmem:[%s2 + $0x84] sm:$0xf]
  %v825 = vld [vmem:[%s2 + $0x88] sm:$0xf]
  %v826 = vld [vmem:[%s2 + $0x8c] sm:$0xf]
  %v863 = vunpack.c.l.b16 %v791
  %v864 = vunpack.c.l.b16 %v792
  %v865 = vunpack.c.l.b16 %v793
  %v866 = vunpack.c.l.b16 %v794
  %v867 = vunpack.c.l.b16 %v795
  %v868 = vunpack.c.l.b16 %v796
  %v869 = vunpack.c.l.b16 %v797
  %v870 = vunpack.c.l.b16 %v798
  %v871 = vunpack.c.l.b16 %v799
  %v872 = vunpack.c.l.b16 %v800
  %v873 = vunpack.c.l.b16 %v801
  %v874 = vunpack.c.l.b16 %v802
  %v875 = vunpack.c.l.b16 %v803
  %v876 = vunpack.c.l.b16 %v804
  %v877 = vunpack.c.l.b16 %v805
  %v878 = vunpack.c.l.b16 %v806
  %v879 = vunpack.c.l.b16 %v807
  %v880 = vunpack.c.l.b16 %v808
  %v881 = vunpack.c.l.b16 %v809
  %v882 = vunpack.c.l.b16 %v810
  %v883 = vunpack.c.l.b16 %v811
  %v884 = vunpack.c.l.b16 %v812
  %v885 = vunpack.c.l.b16 %v813
  %v886 = vunpack.c.l.b16 %v814
  %v887 = vunpack.c.l.b16 %v815
  %v888 = vunpack.c.l.b16 %v816
  %v889 = vunpack.c.l.b16 %v817
  %v890 = vunpack.c.l.b16 %v818
  %v891 = vunpack.c.l.b16 %v819
  %v892 = vunpack.c.l.b16 %v820
  %v893 = vunpack.c.l.b16 %v821
  %v894 = vunpack.c.l.b16 %v822
  %v895 = vunpack.c.l.b16 %v823
  %v896 = vunpack.c.l.b16 %v824
  %v897 = vunpack.c.l.b16 %v825
  %v898 = vunpack.c.l.b16 %v826
  %v899 = vpack.c.b16 %v864, %v863
  %v900 = vpack.c.b16 %v866, %v865
  %v901 = vpack.c.b16 %v868, %v867
  %v902 = vpack.c.b16 %v870, %v869
  %v903 = vpack.c.b16 %v872, %v871
  %v904 = vpack.c.b16 %v874, %v873
  %v905 = vpack.c.b16 %v876, %v875
  %v906 = vpack.c.b16 %v878, %v877
  %v907 = vpack.c.b16 %v880, %v879
  %v908 = vpack.c.b16 %v882, %v881
  %v909 = vpack.c.b16 %v884, %v883
  %v910 = vpack.c.b16 %v886, %v885
  %v911 = vpack.c.b16 %v888, %v887
  %v912 = vpack.c.b16 %v890, %v889
  %v913 = vpack.c.b16 %v892, %v891
  %v914 = vpack.c.b16 %v894, %v893
  %v915 = vpack.c.b16 %v896, %v895
  %v916 = vpack.c.b16 %v898, %v897
  %v918 = vsel %vm166, %v899, 0
  %v921 = vsel %vm166, %v900, 0
  %v924 = vsel %vm166, %v901, 0
  %v927 = vsel %vm166, %v902, 0
  %v930 = vsel %vm166, %v903, 0
  %v933 = vsel %vm166, %v904, 0
  %v936 = vsel %vm166, %v905, 0
  %v939 = vsel %vm166, %v906, 0
  %v942 = vsel %vm166, %v907, 0
  %v945 = vsel %vm166, %v908, 0
  %v948 = vsel %vm166, %v909, 0
  %v951 = vsel %vm166, %v910, 0
  %v954 = vsel %vm166, %v911, 0
  %v957 = vsel %vm166, %v912, 0
  %v960 = vsel %vm166, %v913, 0
  %v963 = vsel %vm166, %v914, 0
  %v966 = vsel %vm166, %v915, 0
  %v969 = vsel %vm166, %v916, 0
  %971 = vmatprep.subr.bf16.mxu0 0
  %972 = vmatpush1.bf16.msra.mxu0 %v162
  %973 = vmatprep.subr.bf16.mxu0 0
  %974 = vmatpush1.bf16.msra.mxu0 %v163
  %975 = vmatprep.subr.bf16.mxu0 0
  %976 = vmatpush1.bf16.msra.mxu0 0
  %977 = vmatprep.subr.bf16.mxu0 0
  %978 = vmatpush1.bf16.msra.mxu0 0
  %979 = vmatprep.subr.bf16.mxu0 0
  %980 = vmatpush1.bf16.msra.mxu0 0
  %981 = vmatprep.subr.bf16.mxu0 0
  %982 = vmatpush1.bf16.msra.mxu0 0
  %983 = vmatprep.subr.bf16.mxu0 0
  %984 = vmatpush1.bf16.msra.mxu0 0
  %985 = vmatprep.subr.bf16.mxu0 0
  %986 = vmatpush1.bf16.msra.mxu0 0
  %987 = vmatprep.subr.bf16.mxu0 0
  %988 = vmatpush1.bf16.msra.mxu0 0
  %989 = vmatprep.subr.bf16.mxu0 0
  %990 = vmatpush1.bf16.msra.mxu0 0
  %991 = vmatprep.subr.bf16.mxu0 0
  %992 = vmatpush1.bf16.msra.mxu0 0
  %993 = vmatprep.subr.bf16.mxu0 0
  %994 = vmatpush1.bf16.msra.mxu0 0
  %995 = vmatprep.subr.bf16.mxu0 0
  %996 = vmatpush1.bf16.msra.mxu0 0
  %997 = vmatprep.subr.bf16.mxu0 0
  %998 = vmatpush1.bf16.msra.mxu0 0
  %999 = vmatprep.subr.bf16.mxu0 0
  %1000 = vmatpush1.bf16.msra.mxu0 0
  %1001 = vmatprep.subr.bf16.mxu0 0
  %1002 = vmatpush1.bf16.msra.mxu0 0
  %1003 = vmatprep.mubr.bf16.mxu0 0
  %1004 = vmatmul.mubr.bf16.gmra.mrb[0].mxu0 %v918
  %v1005 = vpop.f32.mrb[0].mxu0
  %v1006 = vadd.f32 0.0, %v1005
  %v1007 = vpop.f32.mrb[0].mxu0
  %v1008 = vpop.f32.mrb[0].mxu0
  %v1009 = vadd.f32 0.0, %v1008
  %v1010 = vpop.f32.mrb[0].mxu0
  %1011 = vmatprep.mubr.bf16.mxu0 0
  %1012 = vmatmul.mubr.bf16.gmra.mrb[0].mxu0 %v921
  %v1013 = vpop.f32.mrb[0].mxu0
  %v1014 = vadd.f32 0.0, %v1013
  %v1015 = vpop.f32.mrb[0].mxu0
  %v1016 = vpop.f32.mrb[0].mxu0
  %v1017 = vadd.f32 0.0, %v1016
  %v1018 = vpop.f32.mrb[0].mxu0
  %1019 = vmatprep.mubr.bf16.mxu0 0
  %1020 = vmatmul.mubr.bf16.gmra.mrb[0].mxu0 %v924
  %v1021 = vpop.f32.mrb[0].mxu0
  %v1022 = vadd.f32 0.0, %v1021
  %v1023 = vpop.f32.mrb[0].mxu0
  %v1024 = vpop.f32.mrb[0].mxu0
  %v1025 = vadd.f32 0.0, %v1024
  %v1026 = vpop.f32.mrb[0].mxu0
  %1027 = vmatprep.mubr.bf16.mxu0 0
  %1028 = vmatmul.mubr.bf16.gmra.mrb[0].mxu0 %v927
  %v1029 = vpop.f32.mrb[0].mxu0
  %v1030 = vadd.f32 0.0, %v1029
  %v1031 = vpop.f32.mrb[0].mxu0
  %v1032 = vpop.f32.mrb[0].mxu0
  %v1033 = vadd.f32 0.0, %v1032
  %v1034 = vpop.f32.mrb[0].mxu0
  %1035 = vmatprep.mubr.bf16.mxu0 0
  %1036 = vmatmul.mubr.bf16.gmra.mrb[0].mxu0 %v930
  %v1037 = vpop.f32.mrb[0].mxu0
  %v1038 = vadd.f32 0.0, %v1037
  %v1039 = vpop.f32.mrb[0].mxu0
  %v1040 = vpop.f32.mrb[0].mxu0
  %v1041 = vadd.f32 0.0, %v1040
  %v1042 = vpop.f32.mrb[0].mxu0
  %1043 = vmatprep.mubr.bf16.mxu0 0
  %1044 = vmatmul.mubr.bf16.gmra.mrb[0].mxu0 %v933
  %v1045 = vpop.f32.mrb[0].mxu0
  %v1046 = vadd.f32 0.0, %v1045
  %v1047 = vpop.f32.mrb[0].mxu0
  %v1048 = vpop.f32.mrb[0].mxu0
  %v1049 = vadd.f32 0.0, %v1048
  %v1050 = vpop.f32.mrb[0].mxu0
  %1051 = vmatprep.mubr.bf16.mxu0 0
  %1052 = vmatmul.mubr.bf16.gmra.mrb[0].mxu0 %v936
  %v1053 = vpop.f32.mrb[0].mxu0
  %v1054 = vadd.f32 0.0, %v1053
  %v1055 = vpop.f32.mrb[0].mxu0
  %v1056 = vpop.f32.mrb[0].mxu0
  %v1057 = vadd.f32 0.0, %v1056
  %v1058 = vpop.f32.mrb[0].mxu0
  %1059 = vmatprep.mubr.bf16.mxu0 0
  %1060 = vmatmul.mubr.bf16.gmra.mrb[0].mxu0 %v939
  %v1061 = vpop.f32.mrb[0].mxu0
  %v1062 = vadd.f32 0.0, %v1061
  %v1063 = vpop.f32.mrb[0].mxu0
  %v1064 = vpop.f32.mrb[0].mxu0
  %v1065 = vadd.f32 0.0, %v1064
  %v1066 = vpop.f32.mrb[0].mxu0
  %1067 = vmatprep.mubr.bf16.mxu0 0
  %1068 = vmatmul.mubr.bf16.gmra.mrb[0].mxu0 %v942
  %v1069 = vpop.f32.mrb[0].mxu0
  %v1070 = vadd.f32 0.0, %v1069
  %v1071 = vpop.f32.mrb[0].mxu0
  %v1072 = vpop.f32.mrb[0].mxu0
  %v1073 = vadd.f32 0.0, %v1072
  %v1074 = vpop.f32.mrb[0].mxu0
  %1075 = vmatprep.mubr.bf16.mxu0 0
  %1076 = vmatmul.mubr.bf16.gmra.mrb[0].mxu0 %v945
  %v1077 = vpop.f32.mrb[0].mxu0
  %v1078 = vadd.f32 0.0, %v1077
  %v1079 = vpop.f32.mrb[0].mxu0
  %v1080 = vpop.f32.mrb[0].mxu0
  %v1081 = vadd.f32 0.0, %v1080
  %v1082 = vpop.f32.mrb[0].mxu0
  %1083 = vmatprep.mubr.bf16.mxu0 0
  %1084 = vmatmul.mubr.bf16.gmra.mrb[0].mxu0 %v948
  %v1085 = vpop.f32.mrb[0].mxu0
  %v1086 = vadd.f32 0.0, %v1085
  %v1087 = vpop.f32.mrb[0].mxu0
  %v1088 = vpop.f32.mrb[0].mxu0
  %v1089 = vadd.f32 0.0, %v1088
  %v1090 = vpop.f32.mrb[0].mxu0
  %1091 = vmatprep.mubr.bf16.mxu0 0
  %1092 = vmatmul.mubr.bf16.gmra.mrb[0].mxu0 %v951
  %v1093 = vpop.f32.mrb[0].mxu0
  %v1094 = vadd.f32 0.0, %v1093
  %v1095 = vpop.f32.mrb[0].mxu0
  %v1096 = vpop.f32.mrb[0].mxu0
  %v1097 = vadd.f32 0.0, %v1096
  %v1098 = vpop.f32.mrb[0].mxu0
  %1099 = vmatprep.mubr.bf16.mxu0 0
  %1100 = vmatmul.mubr.bf16.gmra.mrb[0].mxu0 %v954
  %v1101 = vpop.f32.mrb[0].mxu0
  %v1102 = vadd.f32 0.0, %v1101
  %v1103 = vpop.f32.mrb[0].mxu0
  %v1104 = vpop.f32.mrb[0].mxu0
  %v1105 = vadd.f32 0.0, %v1104
  %v1106 = vpop.f32.mrb[0].mxu0
  %1107 = vmatprep.mubr.bf16.mxu0 0
  %1108 = vmatmul.mubr.bf16.gmra.mrb[0].mxu0 %v957
  %v1109 = vpop.f32.mrb[0].mxu0
  %v1110 = vadd.f32 0.0, %v1109
  %v1111 = vpop.f32.mrb[0].mxu0
  %v1112 = vpop.f32.mrb[0].mxu0
  %v1113 = vadd.f32 0.0, %v1112
  %v1114 = vpop.f32.mrb[0].mxu0
  %1115 = vmatprep.mubr.bf16.mxu0 0
  %1116 = vmatmul.mubr.bf16.gmra.mrb[0].mxu0 %v960
  %v1117 = vpop.f32.mrb[0].mxu0
  %v1118 = vadd.f32 0.0, %v1117
  %v1119 = vpop.f32.mrb[0].mxu0
  %v1120 = vpop.f32.mrb[0].mxu0
  %v1121 = vadd.f32 0.0, %v1120
  %v1122 = vpop.f32.mrb[0].mxu0
  %1123 = vmatprep.mubr.bf16.mxu0 0
  %1124 = vmatmul.mubr.bf16.gmra.mrb[0].mxu0 %v963
  %v1125 = vpop.f32.mrb[0].mxu0
  %v1126 = vadd.f32 0.0, %v1125
  %v1127 = vpop.f32.mrb[0].mxu0
  %v1128 = vpop.f32.mrb[0].mxu0
  %v1129 = vadd.f32 0.0, %v1128
  %v1130 = vpop.f32.mrb[0].mxu0
  %1131 = vmatprep.mubr.bf16.mxu0 0
  %1132 = vmatmul.mubr.bf16.gmra.mrb[0].mxu0 %v966
  %v1133 = vpop.f32.mrb[0].mxu0
  %v1134 = vadd.f32 0.0, %v1133
  %v1135 = vpop.f32.mrb[0].mxu0
  %v1136 = vpop.f32.mrb[0].mxu0
  %v1137 = vadd.f32 0.0, %v1136
  %v1138 = vpop.f32.mrb[0].mxu0
  %1139 = vmatprep.mubr.bf16.mxu0 0
  %1140 = vmatmul.mubr.bf16.gmra.mrb[0].mxu0 %v969
  %v1141 = vpop.f32.mrb[0].mxu0
  %v1142 = vadd.f32 0.0, %v1141
  %v1143 = vpop.f32.mrb[0].mxu0
  %v1144 = vpop.f32.mrb[0].mxu0
  %v1145 = vadd.f32 0.0, %v1144
  %v1146 = vpop.f32.mrb[0].mxu0
  %1147 = vdwg.mxu0
  %v1148 = vmax.f32 %v755, %v1006
  %v1149 = vmax.f32 %v756, %v1009
  %v1150 = vmax.f32 %v757, %v1014
  %v1151 = vmax.f32 %v758, %v1017
  %v1152 = vmax.f32 %v759, %v1022
  %v1153 = vmax.f32 %v760, %v1025
  %v1154 = vmax.f32 %v761, %v1030
  %v1155 = vmax.f32 %v762, %v1033
  %v1156 = vmax.f32 %v763, %v1038
  %v1157 = vmax.f32 %v764, %v1041
  %v1158 = vmax.f32 %v765, %v1046
  %v1159 = vmax.f32 %v766, %v1049
  %v1160 = vmax.f32 %v767, %v1054
  %v1161 = vmax.f32 %v768, %v1057
  %v1162 = vmax.f32 %v769, %v1062
  %v1163 = vmax.f32 %v770, %v1065
  %v1164 = vmax.f32 %v771, %v1070
  %v1165 = vmax.f32 %v772, %v1073
  %v1166 = vmax.f32 %v773, %v1078
  %v1167 = vmax.f32 %v774, %v1081
  %v1168 = vmax.f32 %v775, %v1086
  %v1169 = vmax.f32 %v776, %v1089
  %v1170 = vmax.f32 %v777, %v1094
  %v1171 = vmax.f32 %v778, %v1097
  %v1172 = vmax.f32 %v779, %v1102
  %v1173 = vmax.f32 %v780, %v1105
  %v1174 = vmax.f32 %v781, %v1110
  %v1175 = vmax.f32 %v782, %v1113
  %v1176 = vmax.f32 %v783, %v1118
  %v1177 = vmax.f32 %v784, %v1121
  %v1178 = vmax.f32 %v785, %v1126
  %v1179 = vmax.f32 %v786, %v1129
  %v1180 = vmax.f32 %v787, %v1134
  %v1181 = vmax.f32 %v788, %v1137
  %v1182 = vmax.f32 %v789, %v1142
  %v1183 = vmax.f32 %v790, %v1145
  %v1184 = vld [vmem:[%s3] sm:$0xf]
  %v1185 = vld [vmem:[%s3 + $0x4] sm:$0xf]
  %v1186 = vld [vmem:[%s3 + $0x8] sm:$0xf]
  %v1187 = vld [vmem:[%s3 + $0xc] sm:$0xf]
  %v1188 = vld [vmem:[%s3 + $0x10] sm:$0xf]
  %v1189 = vld [vmem:[%s3 + $0x14] sm:$0xf]
  %v1190 = vld [vmem:[%s3 + $0x18] sm:$0xf]
  %v1191 = vld [vmem:[%s3 + $0x1c] sm:$0xf]
  %v1192 = vld [vmem:[%s3 + $0x20] sm:$0xf]
  %v1193 = vld [vmem:[%s3 + $0x24] sm:$0xf]
  %v1194 = vld [vmem:[%s3 + $0x28] sm:$0xf]
  %v1195 = vld [vmem:[%s3 + $0x2c] sm:$0xf]
  %v1196 = vld [vmem:[%s3 + $0x30] sm:$0xf]
  %v1197 = vld [vmem:[%s3 + $0x34] sm:$0xf]
  %v1198 = vld [vmem:[%s3 + $0x38] sm:$0xf]
  %v1199 = vld [vmem:[%s3 + $0x3c] sm:$0xf]
  %v1200 = vld [vmem:[%s3 + $0x40] sm:$0xf]
  %v1201 = vld [vmem:[%s3 + $0x44] sm:$0xf]
  %v1202 = vld [vmem:[%s3 + $0x48] sm:$0xf]
  %v1203 = vld [vmem:[%s3 + $0x4c] sm:$0xf]
  %v1204 = vld [vmem:[%s3 + $0x50] sm:$0xf]
  %v1205 = vld [vmem:[%s3 + $0x54] sm:$0xf]
  %v1206 = vld [vmem:[%s3 + $0x58] sm:$0xf]
  %v1207 = vld [vmem:[%s3 + $0x5c] sm:$0xf]
  %v1208 = vld [vmem:[%s3 + $0x60] sm:$0xf]
  %v1209 = vld [vmem:[%s3 + $0x64] sm:$0xf]
  %v1210 = vld [vmem:[%s3 + $0x68] sm:$0xf]
  %v1211 = vld [vmem:[%s3 + $0x6c] sm:$0xf]
  %v1212 = vld [vmem:[%s3 + $0x70] sm:$0xf]
  %v1213 = vld [vmem:[%s3 + $0x74] sm:$0xf]
  %v1214 = vld [vmem:[%s3 + $0x78] sm:$0xf]
  %v1215 = vld [vmem:[%s3 + $0x7c] sm:$0xf]
  %v1216 = vld [vmem:[%s3 + $0x80] sm:$0xf]
  %v1217 = vld [vmem:[%s3 + $0x84] sm:$0xf]
  %v1218 = vld [vmem:[%s3 + $0x88] sm:$0xf]
  %v1219 = vld [vmem:[%s3 + $0x8c] sm:$0xf]
  %v1256 = vunpack.c.l.b16 %v1184
  %v1257 = vunpack.c.l.b16 %v1185
  %v1258 = vunpack.c.l.b16 %v1186
  %v1259 = vunpack.c.l.b16 %v1187
  %v1260 = vunpack.c.l.b16 %v1188
  %v1261 = vunpack.c.l.b16 %v1189
  %v1262 = vunpack.c.l.b16 %v1190
  %v1263 = vunpack.c.l.b16 %v1191
  %v1264 = vunpack.c.l.b16 %v1192
  %v1265 = vunpack.c.l.b16 %v1193
  %v1266 = vunpack.c.l.b16 %v1194
  %v1267 = vunpack.c.l.b16 %v1195
  %v1268 = vunpack.c.l.b16 %v1196
  %v1269 = vunpack.c.l.b16 %v1197
  %v1270 = vunpack.c.l.b16 %v1198
  %v1271 = vunpack.c.l.b16 %v1199
  %v1272 = vunpack.c.l.b16 %v1200
  %v1273 = vunpack.c.l.b16 %v1201
  %v1274 = vunpack.c.l.b16 %v1202
  %v1275 = vunpack.c.l.b16 %v1203
  %v1276 = vunpack.c.l.b16 %v1204
  %v1277 = vunpack.c.l.b16 %v1205
  %v1278 = vunpack.c.l.b16 %v1206
  %v1279 = vunpack.c.l.b16 %v1207
  %v1280 = vunpack.c.l.b16 %v1208
  %v1281 = vunpack.c.l.b16 %v1209
  %v1282 = vunpack.c.l.b16 %v1210
  %v1283 = vunpack.c.l.b16 %v1211
  %v1284 = vunpack.c.l.b16 %v1212
  %v1285 = vunpack.c.l.b16 %v1213
  %v1286 = vunpack.c.l.b16 %v1214
  %v1287 = vunpack.c.l.b16 %v1215
  %v1288 = vunpack.c.l.b16 %v1216
  %v1289 = vunpack.c.l.b16 %v1217
  %v1290 = vunpack.c.l.b16 %v1218
  %v1291 = vunpack.c.l.b16 %v1219
  %v1292 = vpack.c.b16 %v1257, %v1256
  %v1293 = vpack.c.b16 %v1259, %v1258
  %v1294 = vpack.c.b16 %v1261, %v1260
  %v1295 = vpack.c.b16 %v1263, %v1262
  %v1296 = vpack.c.b16 %v1265, %v1264
  %v1297 = vpack.c.b16 %v1267, %v1266
  %v1298 = vpack.c.b16 %v1269, %v1268
  %v1299 = vpack.c.b16 %v1271, %v1270
  %v1300 = vpack.c.b16 %v1273, %v1272
  %v1301 = vpack.c.b16 %v1275, %v1274
  %v1302 = vpack.c.b16 %v1277, %v1276
  %v1303 = vpack.c.b16 %v1279, %v1278
  %v1304 = vpack.c.b16 %v1281, %v1280
  %v1305 = vpack.c.b16 %v1283, %v1282
  %v1306 = vpack.c.b16 %v1285, %v1284
  %v1307 = vpack.c.b16 %v1287, %v1286
  %v1308 = vpack.c.b16 %v1289, %v1288
  %v1309 = vpack.c.b16 %v1291, %v1290
  %v1311 = vsel %vm166, %v1292, 0
  %v1314 = vsel %vm166, %v1293, 0
  %v1317 = vsel %vm166, %v1294, 0
  %v1320 = vsel %vm166, %v1295, 0
  %v1323 = vsel %vm166, %v1296, 0
  %v1326 = vsel %vm166, %v1297, 0
  %v1329 = vsel %vm166, %v1298, 0
  %v1332 = vsel %vm166, %v1299, 0
  %v1335 = vsel %vm166, %v1300, 0
  %v1338 = vsel %vm166, %v1301, 0
  %v1341 = vsel %vm166, %v1302, 0
  %v1344 = vsel %vm166, %v1303, 0
  %v1347 = vsel %vm166, %v1304, 0
  %v1350 = vsel %vm166, %v1305, 0
  %v1353 = vsel %vm166, %v1306, 0
  %v1356 = vsel %vm166, %v1307, 0
  %v1359 = vsel %vm166, %v1308, 0
  %v1362 = vsel %vm166, %v1309, 0
  %1364 = vmatprep.subr.bf16.mxu0 0
  %1365 = vmatpush1.bf16.msra.mxu0 %v162
  %1366 = vmatprep.subr.bf16.mxu0 0
  %1367 = vmatpush1.bf16.msra.mxu0 %v163
  %1368 = vmatprep.subr.bf16.mxu0 0
  %1369 = vmatpush1.bf16.msra.mxu0 0
  %1370 = vmatprep.subr.bf16.mxu0 0
  %1371 = vmatpush1.bf16.msra.mxu0 0
  %1372 = vmatprep.subr.bf16.mxu0 0
  %1373 = vmatpush1.bf16.msra.mxu0 0
  %1374 = vmatprep.subr.bf16.mxu0 0
  %1375 = vmatpush1.bf16.msra.mxu0 0
  %1376 = vmatprep.subr.bf16.mxu0 0
  %1377 = vmatpush1.bf16.msra.mxu0 0
  %1378 = vmatprep.subr.bf16.mxu0 0
  %1379 = vmatpush1.bf16.msra.mxu0 0
  %1380 = vmatprep.subr.bf16.mxu0 0
  %1381 = vmatpush1.bf16.msra.mxu0 0
  %1382 = vmatprep.subr.bf16.mxu0 0
  %1383 = vmatpush1.bf16.msra.mxu0 0
  %1384 = vmatprep.subr.bf16.mxu0 0
  %1385 = vmatpush1.bf16.msra.mxu0 0
  %1386 = vmatprep.subr.bf16.mxu0 0
  %1387 = vmatpush1.bf16.msra.mxu0 0
  %1388 = vmatprep.subr.bf16.mxu0 0
  %1389 = vmatpush1.bf16.msra.mxu0 0
  %1390 = vmatprep.subr.bf16.mxu0 0
  %1391 = vmatpush1.bf16.msra.mxu0 0
  %1392 = vmatprep.subr.bf16.mxu0 0
  %1393 = vmatpush1.bf16.msra.mxu0 0
  %1394 = vmatprep.subr.bf16.mxu0 0
  %1395 = vmatpush1.bf16.msra.mxu0 0
  %1396 = vmatprep.mubr.bf16.mxu0 0
  %1397 = vmatmul.mubr.bf16.gmra.mrb[0].mxu0 %v1311
  %v1398 = vpop.f32.mrb[0].mxu0
  %v1399 = vadd.f32 0.0, %v1398
  %v1400 = vpop.f32.mrb[0].mxu0
  %v1401 = vpop.f32.mrb[0].mxu0
  %v1402 = vadd.f32 0.0, %v1401
  %v1403 = vpop.f32.mrb[0].mxu0
  %1404 = vmatprep.mubr.bf16.mxu0 0
  %1405 = vmatmul.mubr.bf16.gmra.mrb[0].mxu0 %v1314
  %v1406 = vpop.f32.mrb[0].mxu0
  %v1407 = vadd.f32 0.0, %v1406
  %v1408 = vpop.f32.mrb[0].mxu0
  %v1409 = vpop.f32.mrb[0].mxu0
  %v1410 = vadd.f32 0.0, %v1409
  %v1411 = vpop.f32.mrb[0].mxu0
  %1412 = vmatprep.mubr.bf16.mxu0 0
  %1413 = vmatmul.mubr.bf16.gmra.mrb[0].mxu0 %v1317
  %v1414 = vpop.f32.mrb[0].mxu0
  %v1415 = vadd.f32 0.0, %v1414
  %v1416 = vpop.f32.mrb[0].mxu0
  %v1417 = vpop.f32.mrb[0].mxu0
  %v1418 = vadd.f32 0.0, %v1417
  %v1419 = vpop.f32.mrb[0].mxu0
  %1420 = vmatprep.mubr.bf16.mxu0 0
  %1421 = vmatmul.mubr.bf16.gmra.mrb[0].mxu0 %v1320
  %v1422 = vpop.f32.mrb[0].mxu0
  %v1423 = vadd.f32 0.0, %v1422
  %v1424 = vpop.f32.mrb[0].mxu0
  %v1425 = vpop.f32.mrb[0].mxu0
  %v1426 = vadd.f32 0.0, %v1425
  %v1427 = vpop.f32.mrb[0].mxu0
  %1428 = vmatprep.mubr.bf16.mxu0 0
  %1429 = vmatmul.mubr.bf16.gmra.mrb[0].mxu0 %v1323
  %v1430 = vpop.f32.mrb[0].mxu0
  %v1431 = vadd.f32 0.0, %v1430
  %v1432 = vpop.f32.mrb[0].mxu0
  %v1433 = vpop.f32.mrb[0].mxu0
  %v1434 = vadd.f32 0.0, %v1433
  %v1435 = vpop.f32.mrb[0].mxu0
  %1436 = vmatprep.mubr.bf16.mxu0 0
  %1437 = vmatmul.mubr.bf16.gmra.mrb[0].mxu0 %v1326
  %v1438 = vpop.f32.mrb[0].mxu0
  %v1439 = vadd.f32 0.0, %v1438
  %v1440 = vpop.f32.mrb[0].mxu0
  %v1441 = vpop.f32.mrb[0].mxu0
  %v1442 = vadd.f32 0.0, %v1441
  %v1443 = vpop.f32.mrb[0].mxu0
  %1444 = vmatprep.mubr.bf16.mxu0 0
  %1445 = vmatmul.mubr.bf16.gmra.mrb[0].mxu0 %v1329
  %v1446 = vpop.f32.mrb[0].mxu0
  %v1447 = vadd.f32 0.0, %v1446
  %v1448 = vpop.f32.mrb[0].mxu0
  %v1449 = vpop.f32.mrb[0].mxu0
  %v1450 = vadd.f32 0.0, %v1449
  %v1451 = vpop.f32.mrb[0].mxu0
  %1452 = vmatprep.mubr.bf16.mxu0 0
  %1453 = vmatmul.mubr.bf16.gmra.mrb[0].mxu0 %v1332
  %v1454 = vpop.f32.mrb[0].mxu0
  %v1455 = vadd.f32 0.0, %v1454
  %v1456 = vpop.f32.mrb[0].mxu0
  %v1457 = vpop.f32.mrb[0].mxu0
  %v1458 = vadd.f32 0.0, %v1457
  %v1459 = vpop.f32.mrb[0].mxu0
  %1460 = vmatprep.mubr.bf16.mxu0 0
  %1461 = vmatmul.mubr.bf16.gmra.mrb[0].mxu0 %v1335
  %v1462 = vpop.f32.mrb[0].mxu0
  %v1463 = vadd.f32 0.0, %v1462
  %v1464 = vpop.f32.mrb[0].mxu0
  %v1465 = vpop.f32.mrb[0].mxu0
  %v1466 = vadd.f32 0.0, %v1465
  %v1467 = vpop.f32.mrb[0].mxu0
  %1468 = vmatprep.mubr.bf16.mxu0 0
  %1469 = vmatmul.mubr.bf16.gmra.mrb[0].mxu0 %v1338
  %v1470 = vpop.f32.mrb[0].mxu0
  %v1471 = vadd.f32 0.0, %v1470
  %v1472 = vpop.f32.mrb[0].mxu0
  %v1473 = vpop.f32.mrb[0].mxu0
  %v1474 = vadd.f32 0.0, %v1473
  %v1475 = vpop.f32.mrb[0].mxu0
  %1476 = vmatprep.mubr.bf16.mxu0 0
  %1477 = vmatmul.mubr.bf16.gmra.mrb[0].mxu0 %v1341
  %v1478 = vpop.f32.mrb[0].mxu0
  %v1479 = vadd.f32 0.0, %v1478
  %v1480 = vpop.f32.mrb[0].mxu0
  %v1481 = vpop.f32.mrb[0].mxu0
  %v1482 = vadd.f32 0.0, %v1481
  %v1483 = vpop.f32.mrb[0].mxu0
  %1484 = vmatprep.mubr.bf16.mxu0 0
  %1485 = vmatmul.mubr.bf16.gmra.mrb[0].mxu0 %v1344
  %v1486 = vpop.f32.mrb[0].mxu0
  %v1487 = vadd.f32 0.0, %v1486
  %v1488 = vpop.f32.mrb[0].mxu0
  %v1489 = vpop.f32.mrb[0].mxu0
  %v1490 = vadd.f32 0.0, %v1489
  %v1491 = vpop.f32.mrb[0].mxu0
  %1492 = vmatprep.mubr.bf16.mxu0 0
  %1493 = vmatmul.mubr.bf16.gmra.mrb[0].mxu0 %v1347
  %v1494 = vpop.f32.mrb[0].mxu0
  %v1495 = vadd.f32 0.0, %v1494
  %v1496 = vpop.f32.mrb[0].mxu0
  %v1497 = vpop.f32.mrb[0].mxu0
  %v1498 = vadd.f32 0.0, %v1497
  %v1499 = vpop.f32.mrb[0].mxu0
  %1500 = vmatprep.mubr.bf16.mxu0 0
  %1501 = vmatmul.mubr.bf16.gmra.mrb[0].mxu0 %v1350
  %v1502 = vpop.f32.mrb[0].mxu0
  %v1503 = vadd.f32 0.0, %v1502
  %v1504 = vpop.f32.mrb[0].mxu0
  %v1505 = vpop.f32.mrb[0].mxu0
  %v1506 = vadd.f32 0.0, %v1505
  %v1507 = vpop.f32.mrb[0].mxu0
  %1508 = vmatprep.mubr.bf16.mxu0 0
  %1509 = vmatmul.mubr.bf16.gmra.mrb[0].mxu0 %v1353
  %v1510 = vpop.f32.mrb[0].mxu0
  %v1511 = vadd.f32 0.0, %v1510
  %v1512 = vpop.f32.mrb[0].mxu0
  %v1513 = vpop.f32.mrb[0].mxu0
  %v1514 = vadd.f32 0.0, %v1513
  %v1515 = vpop.f32.mrb[0].mxu0
  %1516 = vmatprep.mubr.bf16.mxu0 0
  %1517 = vmatmul.mubr.bf16.gmra.mrb[0].mxu0 %v1356
  %v1518 = vpop.f32.mrb[0].mxu0
  %v1519 = vadd.f32 0.0, %v1518
  %v1520 = vpop.f32.mrb[0].mxu0
  %v1521 = vpop.f32.mrb[0].mxu0
  %v1522 = vadd.f32 0.0, %v1521
  %v1523 = vpop.f32.mrb[0].mxu0
  %1524 = vmatprep.mubr.bf16.mxu0 0
  %1525 = vmatmul.mubr.bf16.gmra.mrb[0].mxu0 %v1359
  %v1526 = vpop.f32.mrb[0].mxu0
  %v1527 = vadd.f32 0.0, %v1526
  %v1528 = vpop.f32.mrb[0].mxu0
  %v1529 = vpop.f32.mrb[0].mxu0
  %v1530 = vadd.f32 0.0, %v1529
  %v1531 = vpop.f32.mrb[0].mxu0
  %1532 = vmatprep.mubr.bf16.mxu0 0
  %1533 = vmatmul.mubr.bf16.gmra.mrb[0].mxu0 %v1362
  %v1534 = vpop.f32.mrb[0].mxu0
  %v1535 = vadd.f32 0.0, %v1534
  %v1536 = vpop.f32.mrb[0].mxu0
  %v1537 = vpop.f32.mrb[0].mxu0
  %v1538 = vadd.f32 0.0, %v1537
  %v1539 = vpop.f32.mrb[0].mxu0
  %1540 = vdwg.mxu0
  %v1541 = vmax.f32 %v1148, %v1399
  %v1542 = vmax.f32 %v1149, %v1402
  %v1543 = vmax.f32 %v1150, %v1407
  %v1544 = vmax.f32 %v1151, %v1410
  %v1545 = vmax.f32 %v1152, %v1415
  %v1546 = vmax.f32 %v1153, %v1418
  %v1547 = vmax.f32 %v1154, %v1423
  %v1548 = vmax.f32 %v1155, %v1426
  %v1549 = vmax.f32 %v1156, %v1431
  %v1550 = vmax.f32 %v1157, %v1434
  %v1551 = vmax.f32 %v1158, %v1439
  %v1552 = vmax.f32 %v1159, %v1442
  %v1553 = vmax.f32 %v1160, %v1447
  %v1554 = vmax.f32 %v1161, %v1450
  %v1555 = vmax.f32 %v1162, %v1455
  %v1556 = vmax.f32 %v1163, %v1458
  %v1557 = vmax.f32 %v1164, %v1463
  %v1558 = vmax.f32 %v1165, %v1466
  %v1559 = vmax.f32 %v1166, %v1471
  %v1560 = vmax.f32 %v1167, %v1474
  %v1561 = vmax.f32 %v1168, %v1479
  %v1562 = vmax.f32 %v1169, %v1482
  %v1563 = vmax.f32 %v1170, %v1487
  %v1564 = vmax.f32 %v1171, %v1490
  %v1565 = vmax.f32 %v1172, %v1495
  %v1566 = vmax.f32 %v1173, %v1498
  %v1567 = vmax.f32 %v1174, %v1503
  %v1568 = vmax.f32 %v1175, %v1506
  %v1569 = vmax.f32 %v1176, %v1511
  %v1570 = vmax.f32 %v1177, %v1514
  %v1571 = vmax.f32 %v1178, %v1519
  %v1572 = vmax.f32 %v1179, %v1522
  %v1573 = vmax.f32 %v1180, %v1527
  %v1574 = vmax.f32 %v1181, %v1530
  %v1575 = vmax.f32 %v1182, %v1535
  %v1576 = vmax.f32 %v1183, %v1538
  %v1577 = vld [vmem:[%s5] sm:$0x1]
  %v1579 = vlaneseq
  %v1580 = vshrl.u32 %v1579, 7
  %v1581 = vsub.s32 0, %v1580
  %v1582 = vrot.slane %v1577, %v1581
  %v1584 = vadd.f32 %v1541, %v1582
  %v1585 = vadd.f32 %v1542, %v1582
  %v1586 = vadd.f32 %v1543, %v1582
  %v1587 = vadd.f32 %v1544, %v1582
  %v1588 = vadd.f32 %v1545, %v1582
  %v1589 = vadd.f32 %v1546, %v1582
  %v1590 = vadd.f32 %v1547, %v1582
  %v1591 = vadd.f32 %v1548, %v1582
  %v1592 = vadd.f32 %v1549, %v1582
  %v1593 = vadd.f32 %v1550, %v1582
  %v1594 = vadd.f32 %v1551, %v1582
  %v1595 = vadd.f32 %v1552, %v1582
  %v1596 = vadd.f32 %v1553, %v1582
  %v1597 = vadd.f32 %v1554, %v1582
  %v1598 = vadd.f32 %v1555, %v1582
  %v1599 = vadd.f32 %v1556, %v1582
  %v1600 = vadd.f32 %v1557, %v1582
  %v1601 = vadd.f32 %v1558, %v1582
  %v1602 = vadd.f32 %v1559, %v1582
  %v1603 = vadd.f32 %v1560, %v1582
  %v1604 = vadd.f32 %v1561, %v1582
  %v1605 = vadd.f32 %v1562, %v1582
  %v1606 = vadd.f32 %v1563, %v1582
  %v1607 = vadd.f32 %v1564, %v1582
  %v1608 = vadd.f32 %v1565, %v1582
  %v1609 = vadd.f32 %v1566, %v1582
  %v1610 = vadd.f32 %v1567, %v1582
  %v1611 = vadd.f32 %v1568, %v1582
  %v1612 = vadd.f32 %v1569, %v1582
  %v1613 = vadd.f32 %v1570, %v1582
  %v1614 = vadd.f32 %v1571, %v1582
  %v1615 = vadd.f32 %v1572, %v1582
  %v1616 = vadd.f32 %v1573, %v1582
  %v1617 = vadd.f32 %v1574, %v1582
  %v1618 = vadd.f32 %v1575, %v1582
  %v1619 = vadd.f32 %v1576, %v1582
  %v1620 = vpack.c.bf16 %v1585, %v1584
  %v1621 = vpack.c.bf16 %v1587, %v1586
  %v1622 = vpack.c.bf16 %v1589, %v1588
  %v1623 = vpack.c.bf16 %v1591, %v1590
  %v1624 = vpack.c.bf16 %v1593, %v1592
  %v1625 = vpack.c.bf16 %v1595, %v1594
  %v1626 = vpack.c.bf16 %v1597, %v1596
  %v1627 = vpack.c.bf16 %v1599, %v1598
  %v1628 = vpack.c.bf16 %v1601, %v1600
  %v1629 = vpack.c.bf16 %v1603, %v1602
  %v1630 = vpack.c.bf16 %v1605, %v1604
  %v1631 = vpack.c.bf16 %v1607, %v1606
  %v1632 = vpack.c.bf16 %v1609, %v1608
  %v1633 = vpack.c.bf16 %v1611, %v1610
  %v1634 = vpack.c.bf16 %v1613, %v1612
  %v1635 = vpack.c.bf16 %v1615, %v1614
  %v1636 = vpack.c.bf16 %v1617, %v1616
  %v1637 = vpack.c.bf16 %v1619, %v1618
  %v1656 = vunpack.c.l.b16 %v1620
  %v1657 = vunpack.c.h.b16 %v1620
  %v1658 = vunpack.c.l.b16 %v1621
  %v1659 = vunpack.c.h.b16 %v1621
  %v1660 = vunpack.c.l.b16 %v1622
  %v1661 = vunpack.c.h.b16 %v1622
  %v1662 = vunpack.c.l.b16 %v1623
  %v1663 = vunpack.c.h.b16 %v1623
  %v1664 = vunpack.c.l.b16 %v1624
  %v1665 = vunpack.c.h.b16 %v1624
  %v1666 = vunpack.c.l.b16 %v1625
  %v1667 = vunpack.c.h.b16 %v1625
  %v1668 = vunpack.c.l.b16 %v1626
  %v1669 = vunpack.c.h.b16 %v1626
  %v1670 = vunpack.c.l.b16 %v1627
  %v1671 = vunpack.c.h.b16 %v1627
  %v1672 = vunpack.c.l.b16 %v1628
  %v1673 = vunpack.c.h.b16 %v1628
  %v1674 = vunpack.c.l.b16 %v1629
  %v1675 = vunpack.c.h.b16 %v1629
  %v1676 = vunpack.c.l.b16 %v1630
  %v1677 = vunpack.c.h.b16 %v1630
  %v1678 = vunpack.c.l.b16 %v1631
  %v1679 = vunpack.c.h.b16 %v1631
  %v1680 = vunpack.c.l.b16 %v1632
  %v1681 = vunpack.c.h.b16 %v1632
  %v1682 = vunpack.c.l.b16 %v1633
  %v1683 = vunpack.c.h.b16 %v1633
  %v1684 = vunpack.c.l.b16 %v1634
  %v1685 = vunpack.c.h.b16 %v1634
  %v1686 = vunpack.c.l.b16 %v1635
  %v1687 = vunpack.c.h.b16 %v1635
  %v1688 = vunpack.c.l.b16 %v1636
  %v1689 = vunpack.c.h.b16 %v1636
  %v1690 = vunpack.c.l.b16 %v1637
  %v1691 = vunpack.c.h.b16 %v1637
  %v1692 = vpack.c.b16 %v1656, %v1656
  %v1693 = vpack.c.b16 %v1657, %v1657
  %v1694 = vpack.c.b16 %v1658, %v1658
  %v1695 = vpack.c.b16 %v1659, %v1659
  %v1696 = vpack.c.b16 %v1660, %v1660
  %v1697 = vpack.c.b16 %v1661, %v1661
  %v1698 = vpack.c.b16 %v1662, %v1662
  %v1699 = vpack.c.b16 %v1663, %v1663
  %v1700 = vpack.c.b16 %v1664, %v1664
  %v1701 = vpack.c.b16 %v1665, %v1665
  %v1702 = vpack.c.b16 %v1666, %v1666
  %v1703 = vpack.c.b16 %v1667, %v1667
  %v1704 = vpack.c.b16 %v1668, %v1668
  %v1705 = vpack.c.b16 %v1669, %v1669
  %v1706 = vpack.c.b16 %v1670, %v1670
  %v1707 = vpack.c.b16 %v1671, %v1671
  %v1708 = vpack.c.b16 %v1672, %v1672
  %v1709 = vpack.c.b16 %v1673, %v1673
  %v1710 = vpack.c.b16 %v1674, %v1674
  %v1711 = vpack.c.b16 %v1675, %v1675
  %v1712 = vpack.c.b16 %v1676, %v1676
  %v1713 = vpack.c.b16 %v1677, %v1677
  %v1714 = vpack.c.b16 %v1678, %v1678
  %v1715 = vpack.c.b16 %v1679, %v1679
  %v1716 = vpack.c.b16 %v1680, %v1680
  %v1717 = vpack.c.b16 %v1681, %v1681
  %v1718 = vpack.c.b16 %v1682, %v1682
  %v1719 = vpack.c.b16 %v1683, %v1683
  %v1720 = vpack.c.b16 %v1684, %v1684
  %v1721 = vpack.c.b16 %v1685, %v1685
  %v1722 = vpack.c.b16 %v1686, %v1686
  %v1723 = vpack.c.b16 %v1687, %v1687
  %v1724 = vpack.c.b16 %v1688, %v1688
  %v1725 = vpack.c.b16 %v1689, %v1689
  %v1726 = vpack.c.b16 %v1690, %v1690
  %v1727 = vpack.c.b16 %v1691, %v1691
  %1764 = vst [vmem:[%s6] sm:$0xf] %v1692
  %1765 = vst [vmem:[%s6 + $0x4] sm:$0xf] %v1693
  %1766 = vst [vmem:[%s6 + $0x8] sm:$0xf] %v1694
  %1767 = vst [vmem:[%s6 + $0xc] sm:$0xf] %v1695
  %1768 = vst [vmem:[%s6 + $0x10] sm:$0xf] %v1696
  %1769 = vst [vmem:[%s6 + $0x14] sm:$0xf] %v1697
  %1770 = vst [vmem:[%s6 + $0x18] sm:$0xf] %v1698
  %1771 = vst [vmem:[%s6 + $0x1c] sm:$0xf] %v1699
  %1772 = vst [vmem:[%s6 + $0x20] sm:$0xf] %v1700
  %1773 = vst [vmem:[%s6 + $0x24] sm:$0xf] %v1701
  %1774 = vst [vmem:[%s6 + $0x28] sm:$0xf] %v1702
  %1775 = vst [vmem:[%s6 + $0x2c] sm:$0xf] %v1703
  %1776 = vst [vmem:[%s6 + $0x30] sm:$0xf] %v1704
  %1777 = vst [vmem:[%s6 + $0x34] sm:$0xf] %v1705
  %1778 = vst [vmem:[%s6 + $0x38] sm:$0xf] %v1706
  %1779 = vst [vmem:[%s6 + $0x3c] sm:$0xf] %v1707
  %1780 = vst [vmem:[%s6 + $0x40] sm:$0xf] %v1708
  %1781 = vst [vmem:[%s6 + $0x44] sm:$0xf] %v1709
  %1782 = vst [vmem:[%s6 + $0x48] sm:$0xf] %v1710
  %1783 = vst [vmem:[%s6 + $0x4c] sm:$0xf] %v1711
  %1784 = vst [vmem:[%s6 + $0x50] sm:$0xf] %v1712
  %1785 = vst [vmem:[%s6 + $0x54] sm:$0xf] %v1713
  %1786 = vst [vmem:[%s6 + $0x58] sm:$0xf] %v1714
  %1787 = vst [vmem:[%s6 + $0x5c] sm:$0xf] %v1715
  %1788 = vst [vmem:[%s6 + $0x60] sm:$0xf] %v1716
  %1789 = vst [vmem:[%s6 + $0x64] sm:$0xf] %v1717
  %1790 = vst [vmem:[%s6 + $0x68] sm:$0xf] %v1718
  %1791 = vst [vmem:[%s6 + $0x6c] sm:$0xf] %v1719
  %1792 = vst [vmem:[%s6 + $0x70] sm:$0xf] %v1720
  %1793 = vst [vmem:[%s6 + $0x74] sm:$0xf] %v1721
  %1794 = vst [vmem:[%s6 + $0x78] sm:$0xf] %v1722
  %1795 = vst [vmem:[%s6 + $0x7c] sm:$0xf] %v1723
  %1796 = vst [vmem:[%s6 + $0x80] sm:$0xf] %v1724
  %1797 = vst [vmem:[%s6 + $0x84] sm:$0xf] %v1725
  %1798 = vst [vmem:[%s6 + $0x88] sm:$0xf] %v1726
  %1799 = vst [vmem:[%s6 + $0x8c] sm:$0xf] %v1727
  // Predicated region
  $region26: #{lenet_forward.3} parent=0 // pred_check
    _
  $region27: #{lenet_forward.3} parent=0 // pred_check_branch
    %1801 = sbr.rel (0) target = $region29
  $region28: #{lenet_forward.3} parent=0 // pred_region
    _
  $region29: #{lenet_forward.3} parent=0 // pred_fallthru
    _
  // Predicated region
  $region30: #{lenet_forward.3} parent=0 // pred_check
    _
  $region31: #{lenet_forward.3} parent=0 // pred_check_branch
    %1803 = sbr.rel (0) target = $region33
  $region32: #{lenet_forward.3} parent=0 // pred_region
    _
  $region33: #{lenet_forward.3} parent=0 // pred_fallthru
    _

// kernel: lenet_forward.4
$region0: #{lenet_forward.4}
  #allocation0 [shape = 'u32[]', space=smem, size = 0x4, offset = 0x4, fixed_abs, tag = 'smem constant byte address 0x4 - core index']
  #allocation1 [shape = 'u32[144,128]{1,0:T(1,128)}', space=vmem, size = 0x12000, scoped, tag = 'internal scratch']
  %s0 = inlined_call_operand.vmem [shape: bf16[32,512], index: 0, kind: input, shape index: {}]
  %s1 = inlined_call_operand.vmem [shape: bf16[32,512], index: 1, kind: input, shape index: {}]
  %s2 = inlined_call_operand.vmem [shape: bf16[32,512], index: 2, kind: input, shape index: {}]
  %s3 = inlined_call_operand.vmem [shape: bf16[32,512], index: 3, kind: input, shape index: {}]
  %s4 = inlined_call_operand.vmem [shape: bf16[512,128], index: 4, kind: input, shape index: {}]
  %s5 = inlined_call_operand.vmem [shape: f32[1,128], index: 5, kind: input, shape index: {}]
  %s6 = inlined_call_operand.vmem [shape: bf16[32,128], index: 6, kind: output, shape index: {}]
  %s7 = sld [smem:[#allocation0]]
  $region34: #{lenet_forward.4} parent=0
    _
  %s9 = ssub.s32 1, %s7
  %s10 = scalar_select 0, %s9, %s7
  // Predicated region
  $region2: #{lenet_forward.4} parent=0 // pred_check
    _
  $region3: #{lenet_forward.4} parent=0 // pred_check_branch
    %12 = sbr.rel (0) target = $region5
  $region4: #{lenet_forward.4} parent=0 // pred_region
    _
  $region5: #{lenet_forward.4} parent=0 // pred_fallthru
    _
  // Predicated region
  $region6: #{lenet_forward.4} parent=0 // pred_check
    _
  $region7: #{lenet_forward.4} parent=0 // pred_check_branch
    %14 = sbr.rel (0) target = $region9
  $region8: #{lenet_forward.4} parent=0 // pred_region
    _
  $region9: #{lenet_forward.4} parent=0 // pred_fallthru
    _
  // Predicated region
  $region10: #{lenet_forward.4} parent=0 // pred_check
    _
  $region11: #{lenet_forward.4} parent=0 // pred_check_branch
    %16 = sbr.rel (0) target = $region13
  $region12: #{lenet_forward.4} parent=0 // pred_region
    _
  $region13: #{lenet_forward.4} parent=0 // pred_fallthru
    _
  // Predicated region
  $region14: #{lenet_forward.4} parent=0 // pred_check
    _
  $region15: #{lenet_forward.4} parent=0 // pred_check_branch
    %18 = sbr.rel (0) target = $region17
  $region16: #{lenet_forward.4} parent=0 // pred_region
    _
  $region17: #{lenet_forward.4} parent=0 // pred_fallthru
    _
  // Predicated region
  $region18: #{lenet_forward.4} parent=0 // pred_check
    _
  $region19: #{lenet_forward.4} parent=0 // pred_check_branch
    %20 = sbr.rel (0) target = $region21
  $region20: #{lenet_forward.4} parent=0 // pred_region
    _
  $region21: #{lenet_forward.4} parent=0 // pred_fallthru
    _
  // Predicated region
  $region22: #{lenet_forward.4} parent=0 // pred_check
    _
  $region23: #{lenet_forward.4} parent=0 // pred_check_branch
    %22 = sbr.rel (0) target = $region25
  $region24: #{lenet_forward.4} parent=0 // pred_region
    _
  $region25: #{lenet_forward.4} parent=0 // pred_fallthru
    _
  %v24 = vld [vmem:[%s4] sm:$0xf]
  %v25 = vld [vmem:[%s4 + $0x4] sm:$0xf]
  %v26 = vld [vmem:[%s4 + $0x8] sm:$0xf]
  %v27 = vld [vmem:[%s4 + $0xc] sm:$0xf]
  %v28 = vld [vmem:[%s4 + $0x10] sm:$0xf]
  %v29 = vld [vmem:[%s4 + $0x14] sm:$0xf]
  %v30 = vld [vmem:[%s4 + $0x18] sm:$0xf]
  %v31 = vld [vmem:[%s4 + $0x1c] sm:$0xf]
  %v32 = vld [vmem:[%s4 + $0x20] sm:$0xf]
  %v33 = vld [vmem:[%s4 + $0x24] sm:$0xf]
  %v34 = vld [vmem:[%s4 + $0x28] sm:$0xf]
  %v35 = vld [vmem:[%s4 + $0x2c] sm:$0xf]
  %v36 = vld [vmem:[%s4 + $0x30] sm:$0xf]
  %v37 = vld [vmem:[%s4 + $0x34] sm:$0xf]
  %v38 = vld [vmem:[%s4 + $0x38] sm:$0xf]
  %v39 = vld [vmem:[%s4 + $0x3c] sm:$0xf]
  %v40 = vld [vmem:[%s4 + $0x40] sm:$0xf]
  %v41 = vld [vmem:[%s4 + $0x44] sm:$0xf]
  %v42 = vld [vmem:[%s4 + $0x48] sm:$0xf]
  %v43 = vld [vmem:[%s4 + $0x4c] sm:$0xf]
  %v44 = vld [vmem:[%s4 + $0x50] sm:$0xf]
  %v45 = vld [vmem:[%s4 + $0x54] sm:$0xf]
  %v46 = vld [vmem:[%s4 + $0x58] sm:$0xf]
  %v47 = vld [vmem:[%s4 + $0x5c] sm:$0xf]
  %v48 = vld [vmem:[%s4 + $0x60] sm:$0xf]
  %v49 = vld [vmem:[%s4 + $0x64] sm:$0xf]
  %v50 = vld [vmem:[%s4 + $0x68] sm:$0xf]
  %v51 = vld [vmem:[%s4 + $0x6c] sm:$0xf]
  %v52 = vld [vmem:[%s4 + $0x70] sm:$0xf]
  %v53 = vld [vmem:[%s4 + $0x74] sm:$0xf]
  %v54 = vld [vmem:[%s4 + $0x78] sm:$0xf]
  %v55 = vld [vmem:[%s4 + $0x7c] sm:$0xf]
  %v56 = vld [vmem:[%s4 + $0x80] sm:$0xf]
  %v57 = vld [vmem:[%s4 + $0x84] sm:$0xf]
  %v58 = vld [vmem:[%s4 + $0x88] sm:$0xf]
  %v59 = vld [vmem:[%s4 + $0x8c] sm:$0xf]
  %v60 = vld [vmem:[%s4 + $0x90] sm:$0xf]
  %v61 = vld [vmem:[%s4 + $0x94] sm:$0xf]
  %v62 = vld [vmem:[%s4 + $0x98] sm:$0xf]
  %v63 = vld [vmem:[%s4 + $0x9c] sm:$0xf]
  %v64 = vld [vmem:[%s4 + $0xa0] sm:$0xf]
  %v65 = vld [vmem:[%s4 + $0xa4] sm:$0xf]
  %v66 = vld [vmem:[%s4 + $0xa8] sm:$0xf]
  %v67 = vld [vmem:[%s4 + $0xac] sm:$0xf]
  %v68 = vld [vmem:[%s4 + $0xb0] sm:$0xf]
  %v69 = vld [vmem:[%s4 + $0xb4] sm:$0xf]
  %v70 = vld [vmem:[%s4 + $0xb8] sm:$0xf]
  %v71 = vld [vmem:[%s4 + $0xbc] sm:$0xf]
  %v72 = vld [vmem:[%s4 + $0xc0] sm:$0xf]
  %v73 = vld [vmem:[%s4 + $0xc4] sm:$0xf]
  %v74 = vld [vmem:[%s4 + $0xc8] sm:$0xf]
  %v75 = vld [vmem:[%s4 + $0xcc] sm:$0xf]
  %v76 = vld [vmem:[%s4 + $0xd0] sm:$0xf]
  %v77 = vld [vmem:[%s4 + $0xd4] sm:$0xf]
  %v78 = vld [vmem:[%s4 + $0xd8] sm:$0xf]
  %v79 = vld [vmem:[%s4 + $0xdc] sm:$0xf]
  %v80 = vld [vmem:[%s4 + $0xe0] sm:$0xf]
  %v81 = vld [vmem:[%s4 + $0xe4] sm:$0xf]
  %v82 = vld [vmem:[%s4 + $0xe8] sm:$0xf]
  %v83 = vld [vmem:[%s4 + $0xec] sm:$0xf]
  %v84 = vld [vmem:[%s4 + $0xf0] sm:$0xf]
  %v85 = vld [vmem:[%s4 + $0xf4] sm:$0xf]
  %v86 = vld [vmem:[%s4 + $0xf8] sm:$0xf]
  %v87 = vld [vmem:[%s4 + $0xfc] sm:$0xf]
  %v88 = vld [vmem:[%s0] sm:$0xff]
  %v89 = vld [vmem:[%s0 + $0x8] sm:$0xff]
  %v90 = vld [vmem:[%s0 + $0x10] sm:$0xff]
  %v91 = vld [vmem:[%s0 + $0x18] sm:$0xff]
  %v92 = vld [vmem:[%s0 + $0x20] sm:$0xff]
  %v93 = vld [vmem:[%s0 + $0x28] sm:$0xff]
  %v94 = vld [vmem:[%s0 + $0x30] sm:$0xff]
  %v95 = vld [vmem:[%s0 + $0x38] sm:$0xff]
  %v104 = vunpack.c.l.b16 %v88
  %v105 = vunpack.c.h.b16 %v88
  %v106 = vunpack.c.l.b16 %v89
  %v107 = vunpack.c.h.b16 %v89
  %v108 = vunpack.c.l.b16 %v90
  %v109 = vunpack.c.h.b16 %v90
  %v110 = vunpack.c.l.b16 %v91
  %v111 = vunpack.c.h.b16 %v91
  %v112 = vunpack.c.l.b16 %v92
  %v113 = vunpack.c.h.b16 %v92
  %v114 = vunpack.c.l.b16 %v93
  %v115 = vunpack.c.h.b16 %v93
  %v116 = vunpack.c.l.b16 %v94
  %v117 = vunpack.c.h.b16 %v94
  %v118 = vunpack.c.l.b16 %v95
  %v119 = vunpack.c.h.b16 %v95
  %v120 = vpack.c.b16 %v108, %v104
  %v121 = vpack.c.b16 %v109, %v105
  %v122 = vpack.c.b16 %v110, %v106
  %v123 = vpack.c.b16 %v111, %v107
  %v124 = vpack.c.b16 %v116, %v112
  %v125 = vpack.c.b16 %v117, %v113
  %v126 = vpack.c.b16 %v118, %v114
  %v127 = vpack.c.b16 %v119, %v115
  %v200 = vunpack.c.l.b16 %v24
  %v201 = vunpack.c.l.b16 %v25
  %v202 = vunpack.c.l.b16 %v26
  %v203 = vunpack.c.l.b16 %v27
  %v204 = vunpack.c.l.b16 %v28
  %v205 = vunpack.c.l.b16 %v29
  %v206 = vunpack.c.l.b16 %v30
  %v207 = vunpack.c.l.b16 %v31
  %v208 = vunpack.c.l.b16 %v32
  %v209 = vunpack.c.l.b16 %v33
  %v210 = vunpack.c.l.b16 %v34
  %v211 = vunpack.c.l.b16 %v35
  %v212 = vunpack.c.l.b16 %v36
  %v213 = vunpack.c.l.b16 %v37
  %v214 = vunpack.c.l.b16 %v38
  %v215 = vunpack.c.l.b16 %v39
  %v216 = vunpack.c.l.b16 %v40
  %v217 = vunpack.c.l.b16 %v41
  %v218 = vunpack.c.l.b16 %v42
  %v219 = vunpack.c.l.b16 %v43
  %v220 = vunpack.c.l.b16 %v44
  %v221 = vunpack.c.l.b16 %v45
  %v222 = vunpack.c.l.b16 %v46
  %v223 = vunpack.c.l.b16 %v47
  %v224 = vunpack.c.l.b16 %v48
  %v225 = vunpack.c.l.b16 %v49
  %v226 = vunpack.c.l.b16 %v50
  %v227 = vunpack.c.l.b16 %v51
  %v228 = vunpack.c.l.b16 %v52
  %v229 = vunpack.c.l.b16 %v53
  %v230 = vunpack.c.l.b16 %v54
  %v231 = vunpack.c.l.b16 %v55
  %v232 = vunpack.c.l.b16 %v56
  %v233 = vunpack.c.l.b16 %v57
  %v234 = vunpack.c.l.b16 %v58
  %v235 = vunpack.c.l.b16 %v59
  %v236 = vunpack.c.l.b16 %v60
  %v237 = vunpack.c.l.b16 %v61
  %v238 = vunpack.c.l.b16 %v62
  %v239 = vunpack.c.l.b16 %v63
  %v240 = vunpack.c.l.b16 %v64
  %v241 = vunpack.c.l.b16 %v65
  %v242 = vunpack.c.l.b16 %v66
  %v243 = vunpack.c.l.b16 %v67
  %v244 = vunpack.c.l.b16 %v68
  %v245 = vunpack.c.l.b16 %v69
  %v246 = vunpack.c.l.b16 %v70
  %v247 = vunpack.c.l.b16 %v71
  %v248 = vunpack.c.l.b16 %v72
  %v249 = vunpack.c.l.b16 %v73
  %v250 = vunpack.c.l.b16 %v74
  %v251 = vunpack.c.l.b16 %v75
  %v252 = vunpack.c.l.b16 %v76
  %v253 = vunpack.c.l.b16 %v77
  %v254 = vunpack.c.l.b16 %v78
  %v255 = vunpack.c.l.b16 %v79
  %v256 = vunpack.c.l.b16 %v80
  %v257 = vunpack.c.l.b16 %v81
  %v258 = vunpack.c.l.b16 %v82
  %v259 = vunpack.c.l.b16 %v83
  %v260 = vunpack.c.l.b16 %v84
  %v261 = vunpack.c.l.b16 %v85
  %v262 = vunpack.c.l.b16 %v86
  %v263 = vunpack.c.l.b16 %v87
  %v264 = vpack.c.b16 %v201, %v200
  %v265 = vpack.c.b16 %v203, %v202
  %v266 = vpack.c.b16 %v205, %v204
  %v267 = vpack.c.b16 %v207, %v206
  %v268 = vpack.c.b16 %v209, %v208
  %v269 = vpack.c.b16 %v211, %v210
  %v270 = vpack.c.b16 %v213, %v212
  %v271 = vpack.c.b16 %v215, %v214
  %v272 = vpack.c.b16 %v217, %v216
  %v273 = vpack.c.b16 %v219, %v218
  %v274 = vpack.c.b16 %v221, %v220
  %v275 = vpack.c.b16 %v223, %v222
  %v276 = vpack.c.b16 %v225, %v224
  %v277 = vpack.c.b16 %v227, %v226
  %v278 = vpack.c.b16 %v229, %v228
  %v279 = vpack.c.b16 %v231, %v230
  %v280 = vpack.c.b16 %v233, %v232
  %v281 = vpack.c.b16 %v235, %v234
  %v282 = vpack.c.b16 %v237, %v236
  %v283 = vpack.c.b16 %v239, %v238
  %v284 = vpack.c.b16 %v241, %v240
  %v285 = vpack.c.b16 %v243, %v242
  %v286 = vpack.c.b16 %v245, %v244
  %v287 = vpack.c.b16 %v247, %v246
  %v288 = vpack.c.b16 %v249, %v248
  %v289 = vpack.c.b16 %v251, %v250
  %v290 = vpack.c.b16 %v253, %v252
  %v291 = vpack.c.b16 %v255, %v254
  %v292 = vpack.c.b16 %v257, %v256
  %v293 = vpack.c.b16 %v259, %v258
  %v294 = vpack.c.b16 %v261, %v260
  %v295 = vpack.c.b16 %v263, %v262
  %328 = vmatprep.subr.bf16.mxu0 0
  %329 = vmatpush1.bf16.msra.mxu0 %v264
  %330 = vmatprep.subr.bf16.mxu0 0
  %331 = vmatpush1.bf16.msra.mxu0 %v265
  %332 = vmatprep.subr.bf16.mxu0 0
  %333 = vmatpush1.bf16.msra.mxu0 %v266
  %334 = vmatprep.subr.bf16.mxu0 0
  %335 = vmatpush1.bf16.msra.mxu0 %v267
  %336 = vmatprep.subr.bf16.mxu0 0
  %337 = vmatpush1.bf16.msra.mxu0 %v268
  %338 = vmatprep.subr.bf16.mxu0 0
  %339 = vmatpush1.bf16.msra.mxu0 %v269
  %340 = vmatprep.subr.bf16.mxu0 0
  %341 = vmatpush1.bf16.msra.mxu0 %v270
  %342 = vmatprep.subr.bf16.mxu0 0
  %343 = vmatpush1.bf16.msra.mxu0 %v271
  %344 = vmatprep.subr.bf16.mxu0 0
  %345 = vmatpush1.bf16.msra.mxu0 %v272
  %346 = vmatprep.subr.bf16.mxu0 0
  %347 = vmatpush1.bf16.msra.mxu0 %v273
  %348 = vmatprep.subr.bf16.mxu0 0
  %349 = vmatpush1.bf16.msra.mxu0 %v274
  %350 = vmatprep.subr.bf16.mxu0 0
  %351 = vmatpush1.bf16.msra.mxu0 %v275
  %352 = vmatprep.subr.bf16.mxu0 0
  %353 = vmatpush1.bf16.msra.mxu0 %v276
  %354 = vmatprep.subr.bf16.mxu0 0
  %355 = vmatpush1.bf16.msra.mxu0 %v277
  %356 = vmatprep.subr.bf16.mxu0 0
  %357 = vmatpush1.bf16.msra.mxu0 %v278
  %358 = vmatprep.subr.bf16.mxu0 0
  %359 = vmatpush1.bf16.msra.mxu0 %v279
  %360 = vmatprep.mubr.bf16.mxu0 %v121
  %361 = vmatmul.mubr.bf16.gmra.mrb[0].mxu0 %v120
  %v362 = vpop.f32.mrb[0].mxu0
  %v363 = vadd.f32 0.0, %v362
  %v364 = vpop.f32.mrb[0].mxu0
  %v365 = vpop.f32.mrb[0].mxu0
  %v366 = vadd.f32 0.0, %v365
  %v367 = vpop.f32.mrb[0].mxu0
  %368 = vmatprep.mubr.bf16.mxu0 %v125
  %369 = vmatmul.mubr.bf16.gmra.mrb[0].mxu0 %v124
  %v370 = vpop.f32.mrb[0].mxu0
  %v371 = vadd.f32 0.0, %v370
  %v372 = vpop.f32.mrb[0].mxu0
  %v373 = vpop.f32.mrb[0].mxu0
  %v374 = vadd.f32 0.0, %v373
  %v375 = vpop.f32.mrb[0].mxu0
  %376 = vdwg.mxu0
  %377 = vmatprep.subr.bf16.mxu0 0
  %378 = vmatpush1.bf16.msra.mxu0 %v280
  %379 = vmatprep.subr.bf16.mxu0 0
  %380 = vmatpush1.bf16.msra.mxu0 %v281
  %381 = vmatprep.subr.bf16.mxu0 0
  %382 = vmatpush1.bf16.msra.mxu0 %v282
  %383 = vmatprep.subr.bf16.mxu0 0
  %384 = vmatpush1.bf16.msra.mxu0 %v283
  %385 = vmatprep.subr.bf16.mxu0 0
  %386 = vmatpush1.bf16.msra.mxu0 %v284
  %387 = vmatprep.subr.bf16.mxu0 0
  %388 = vmatpush1.bf16.msra.mxu0 %v285
  %389 = vmatprep.subr.bf16.mxu0 0
  %390 = vmatpush1.bf16.msra.mxu0 %v286
  %391 = vmatprep.subr.bf16.mxu0 0
  %392 = vmatpush1.bf16.msra.mxu0 %v287
  %393 = vmatprep.subr.bf16.mxu0 0
  %394 = vmatpush1.bf16.msra.mxu0 %v288
  %395 = vmatprep.subr.bf16.mxu0 0
  %396 = vmatpush1.bf16.msra.mxu0 %v289
  %397 = vmatprep.subr.bf16.mxu0 0
  %398 = vmatpush1.bf16.msra.mxu0 %v290
  %399 = vmatprep.subr.bf16.mxu0 0
  %400 = vmatpush1.bf16.msra.mxu0 %v291
  %401 = vmatprep.subr.bf16.mxu0 0
  %402 = vmatpush1.bf16.msra.mxu0 %v292
  %403 = vmatprep.subr.bf16.mxu0 0
  %404 = vmatpush1.bf16.msra.mxu0 %v293
  %405 = vmatprep.subr.bf16.mxu0 0
  %406 = vmatpush1.bf16.msra.mxu0 %v294
  %407 = vmatprep.subr.bf16.mxu0 0
  %408 = vmatpush1.bf16.msra.mxu0 %v295
  %409 = vmatprep.mubr.bf16.mxu0 %v123
  %410 = vmatmul.mubr.bf16.gmra.mrb[0].mxu0 %v122
  %v411 = vpop.f32.mrb[0].mxu0
  %v412 = vadd.f32 %v363, %v411
  %v413 = vpop.f32.mrb[0].mxu0
  %v414 = vpop.f32.mrb[0].mxu0
  %v415 = vadd.f32 %v366, %v414
  %v416 = vpop.f32.mrb[0].mxu0
  %417 = vmatprep.mubr.bf16.mxu0 %v127
  %418 = vmatmul.mubr.bf16.gmra.mrb[0].mxu0 %v126
  %v419 = vpop.f32.mrb[0].mxu0
  %v420 = vadd.f32 %v371, %v419
  %v421 = vpop.f32.mrb[0].mxu0
  %v422 = vpop.f32.mrb[0].mxu0
  %v423 = vadd.f32 %v374, %v422
  %v424 = vpop.f32.mrb[0].mxu0
  %425 = vdwg.mxu0
  %v426 = vld [vmem:[%s1] sm:$0xff]
  %v427 = vld [vmem:[%s1 + $0x8] sm:$0xff]
  %v428 = vld [vmem:[%s1 + $0x10] sm:$0xff]
  %v429 = vld [vmem:[%s1 + $0x18] sm:$0xff]
  %v430 = vld [vmem:[%s1 + $0x20] sm:$0xff]
  %v431 = vld [vmem:[%s1 + $0x28] sm:$0xff]
  %v432 = vld [vmem:[%s1 + $0x30] sm:$0xff]
  %v433 = vld [vmem:[%s1 + $0x38] sm:$0xff]
  %v442 = vunpack.c.l.b16 %v426
  %v443 = vunpack.c.h.b16 %v426
  %v444 = vunpack.c.l.b16 %v427
  %v445 = vunpack.c.h.b16 %v427
  %v446 = vunpack.c.l.b16 %v428
  %v447 = vunpack.c.h.b16 %v428
  %v448 = vunpack.c.l.b16 %v429
  %v449 = vunpack.c.h.b16 %v429
  %v450 = vunpack.c.l.b16 %v430
  %v451 = vunpack.c.h.b16 %v430
  %v452 = vunpack.c.l.b16 %v431
  %v453 = vunpack.c.h.b16 %v431
  %v454 = vunpack.c.l.b16 %v432
  %v455 = vunpack.c.h.b16 %v432
  %v456 = vunpack.c.l.b16 %v433
  %v457 = vunpack.c.h.b16 %v433
  %v458 = vpack.c.b16 %v446, %v442
  %v459 = vpack.c.b16 %v447, %v443
  %v460 = vpack.c.b16 %v448, %v444
  %v461 = vpack.c.b16 %v449, %v445
  %v462 = vpack.c.b16 %v454, %v450
  %v463 = vpack.c.b16 %v455, %v451
  %v464 = vpack.c.b16 %v456, %v452
  %v465 = vpack.c.b16 %v457, %v453
  %474 = vmatprep.subr.bf16.mxu0 0
  %475 = vmatpush1.bf16.msra.mxu0 %v264
  %476 = vmatprep.subr.bf16.mxu0 0
  %477 = vmatpush1.bf16.msra.mxu0 %v265
  %478 = vmatprep.subr.bf16.mxu0 0
  %479 = vmatpush1.bf16.msra.mxu0 %v266
  %480 = vmatprep.subr.bf16.mxu0 0
  %481 = vmatpush1.bf16.msra.mxu0 %v267
  %482 = vmatprep.subr.bf16.mxu0 0
  %483 = vmatpush1.bf16.msra.mxu0 %v268
  %484 = vmatprep.subr.bf16.mxu0 0
  %485 = vmatpush1.bf16.msra.mxu0 %v269
  %486 = vmatprep.subr.bf16.mxu0 0
  %487 = vmatpush1.bf16.msra.mxu0 %v270
  %488 = vmatprep.subr.bf16.mxu0 0
  %489 = vmatpush1.bf16.msra.mxu0 %v271
  %490 = vmatprep.subr.bf16.mxu0 0
  %491 = vmatpush1.bf16.msra.mxu0 %v272
  %492 = vmatprep.subr.bf16.mxu0 0
  %493 = vmatpush1.bf16.msra.mxu0 %v273
  %494 = vmatprep.subr.bf16.mxu0 0
  %495 = vmatpush1.bf16.msra.mxu0 %v274
  %496 = vmatprep.subr.bf16.mxu0 0
  %497 = vmatpush1.bf16.msra.mxu0 %v275
  %498 = vmatprep.subr.bf16.mxu0 0
  %499 = vmatpush1.bf16.msra.mxu0 %v276
  %500 = vmatprep.subr.bf16.mxu0 0
  %501 = vmatpush1.bf16.msra.mxu0 %v277
  %502 = vmatprep.subr.bf16.mxu0 0
  %503 = vmatpush1.bf16.msra.mxu0 %v278
  %504 = vmatprep.subr.bf16.mxu0 0
  %505 = vmatpush1.bf16.msra.mxu0 %v279
  %506 = vmatprep.mubr.bf16.mxu0 %v459
  %507 = vmatmul.mubr.bf16.gmra.mrb[0].mxu0 %v458
  %v508 = vpop.f32.mrb[0].mxu0
  %v509 = vadd.f32 0.0, %v508
  %v510 = vpop.f32.mrb[0].mxu0
  %v511 = vpop.f32.mrb[0].mxu0
  %v512 = vadd.f32 0.0, %v511
  %v513 = vpop.f32.mrb[0].mxu0
  %514 = vmatprep.mubr.bf16.mxu0 %v463
  %515 = vmatmul.mubr.bf16.gmra.mrb[0].mxu0 %v462
  %v516 = vpop.f32.mrb[0].mxu0
  %v517 = vadd.f32 0.0, %v516
  %v518 = vpop.f32.mrb[0].mxu0
  %v519 = vpop.f32.mrb[0].mxu0
  %v520 = vadd.f32 0.0, %v519
  %v521 = vpop.f32.mrb[0].mxu0
  %522 = vdwg.mxu0
  %523 = vmatprep.subr.bf16.mxu0 0
  %524 = vmatpush1.bf16.msra.mxu0 %v280
  %525 = vmatprep.subr.bf16.mxu0 0
  %526 = vmatpush1.bf16.msra.mxu0 %v281
  %527 = vmatprep.subr.bf16.mxu0 0
  %528 = vmatpush1.bf16.msra.mxu0 %v282
  %529 = vmatprep.subr.bf16.mxu0 0
  %530 = vmatpush1.bf16.msra.mxu0 %v283
  %531 = vmatprep.subr.bf16.mxu0 0
  %532 = vmatpush1.bf16.msra.mxu0 %v284
  %533 = vmatprep.subr.bf16.mxu0 0
  %534 = vmatpush1.bf16.msra.mxu0 %v285
  %535 = vmatprep.subr.bf16.mxu0 0
  %536 = vmatpush1.bf16.msra.mxu0 %v286
  %537 = vmatprep.subr.bf16.mxu0 0
  %538 = vmatpush1.bf16.msra.mxu0 %v287
  %539 = vmatprep.subr.bf16.mxu0 0
  %540 = vmatpush1.bf16.msra.mxu0 %v288
  %541 = vmatprep.subr.bf16.mxu0 0
  %542 = vmatpush1.bf16.msra.mxu0 %v289
  %543 = vmatprep.subr.bf16.mxu0 0
  %544 = vmatpush1.bf16.msra.mxu0 %v290
  %545 = vmatprep.subr.bf16.mxu0 0
  %546 = vmatpush1.bf16.msra.mxu0 %v291
  %547 = vmatprep.subr.bf16.mxu0 0
  %548 = vmatpush1.bf16.msra.mxu0 %v292
  %549 = vmatprep.subr.bf16.mxu0 0
  %550 = vmatpush1.bf16.msra.mxu0 %v293
  %551 = vmatprep.subr.bf16.mxu0 0
  %552 = vmatpush1.bf16.msra.mxu0 %v294
  %553 = vmatprep.subr.bf16.mxu0 0
  %554 = vmatpush1.bf16.msra.mxu0 %v295
  %555 = vmatprep.mubr.bf16.mxu0 %v461
  %556 = vmatmul.mubr.bf16.gmra.mrb[0].mxu0 %v460
  %v557 = vpop.f32.mrb[0].mxu0
  %v558 = vadd.f32 %v509, %v557
  %v559 = vpop.f32.mrb[0].mxu0
  %v560 = vpop.f32.mrb[0].mxu0
  %v561 = vadd.f32 %v512, %v560
  %v562 = vpop.f32.mrb[0].mxu0
  %563 = vmatprep.mubr.bf16.mxu0 %v465
  %564 = vmatmul.mubr.bf16.gmra.mrb[0].mxu0 %v464
  %v565 = vpop.f32.mrb[0].mxu0
  %v566 = vadd.f32 %v517, %v565
  %v567 = vpop.f32.mrb[0].mxu0
  %v568 = vpop.f32.mrb[0].mxu0
  %v569 = vadd.f32 %v520, %v568
  %v570 = vpop.f32.mrb[0].mxu0
  %571 = vdwg.mxu0
  %v572 = vmax.f32 %v412, %v558
  %v573 = vmax.f32 %v415, %v561
  %v574 = vmax.f32 %v420, %v566
  %v575 = vmax.f32 %v423, %v569
  %v576 = vld [vmem:[%s2] sm:$0xff]
  %v577 = vld [vmem:[%s2 + $0x8] sm:$0xff]
  %v578 = vld [vmem:[%s2 + $0x10] sm:$0xff]
  %v579 = vld [vmem:[%s2 + $0x18] sm:$0xff]
  %v580 = vld [vmem:[%s2 + $0x20] sm:$0xff]
  %v581 = vld [vmem:[%s2 + $0x28] sm:$0xff]
  %v582 = vld [vmem:[%s2 + $0x30] sm:$0xff]
  %v583 = vld [vmem:[%s2 + $0x38] sm:$0xff]
  %v592 = vunpack.c.l.b16 %v576
  %v593 = vunpack.c.h.b16 %v576
  %v594 = vunpack.c.l.b16 %v577
  %v595 = vunpack.c.h.b16 %v577
  %v596 = vunpack.c.l.b16 %v578
  %v597 = vunpack.c.h.b16 %v578
  %v598 = vunpack.c.l.b16 %v579
  %v599 = vunpack.c.h.b16 %v579
  %v600 = vunpack.c.l.b16 %v580
  %v601 = vunpack.c.h.b16 %v580
  %v602 = vunpack.c.l.b16 %v581
  %v603 = vunpack.c.h.b16 %v581
  %v604 = vunpack.c.l.b16 %v582
  %v605 = vunpack.c.h.b16 %v582
  %v606 = vunpack.c.l.b16 %v583
  %v607 = vunpack.c.h.b16 %v583
  %v608 = vpack.c.b16 %v596, %v592
  %v609 = vpack.c.b16 %v597, %v593
  %v610 = vpack.c.b16 %v598, %v594
  %v611 = vpack.c.b16 %v599, %v595
  %v612 = vpack.c.b16 %v604, %v600
  %v613 = vpack.c.b16 %v605, %v601
  %v614 = vpack.c.b16 %v606, %v602
  %v615 = vpack.c.b16 %v607, %v603
  %624 = vmatprep.subr.bf16.mxu0 0
  %625 = vmatpush1.bf16.msra.mxu0 %v264
  %626 = vmatprep.subr.bf16.mxu0 0
  %627 = vmatpush1.bf16.msra.mxu0 %v265
  %628 = vmatprep.subr.bf16.mxu0 0
  %629 = vmatpush1.bf16.msra.mxu0 %v266
  %630 = vmatprep.subr.bf16.mxu0 0
  %631 = vmatpush1.bf16.msra.mxu0 %v267
  %632 = vmatprep.subr.bf16.mxu0 0
  %633 = vmatpush1.bf16.msra.mxu0 %v268
  %634 = vmatprep.subr.bf16.mxu0 0
  %635 = vmatpush1.bf16.msra.mxu0 %v269
  %636 = vmatprep.subr.bf16.mxu0 0
  %637 = vmatpush1.bf16.msra.mxu0 %v270
  %638 = vmatprep.subr.bf16.mxu0 0
  %639 = vmatpush1.bf16.msra.mxu0 %v271
  %640 = vmatprep.subr.bf16.mxu0 0
  %641 = vmatpush1.bf16.msra.mxu0 %v272
  %642 = vmatprep.subr.bf16.mxu0 0
  %643 = vmatpush1.bf16.msra.mxu0 %v273
  %644 = vmatprep.subr.bf16.mxu0 0
  %645 = vmatpush1.bf16.msra.mxu0 %v274
  %646 = vmatprep.subr.bf16.mxu0 0
  %647 = vmatpush1.bf16.msra.mxu0 %v275
  %648 = vmatprep.subr.bf16.mxu0 0
  %649 = vmatpush1.bf16.msra.mxu0 %v276
  %650 = vmatprep.subr.bf16.mxu0 0
  %651 = vmatpush1.bf16.msra.mxu0 %v277
  %652 = vmatprep.subr.bf16.mxu0 0
  %653 = vmatpush1.bf16.msra.mxu0 %v278
  %654 = vmatprep.subr.bf16.mxu0 0
  %655 = vmatpush1.bf16.msra.mxu0 %v279
  %656 = vmatprep.mubr.bf16.mxu0 %v609
  %657 = vmatmul.mubr.bf16.gmra.mrb[0].mxu0 %v608
  %v658 = vpop.f32.mrb[0].mxu0
  %v659 = vadd.f32 0.0, %v658
  %v660 = vpop.f32.mrb[0].mxu0
  %v661 = vpop.f32.mrb[0].mxu0
  %v662 = vadd.f32 0.0, %v661
  %v663 = vpop.f32.mrb[0].mxu0
  %664 = vmatprep.mubr.bf16.mxu0 %v613
  %665 = vmatmul.mubr.bf16.gmra.mrb[0].mxu0 %v612
  %v666 = vpop.f32.mrb[0].mxu0
  %v667 = vadd.f32 0.0, %v666
  %v668 = vpop.f32.mrb[0].mxu0
  %v669 = vpop.f32.mrb[0].mxu0
  %v670 = vadd.f32 0.0, %v669
  %v671 = vpop.f32.mrb[0].mxu0
  %672 = vdwg.mxu0
  %673 = vmatprep.subr.bf16.mxu0 0
  %674 = vmatpush1.bf16.msra.mxu0 %v280
  %675 = vmatprep.subr.bf16.mxu0 0
  %676 = vmatpush1.bf16.msra.mxu0 %v281
  %677 = vmatprep.subr.bf16.mxu0 0
  %678 = vmatpush1.bf16.msra.mxu0 %v282
  %679 = vmatprep.subr.bf16.mxu0 0
  %680 = vmatpush1.bf16.msra.mxu0 %v283
  %681 = vmatprep.subr.bf16.mxu0 0
  %682 = vmatpush1.bf16.msra.mxu0 %v284
  %683 = vmatprep.subr.bf16.mxu0 0
  %684 = vmatpush1.bf16.msra.mxu0 %v285
  %685 = vmatprep.subr.bf16.mxu0 0
  %686 = vmatpush1.bf16.msra.mxu0 %v286
  %687 = vmatprep.subr.bf16.mxu0 0
  %688 = vmatpush1.bf16.msra.mxu0 %v287
  %689 = vmatprep.subr.bf16.mxu0 0
  %690 = vmatpush1.bf16.msra.mxu0 %v288
  %691 = vmatprep.subr.bf16.mxu0 0
  %692 = vmatpush1.bf16.msra.mxu0 %v289
  %693 = vmatprep.subr.bf16.mxu0 0
  %694 = vmatpush1.bf16.msra.mxu0 %v290
  %695 = vmatprep.subr.bf16.mxu0 0
  %696 = vmatpush1.bf16.msra.mxu0 %v291
  %697 = vmatprep.subr.bf16.mxu0 0
  %698 = vmatpush1.bf16.msra.mxu0 %v292
  %699 = vmatprep.subr.bf16.mxu0 0
  %700 = vmatpush1.bf16.msra.mxu0 %v293
  %701 = vmatprep.subr.bf16.mxu0 0
  %702 = vmatpush1.bf16.msra.mxu0 %v294
  %703 = vmatprep.subr.bf16.mxu0 0
  %704 = vmatpush1.bf16.msra.mxu0 %v295
  %705 = vmatprep.mubr.bf16.mxu0 %v611
  %706 = vmatmul.mubr.bf16.gmra.mrb[0].mxu0 %v610
  %v707 = vpop.f32.mrb[0].mxu0
  %v708 = vadd.f32 %v659, %v707
  %v709 = vpop.f32.mrb[0].mxu0
  %v710 = vpop.f32.mrb[0].mxu0
  %v711 = vadd.f32 %v662, %v710
  %v712 = vpop.f32.mrb[0].mxu0
  %713 = vmatprep.mubr.bf16.mxu0 %v615
  %714 = vmatmul.mubr.bf16.gmra.mrb[0].mxu0 %v614
  %v715 = vpop.f32.mrb[0].mxu0
  %v716 = vadd.f32 %v667, %v715
  %v717 = vpop.f32.mrb[0].mxu0
  %v718 = vpop.f32.mrb[0].mxu0
  %v719 = vadd.f32 %v670, %v718
  %v720 = vpop.f32.mrb[0].mxu0
  %721 = vdwg.mxu0
  %v722 = vmax.f32 %v572, %v708
  %v723 = vmax.f32 %v573, %v711
  %v724 = vmax.f32 %v574, %v716
  %v725 = vmax.f32 %v575, %v719
  %v726 = vld [vmem:[%s3] sm:$0xff]
  %v727 = vld [vmem:[%s3 + $0x8] sm:$0xff]
  %v728 = vld [vmem:[%s3 + $0x10] sm:$0xff]
  %v729 = vld [vmem:[%s3 + $0x18] sm:$0xff]
  %v730 = vld [vmem:[%s3 + $0x20] sm:$0xff]
  %v731 = vld [vmem:[%s3 + $0x28] sm:$0xff]
  %v732 = vld [vmem:[%s3 + $0x30] sm:$0xff]
  %v733 = vld [vmem:[%s3 + $0x38] sm:$0xff]
  %v742 = vunpack.c.l.b16 %v726
  %v743 = vunpack.c.h.b16 %v726
  %v744 = vunpack.c.l.b16 %v727
  %v745 = vunpack.c.h.b16 %v727
  %v746 = vunpack.c.l.b16 %v728
  %v747 = vunpack.c.h.b16 %v728
  %v748 = vunpack.c.l.b16 %v729
  %v749 = vunpack.c.h.b16 %v729
  %v750 = vunpack.c.l.b16 %v730
  %v751 = vunpack.c.h.b16 %v730
  %v752 = vunpack.c.l.b16 %v731
  %v753 = vunpack.c.h.b16 %v731
  %v754 = vunpack.c.l.b16 %v732
  %v755 = vunpack.c.h.b16 %v732
  %v756 = vunpack.c.l.b16 %v733
  %v757 = vunpack.c.h.b16 %v733
  %v758 = vpack.c.b16 %v746, %v742
  %v759 = vpack.c.b16 %v747, %v743
  %v760 = vpack.c.b16 %v748, %v744
  %v761 = vpack.c.b16 %v749, %v745
  %v762 = vpack.c.b16 %v754, %v750
  %v763 = vpack.c.b16 %v755, %v751
  %v764 = vpack.c.b16 %v756, %v752
  %v765 = vpack.c.b16 %v757, %v753
  %774 = vmatprep.subr.bf16.mxu0 0
  %775 = vmatpush1.bf16.msra.mxu0 %v264
  %776 = vmatprep.subr.bf16.mxu0 0
  %777 = vmatpush1.bf16.msra.mxu0 %v265
  %778 = vmatprep.subr.bf16.mxu0 0
  %779 = vmatpush1.bf16.msra.mxu0 %v266
  %780 = vmatprep.subr.bf16.mxu0 0
  %781 = vmatpush1.bf16.msra.mxu0 %v267
  %782 = vmatprep.subr.bf16.mxu0 0
  %783 = vmatpush1.bf16.msra.mxu0 %v268
  %784 = vmatprep.subr.bf16.mxu0 0
  %785 = vmatpush1.bf16.msra.mxu0 %v269
  %786 = vmatprep.subr.bf16.mxu0 0
  %787 = vmatpush1.bf16.msra.mxu0 %v270
  %788 = vmatprep.subr.bf16.mxu0 0
  %789 = vmatpush1.bf16.msra.mxu0 %v271
  %790 = vmatprep.subr.bf16.mxu0 0
  %791 = vmatpush1.bf16.msra.mxu0 %v272
  %792 = vmatprep.subr.bf16.mxu0 0
  %793 = vmatpush1.bf16.msra.mxu0 %v273
  %794 = vmatprep.subr.bf16.mxu0 0
  %795 = vmatpush1.bf16.msra.mxu0 %v274
  %796 = vmatprep.subr.bf16.mxu0 0
  %797 = vmatpush1.bf16.msra.mxu0 %v275
  %798 = vmatprep.subr.bf16.mxu0 0
  %799 = vmatpush1.bf16.msra.mxu0 %v276
  %800 = vmatprep.subr.bf16.mxu0 0
  %801 = vmatpush1.bf16.msra.mxu0 %v277
  %802 = vmatprep.subr.bf16.mxu0 0
  %803 = vmatpush1.bf16.msra.mxu0 %v278
  %804 = vmatprep.subr.bf16.mxu0 0
  %805 = vmatpush1.bf16.msra.mxu0 %v279
  %806 = vmatprep.mubr.bf16.mxu0 %v759
  %807 = vmatmul.mubr.bf16.gmra.mrb[0].mxu0 %v758
  %v808 = vpop.f32.mrb[0].mxu0
  %v809 = vadd.f32 0.0, %v808
  %v810 = vpop.f32.mrb[0].mxu0
  %v811 = vpop.f32.mrb[0].mxu0
  %v812 = vadd.f32 0.0, %v811
  %v813 = vpop.f32.mrb[0].mxu0
  %814 = vmatprep.mubr.bf16.mxu0 %v763
  %815 = vmatmul.mubr.bf16.gmra.mrb[0].mxu0 %v762
  %v816 = vpop.f32.mrb[0].mxu0
  %v817 = vadd.f32 0.0, %v816
  %v818 = vpop.f32.mrb[0].mxu0
  %v819 = vpop.f32.mrb[0].mxu0
  %v820 = vadd.f32 0.0, %v819
  %v821 = vpop.f32.mrb[0].mxu0
  %822 = vdwg.mxu0
  %823 = vmatprep.subr.bf16.mxu0 0
  %824 = vmatpush1.bf16.msra.mxu0 %v280
  %825 = vmatprep.subr.bf16.mxu0 0
  %826 = vmatpush1.bf16.msra.mxu0 %v281
  %827 = vmatprep.subr.bf16.mxu0 0
  %828 = vmatpush1.bf16.msra.mxu0 %v282
  %829 = vmatprep.subr.bf16.mxu0 0
  %830 = vmatpush1.bf16.msra.mxu0 %v283
  %831 = vmatprep.subr.bf16.mxu0 0
  %832 = vmatpush1.bf16.msra.mxu0 %v284
  %833 = vmatprep.subr.bf16.mxu0 0
  %834 = vmatpush1.bf16.msra.mxu0 %v285
  %835 = vmatprep.subr.bf16.mxu0 0
  %836 = vmatpush1.bf16.msra.mxu0 %v286
  %837 = vmatprep.subr.bf16.mxu0 0
  %838 = vmatpush1.bf16.msra.mxu0 %v287
  %839 = vmatprep.subr.bf16.mxu0 0
  %840 = vmatpush1.bf16.msra.mxu0 %v288
  %841 = vmatprep.subr.bf16.mxu0 0
  %842 = vmatpush1.bf16.msra.mxu0 %v289
  %843 = vmatprep.subr.bf16.mxu0 0
  %844 = vmatpush1.bf16.msra.mxu0 %v290
  %845 = vmatprep.subr.bf16.mxu0 0
  %846 = vmatpush1.bf16.msra.mxu0 %v291
  %847 = vmatprep.subr.bf16.mxu0 0
  %848 = vmatpush1.bf16.msra.mxu0 %v292
  %849 = vmatprep.subr.bf16.mxu0 0
  %850 = vmatpush1.bf16.msra.mxu0 %v293
  %851 = vmatprep.subr.bf16.mxu0 0
  %852 = vmatpush1.bf16.msra.mxu0 %v294
  %853 = vmatprep.subr.bf16.mxu0 0
  %854 = vmatpush1.bf16.msra.mxu0 %v295
  %855 = vmatprep.mubr.bf16.mxu0 %v761
  %856 = vmatmul.mubr.bf16.gmra.mrb[0].mxu0 %v760
  %v857 = vpop.f32.mrb[0].mxu0
  %v858 = vadd.f32 %v809, %v857
  %v859 = vpop.f32.mrb[0].mxu0
  %v860 = vpop.f32.mrb[0].mxu0
  %v861 = vadd.f32 %v812, %v860
  %v862 = vpop.f32.mrb[0].mxu0
  %863 = vmatprep.mubr.bf16.mxu0 %v765
  %864 = vmatmul.mubr.bf16.gmra.mrb[0].mxu0 %v764
  %v865 = vpop.f32.mrb[0].mxu0
  %v866 = vadd.f32 %v817, %v865
  %v867 = vpop.f32.mrb[0].mxu0
  %v868 = vpop.f32.mrb[0].mxu0
  %v869 = vadd.f32 %v820, %v868
  %v870 = vpop.f32.mrb[0].mxu0
  %871 = vdwg.mxu0
  %v872 = vmax.f32 %v722, %v858
  %v873 = vmax.f32 %v723, %v861
  %v874 = vmax.f32 %v724, %v866
  %v875 = vmax.f32 %v725, %v869
  %v876 = vld [vmem:[%s5] sm:$0x1]
  %v878 = vlaneseq
  %v879 = vshrl.u32 %v878, 7
  %v880 = vsub.s32 0, %v879
  %v881 = vrot.slane %v876, %v880
  %v883 = vadd.f32 %v872, %v881
  %v884 = vadd.f32 %v873, %v881
  %v885 = vadd.f32 %v874, %v881
  %v886 = vadd.f32 %v875, %v881
  %v887 = vpack.c.bf16 %v884, %v883
  %v888 = vpack.c.bf16 %v886, %v885
  %v891 = vunpack.c.l.b16 %v887
  %v892 = vunpack.c.h.b16 %v887
  %v893 = vunpack.c.l.b16 %v888
  %v894 = vunpack.c.h.b16 %v888
  %v895 = vpack.c.b16 %v891, %v891
  %v896 = vpack.c.b16 %v892, %v892
  %v897 = vpack.c.b16 %v893, %v893
  %v898 = vpack.c.b16 %v894, %v894
  %903 = vst [vmem:[%s6] sm:$0xf] %v895
  %904 = vst [vmem:[%s6 + $0x4] sm:$0xf] %v896
  %905 = vst [vmem:[%s6 + $0x8] sm:$0xf] %v897
  %906 = vst [vmem:[%s6 + $0xc] sm:$0xf] %v898
  // Predicated region
  $region26: #{lenet_forward.4} parent=0 // pred_check
    _
  $region27: #{lenet_forward.4} parent=0 // pred_check_branch
    %908 = sbr.rel (0) target = $region29
  $region28: #{lenet_forward.4} parent=0 // pred_region
    _
  $region29: #{lenet_forward.4} parent=0 // pred_fallthru
    _
  // Predicated region
  $region30: #{lenet_forward.4} parent=0 // pred_check
    _
  $region31: #{lenet_forward.4} parent=0 // pred_check_branch
    %910 = sbr.rel (0) target = $region33
  $region32: #{lenet_forward.4} parent=0 // pred_region
    _
  $region33: #{lenet_forward.4} parent=0 // pred_fallthru
    _

// kernel: lenet_forward.5
$region0: #{lenet_forward.5}
  #allocation0 [shape = 'u32[]', space=smem, size = 0x4, offset = 0x4, fixed_abs, tag = 'smem constant byte address 0x4 - core index']
  #allocation1 [shape = 'u32[144,128]{1,0:T(1,128)}', space=vmem, size = 0x12000, scoped, tag = 'internal scratch']
  %s0 = inlined_call_operand.vmem [shape: bf16[2,1024], index: 0, kind: input, shape index: {}]
  %s1 = inlined_call_operand.vmem [shape: bf16[1024,512], index: 1, kind: input, shape index: {}]
  %s2 = inlined_call_operand.vmem [shape: f32[1,512], index: 2, kind: input, shape index: {}]
  %s3 = inlined_call_operand.vmem [shape: bf16[512,128], index: 3, kind: input, shape index: {}]
  %s4 = inlined_call_operand.vmem [shape: f32[1,128], index: 4, kind: input, shape index: {}]
  %s5 = inlined_call_operand.hbm [shape: f32[2,128], index: 5, kind: output, shape index: {}]
  %s6 = sld [smem:[#allocation0]]
  $region30: #{lenet_forward.5} parent=0
    _
  %s8 = ssub.s32 1, %s6
  %s9 = scalar_select 0, %s8, %s6
  $region1: #{lenet_forward.5} parent=0
    #allocation2 [shape = 'u8[1024]{0}', space=vmem, size = 0x400, scoped, tag = 'output window, operand 0, single buffered']
    #allocation3 [shape = 's32[1]{0}', space=sflag, size = 0x4, scoped, tag = 'scoped memory for lenet_forward.5']
    %10 = vsyncpa [#allocation3], 0
    // Predicated region
    $region2: #{lenet_forward.5} parent=1 // pred_check
      _
    $region3: #{lenet_forward.5} parent=1 // pred_check_branch
      %12 = sbr.rel (0) target = $region5
    $region4: #{lenet_forward.5} parent=1 // pred_region
      _
    $region5: #{lenet_forward.5} parent=1 // pred_fallthru
      _
    // Predicated region
    $region6: #{lenet_forward.5} parent=1 // pred_check
      _
    $region7: #{lenet_forward.5} parent=1 // pred_check_branch
      %14 = sbr.rel (0) target = $region9
    $region8: #{lenet_forward.5} parent=1 // pred_region
      _
    $region9: #{lenet_forward.5} parent=1 // pred_fallthru
      _
    // Predicated region
    $region10: #{lenet_forward.5} parent=1 // pred_check
      _
    $region11: #{lenet_forward.5} parent=1 // pred_check_branch
      %16 = sbr.rel (0) target = $region13
    $region12: #{lenet_forward.5} parent=1 // pred_region
      _
    $region13: #{lenet_forward.5} parent=1 // pred_fallthru
      _
    // Predicated region
    $region14: #{lenet_forward.5} parent=1 // pred_check
      _
    $region15: #{lenet_forward.5} parent=1 // pred_check_branch
      %18 = sbr.rel (0) target = $region17
    $region16: #{lenet_forward.5} parent=1 // pred_region
      _
    $region17: #{lenet_forward.5} parent=1 // pred_fallthru
      _
    // Predicated region
    $region18: #{lenet_forward.5} parent=1 // pred_check
      _
    $region19: #{lenet_forward.5} parent=1 // pred_check_branch
      %20 = sbr.rel (0) target = $region21
    $region20: #{lenet_forward.5} parent=1 // pred_region
      _
    $region21: #{lenet_forward.5} parent=1 // pred_fallthru
      _
    %v22 = vld [vmem:[%s0] sm:$0xff]
    %v23 = vld [vmem:[%s1] sm:$0xff]
    %v24 = vld [vmem:[%s1 + $0x8] sm:$0xff]
    %v25 = vld [vmem:[%s1 + $0x10] sm:$0xff]
    %v26 = vld [vmem:[%s1 + $0x18] sm:$0xff]
    %v27 = vld [vmem:[%s1 + $0x20] sm:$0xff]
    %v28 = vld [vmem:[%s1 + $0x28] sm:$0xff]
    %v29 = vld [vmem:[%s1 + $0x30] sm:$0xff]
    %v30 = vld [vmem:[%s1 + $0x38] sm:$0xff]
    %v31 = vld [vmem:[%s1 + $0x40] sm:$0xff]
    %v32 = vld [vmem:[%s1 + $0x48] sm:$0xff]
    %v33 = vld [vmem:[%s1 + $0x50] sm:$0xff]
    %v34 = vld [vmem:[%s1 + $0x58] sm:$0xff]
    %v35 = vld [vmem:[%s1 + $0x60] sm:$0xff]
    %v36 = vld [vmem:[%s1 + $0x68] sm:$0xff]
    %v37 = vld [vmem:[%s1 + $0x70] sm:$0xff]
    %v38 = vld [vmem:[%s1 + $0x78] sm:$0xff]
    %v39 = vld [vmem:[%s1 + $0x80] sm:$0xff]
    %v40 = vld [vmem:[%s1 + $0x88] sm:$0xff]
    %v41 = vld [vmem:[%s1 + $0x90] sm:$0xff]
    %v42 = vld [vmem:[%s1 + $0x98] sm:$0xff]
    %v43 = vld [vmem:[%s1 + $0xa0] sm:$0xff]
    %v44 = vld [vmem:[%s1 + $0xa8] sm:$0xff]
    %v45 = vld [vmem:[%s1 + $0xb0] sm:$0xff]
    %v46 = vld [vmem:[%s1 + $0xb8] sm:$0xff]
    %v47 = vld [vmem:[%s1 + $0xc0] sm:$0xff]
    %v48 = vld [vmem:[%s1 + $0xc8] sm:$0xff]
    %v49 = vld [vmem:[%s1 + $0xd0] sm:$0xff]
    %v50 = vld [vmem:[%s1 + $0xd8] sm:$0xff]
    %v51 = vld [vmem:[%s1 + $0xe0] sm:$0xff]
    %v52 = vld [vmem:[%s1 + $0xe8] sm:$0xff]
    %v53 = vld [vmem:[%s1 + $0xf0] sm:$0xff]
    %v54 = vld [vmem:[%s1 + $0xf8] sm:$0xff]
    %v55 = vld [vmem:[%s1 + $0x100] sm:$0xff]
    %v56 = vld [vmem:[%s1 + $0x108] sm:$0xff]
    %v57 = vld [vmem:[%s1 + $0x110] sm:$0xff]
    %v58 = vld [vmem:[%s1 + $0x118] sm:$0xff]
    %v59 = vld [vmem:[%s1 + $0x120] sm:$0xff]
    %v60 = vld [vmem:[%s1 + $0x128] sm:$0xff]
    %v61 = vld [vmem:[%s1 + $0x130] sm:$0xff]
    %v62 = vld [vmem:[%s1 + $0x138] sm:$0xff]
    %v63 = vld [vmem:[%s1 + $0x140] sm:$0xff]
    %v64 = vld [vmem:[%s1 + $0x148] sm:$0xff]
    %v65 = vld [vmem:[%s1 + $0x150] sm:$0xff]
    %v66 = vld [vmem:[%s1 + $0x158] sm:$0xff]
    %v67 = vld [vmem:[%s1 + $0x160] sm:$0xff]
    %v68 = vld [vmem:[%s1 + $0x168] sm:$0xff]
    %v69 = vld [vmem:[%s1 + $0x170] sm:$0xff]
    %v70 = vld [vmem:[%s1 + $0x178] sm:$0xff]
    %v71 = vld [vmem:[%s1 + $0x180] sm:$0xff]
    %v72 = vld [vmem:[%s1 + $0x188] sm:$0xff]
    %v73 = vld [vmem:[%s1 + $0x190] sm:$0xff]
    %v74 = vld [vmem:[%s1 + $0x198] sm:$0xff]
    %v75 = vld [vmem:[%s1 + $0x1a0] sm:$0xff]
    %v76 = vld [vmem:[%s1 + $0x1a8] sm:$0xff]
    %v77 = vld [vmem:[%s1 + $0x1b0] sm:$0xff]
    %v78 = vld [vmem:[%s1 + $0x1b8] sm:$0xff]
    %v79 = vld [vmem:[%s1 + $0x1c0] sm:$0xff]
    %v80 = vld [vmem:[%s1 + $0x1c8] sm:$0xff]
    %v81 = vld [vmem:[%s1 + $0x1d0] sm:$0xff]
    %v82 = vld [vmem:[%s1 + $0x1d8] sm:$0xff]
    %v83 = vld [vmem:[%s1 + $0x1e0] sm:$0xff]
    %v84 = vld [vmem:[%s1 + $0x1e8] sm:$0xff]
    %v85 = vld [vmem:[%s1 + $0x1f0] sm:$0xff]
    %v86 = vld [vmem:[%s1 + $0x1f8] sm:$0xff]
    %v87 = vld [vmem:[%s1 + $0x200] sm:$0xff]
    %v88 = vld [vmem:[%s1 + $0x208] sm:$0xff]
    %v89 = vld [vmem:[%s1 + $0x210] sm:$0xff]
    %v90 = vld [vmem:[%s1 + $0x218] sm:$0xff]
    %v91 = vld [vmem:[%s1 + $0x220] sm:$0xff]
    %v92 = vld [vmem:[%s1 + $0x228] sm:$0xff]
    %v93 = vld [vmem:[%s1 + $0x230] sm:$0xff]
    %v94 = vld [vmem:[%s1 + $0x238] sm:$0xff]
    %v95 = vld [vmem:[%s1 + $0x240] sm:$0xff]
    %v96 = vld [vmem:[%s1 + $0x248] sm:$0xff]
    %v97 = vld [vmem:[%s1 + $0x250] sm:$0xff]
    %v98 = vld [vmem:[%s1 + $0x258] sm:$0xff]
    %v99 = vld [vmem:[%s1 + $0x260] sm:$0xff]
    %v100 = vld [vmem:[%s1 + $0x268] sm:$0xff]
    %v101 = vld [vmem:[%s1 + $0x270] sm:$0xff]
    %v102 = vld [vmem:[%s1 + $0x278] sm:$0xff]
    %v103 = vld [vmem:[%s1 + $0x280] sm:$0xff]
    %v104 = vld [vmem:[%s1 + $0x288] sm:$0xff]
    %v105 = vld [vmem:[%s1 + $0x290] sm:$0xff]
    %v106 = vld [vmem:[%s1 + $0x298] sm:$0xff]
    %v107 = vld [vmem:[%s1 + $0x2a0] sm:$0xff]
    %v108 = vld [vmem:[%s1 + $0x2a8] sm:$0xff]
    %v109 = vld [vmem:[%s1 + $0x2b0] sm:$0xff]
    %v110 = vld [vmem:[%s1 + $0x2b8] sm:$0xff]
    %v111 = vld [vmem:[%s1 + $0x2c0] sm:$0xff]
    %v112 = vld [vmem:[%s1 + $0x2c8] sm:$0xff]
    %v113 = vld [vmem:[%s1 + $0x2d0] sm:$0xff]
    %v114 = vld [vmem:[%s1 + $0x2d8] sm:$0xff]
    %v115 = vld [vmem:[%s1 + $0x2e0] sm:$0xff]
    %v116 = vld [vmem:[%s1 + $0x2e8] sm:$0xff]
    %v117 = vld [vmem:[%s1 + $0x2f0] sm:$0xff]
    %v118 = vld [vmem:[%s1 + $0x2f8] sm:$0xff]
    %v119 = vld [vmem:[%s1 + $0x300] sm:$0xff]
    %v120 = vld [vmem:[%s1 + $0x308] sm:$0xff]
    %v121 = vld [vmem:[%s1 + $0x310] sm:$0xff]
    %v122 = vld [vmem:[%s1 + $0x318] sm:$0xff]
    %v123 = vld [vmem:[%s1 + $0x320] sm:$0xff]
    %v124 = vld [vmem:[%s1 + $0x328] sm:$0xff]
    %v125 = vld [vmem:[%s1 + $0x330] sm:$0xff]
    %v126 = vld [vmem:[%s1 + $0x338] sm:$0xff]
    %v127 = vld [vmem:[%s1 + $0x340] sm:$0xff]
    %v128 = vld [vmem:[%s1 + $0x348] sm:$0xff]
    %v129 = vld [vmem:[%s1 + $0x350] sm:$0xff]
    %v130 = vld [vmem:[%s1 + $0x358] sm:$0xff]
    %v131 = vld [vmem:[%s1 + $0x360] sm:$0xff]
    %v132 = vld [vmem:[%s1 + $0x368] sm:$0xff]
    %v133 = vld [vmem:[%s1 + $0x370] sm:$0xff]
    %v134 = vld [vmem:[%s1 + $0x378] sm:$0xff]
    %v135 = vld [vmem:[%s1 + $0x380] sm:$0xff]
    %v136 = vld [vmem:[%s1 + $0x388] sm:$0xff]
    %v137 = vld [vmem:[%s1 + $0x390] sm:$0xff]
    %v138 = vld [vmem:[%s1 + $0x398] sm:$0xff]
    %v139 = vld [vmem:[%s1 + $0x3a0] sm:$0xff]
    %v140 = vld [vmem:[%s1 + $0x3a8] sm:$0xff]
    %v141 = vld [vmem:[%s1 + $0x3b0] sm:$0xff]
    %v142 = vld [vmem:[%s1 + $0x3b8] sm:$0xff]
    %v143 = vld [vmem:[%s1 + $0x3c0] sm:$0xff]
    %v144 = vld [vmem:[%s1 + $0x3c8] sm:$0xff]
    %v145 = vld [vmem:[%s1 + $0x3d0] sm:$0xff]
    %v146 = vld [vmem:[%s1 + $0x3d8] sm:$0xff]
    %v147 = vld [vmem:[%s1 + $0x3e0] sm:$0xff]
    %v148 = vld [vmem:[%s1 + $0x3e8] sm:$0xff]
    %v149 = vld [vmem:[%s1 + $0x3f0] sm:$0xff]
    %v150 = vld [vmem:[%s1 + $0x3f8] sm:$0xff]
    %v151 = vld [vmem:[%s1 + $0x400] sm:$0xff]
    %v152 = vld [vmem:[%s1 + $0x408] sm:$0xff]
    %v153 = vld [vmem:[%s1 + $0x410] sm:$0xff]
    %v154 = vld [vmem:[%s1 + $0x418] sm:$0xff]
    %v155 = vld [vmem:[%s1 + $0x420] sm:$0xff]
    %v156 = vld [vmem:[%s1 + $0x428] sm:$0xff]
    %v157 = vld [vmem:[%s1 + $0x430] sm:$0xff]
    %v158 = vld [vmem:[%s1 + $0x438] sm:$0xff]
    %v159 = vld [vmem:[%s1 + $0x440] sm:$0xff]
    %v160 = vld [vmem:[%s1 + $0x448] sm:$0xff]
    %v161 = vld [vmem:[%s1 + $0x450] sm:$0xff]
    %v162 = vld [vmem:[%s1 + $0x458] sm:$0xff]
    %v163 = vld [vmem:[%s1 + $0x460] sm:$0xff]
    %v164 = vld [vmem:[%s1 + $0x468] sm:$0xff]
    %v165 = vld [vmem:[%s1 + $0x470] sm:$0xff]
    %v166 = vld [vmem:[%s1 + $0x478] sm:$0xff]
    %v167 = vld [vmem:[%s1 + $0x480] sm:$0xff]
    %v168 = vld [vmem:[%s1 + $0x488] sm:$0xff]
    %v169 = vld [vmem:[%s1 + $0x490] sm:$0xff]
    %v170 = vld [vmem:[%s1 + $0x498] sm:$0xff]
    %v171 = vld [vmem:[%s1 + $0x4a0] sm:$0xff]
    %v172 = vld [vmem:[%s1 + $0x4a8] sm:$0xff]
    %v173 = vld [vmem:[%s1 + $0x4b0] sm:$0xff]
    %v174 = vld [vmem:[%s1 + $0x4b8] sm:$0xff]
    %v175 = vld [vmem:[%s1 + $0x4c0] sm:$0xff]
    %v176 = vld [vmem:[%s1 + $0x4c8] sm:$0xff]
    %v177 = vld [vmem:[%s1 + $0x4d0] sm:$0xff]
    %v178 = vld [vmem:[%s1 + $0x4d8] sm:$0xff]
    %v179 = vld [vmem:[%s1 + $0x4e0] sm:$0xff]
    %v180 = vld [vmem:[%s1 + $0x4e8] sm:$0xff]
    %v181 = vld [vmem:[%s1 + $0x4f0] sm:$0xff]
    %v182 = vld [vmem:[%s1 + $0x4f8] sm:$0xff]
    %v183 = vld [vmem:[%s1 + $0x500] sm:$0xff]
    %v184 = vld [vmem:[%s1 + $0x508] sm:$0xff]
    %v185 = vld [vmem:[%s1 + $0x510] sm:$0xff]
    %v186 = vld [vmem:[%s1 + $0x518] sm:$0xff]
    %v187 = vld [vmem:[%s1 + $0x520] sm:$0xff]
    %v188 = vld [vmem:[%s1 + $0x528] sm:$0xff]
    %v189 = vld [vmem:[%s1 + $0x530] sm:$0xff]
    %v190 = vld [vmem:[%s1 + $0x538] sm:$0xff]
    %v191 = vld [vmem:[%s1 + $0x540] sm:$0xff]
    %v192 = vld [vmem:[%s1 + $0x548] sm:$0xff]
    %v193 = vld [vmem:[%s1 + $0x550] sm:$0xff]
    %v194 = vld [vmem:[%s1 + $0x558] sm:$0xff]
    %v195 = vld [vmem:[%s1 + $0x560] sm:$0xff]
    %v196 = vld [vmem:[%s1 + $0x568] sm:$0xff]
    %v197 = vld [vmem:[%s1 + $0x570] sm:$0xff]
    %v198 = vld [vmem:[%s1 + $0x578] sm:$0xff]
    %v199 = vld [vmem:[%s1 + $0x580] sm:$0xff]
    %v200 = vld [vmem:[%s1 + $0x588] sm:$0xff]
    %v201 = vld [vmem:[%s1 + $0x590] sm:$0xff]
    %v202 = vld [vmem:[%s1 + $0x598] sm:$0xff]
    %v203 = vld [vmem:[%s1 + $0x5a0] sm:$0xff]
    %v204 = vld [vmem:[%s1 + $0x5a8] sm:$0xff]
    %v205 = vld [vmem:[%s1 + $0x5b0] sm:$0xff]
    %v206 = vld [vmem:[%s1 + $0x5b8] sm:$0xff]
    %v207 = vld [vmem:[%s1 + $0x5c0] sm:$0xff]
    %v208 = vld [vmem:[%s1 + $0x5c8] sm:$0xff]
    %v209 = vld [vmem:[%s1 + $0x5d0] sm:$0xff]
    %v210 = vld [vmem:[%s1 + $0x5d8] sm:$0xff]
    %v211 = vld [vmem:[%s1 + $0x5e0] sm:$0xff]
    %v212 = vld [vmem:[%s1 + $0x5e8] sm:$0xff]
    %v213 = vld [vmem:[%s1 + $0x5f0] sm:$0xff]
    %v214 = vld [vmem:[%s1 + $0x5f8] sm:$0xff]
    %v215 = vld [vmem:[%s1 + $0x600] sm:$0xff]
    %v216 = vld [vmem:[%s1 + $0x608] sm:$0xff]
    %v217 = vld [vmem:[%s1 + $0x610] sm:$0xff]
    %v218 = vld [vmem:[%s1 + $0x618] sm:$0xff]
    %v219 = vld [vmem:[%s1 + $0x620] sm:$0xff]
    %v220 = vld [vmem:[%s1 + $0x628] sm:$0xff]
    %v221 = vld [vmem:[%s1 + $0x630] sm:$0xff]
    %v222 = vld [vmem:[%s1 + $0x638] sm:$0xff]
    %v223 = vld [vmem:[%s1 + $0x640] sm:$0xff]
    %v224 = vld [vmem:[%s1 + $0x648] sm:$0xff]
    %v225 = vld [vmem:[%s1 + $0x650] sm:$0xff]
    %v226 = vld [vmem:[%s1 + $0x658] sm:$0xff]
    %v227 = vld [vmem:[%s1 + $0x660] sm:$0xff]
    %v228 = vld [vmem:[%s1 + $0x668] sm:$0xff]
    %v229 = vld [vmem:[%s1 + $0x670] sm:$0xff]
    %v230 = vld [vmem:[%s1 + $0x678] sm:$0xff]
    %v231 = vld [vmem:[%s1 + $0x680] sm:$0xff]
    %v232 = vld [vmem:[%s1 + $0x688] sm:$0xff]
    %v233 = vld [vmem:[%s1 + $0x690] sm:$0xff]
    %v234 = vld [vmem:[%s1 + $0x698] sm:$0xff]
    %v235 = vld [vmem:[%s1 + $0x6a0] sm:$0xff]
    %v236 = vld [vmem:[%s1 + $0x6a8] sm:$0xff]
    %v237 = vld [vmem:[%s1 + $0x6b0] sm:$0xff]
    %v238 = vld [vmem:[%s1 + $0x6b8] sm:$0xff]
    %v239 = vld [vmem:[%s1 + $0x6c0] sm:$0xff]
    %v240 = vld [vmem:[%s1 + $0x6c8] sm:$0xff]
    %v241 = vld [vmem:[%s1 + $0x6d0] sm:$0xff]
    %v242 = vld [vmem:[%s1 + $0x6d8] sm:$0xff]
    %v243 = vld [vmem:[%s1 + $0x6e0] sm:$0xff]
    %v244 = vld [vmem:[%s1 + $0x6e8] sm:$0xff]
    %v245 = vld [vmem:[%s1 + $0x6f0] sm:$0xff]
    %v246 = vld [vmem:[%s1 + $0x6f8] sm:$0xff]
    %v247 = vld [vmem:[%s1 + $0x700] sm:$0xff]
    %v248 = vld [vmem:[%s1 + $0x708] sm:$0xff]
    %v249 = vld [vmem:[%s1 + $0x710] sm:$0xff]
    %v250 = vld [vmem:[%s1 + $0x718] sm:$0xff]
    %v251 = vld [vmem:[%s1 + $0x720] sm:$0xff]
    %v252 = vld [vmem:[%s1 + $0x728] sm:$0xff]
    %v253 = vld [vmem:[%s1 + $0x730] sm:$0xff]
    %v254 = vld [vmem:[%s1 + $0x738] sm:$0xff]
    %v255 = vld [vmem:[%s1 + $0x740] sm:$0xff]
    %v256 = vld [vmem:[%s1 + $0x748] sm:$0xff]
    %v257 = vld [vmem:[%s1 + $0x750] sm:$0xff]
    %v258 = vld [vmem:[%s1 + $0x758] sm:$0xff]
    %v259 = vld [vmem:[%s1 + $0x760] sm:$0xff]
    %v260 = vld [vmem:[%s1 + $0x768] sm:$0xff]
    %v261 = vld [vmem:[%s1 + $0x770] sm:$0xff]
    %v262 = vld [vmem:[%s1 + $0x778] sm:$0xff]
    %v263 = vld [vmem:[%s1 + $0x780] sm:$0xff]
    %v264 = vld [vmem:[%s1 + $0x788] sm:$0xff]
    %v265 = vld [vmem:[%s1 + $0x790] sm:$0xff]
    %v266 = vld [vmem:[%s1 + $0x798] sm:$0xff]
    %v267 = vld [vmem:[%s1 + $0x7a0] sm:$0xff]
    %v268 = vld [vmem:[%s1 + $0x7a8] sm:$0xff]
    %v269 = vld [vmem:[%s1 + $0x7b0] sm:$0xff]
    %v270 = vld [vmem:[%s1 + $0x7b8] sm:$0xff]
    %v271 = vld [vmem:[%s1 + $0x7c0] sm:$0xff]
    %v272 = vld [vmem:[%s1 + $0x7c8] sm:$0xff]
    %v273 = vld [vmem:[%s1 + $0x7d0] sm:$0xff]
    %v274 = vld [vmem:[%s1 + $0x7d8] sm:$0xff]
    %v275 = vld [vmem:[%s1 + $0x7e0] sm:$0xff]
    %v276 = vld [vmem:[%s1 + $0x7e8] sm:$0xff]
    %v277 = vld [vmem:[%s1 + $0x7f0] sm:$0xff]
    %v278 = vld [vmem:[%s1 + $0x7f8] sm:$0xff]
    %v279 = vld [vmem:[%s2] sm:$0xf]
    %v281 = vlaneseq
    %v282 = vshrl.u32 %v281, 7
    %v283 = vsub.s32 0, %v282
    %v284 = vrot.slane %v279, %v283
    %v285 = vlaneseq
    %v286 = vshrl.u32 %v285, 7
    %v287 = vsub.s32 1, %v286
    %v288 = vrot.slane %v279, %v287
    %v289 = vlaneseq
    %v290 = vshrl.u32 %v289, 7
    %v291 = vsub.s32 2, %v290
    %v292 = vrot.slane %v279, %v291
    %v293 = vlaneseq
    %v294 = vshrl.u32 %v293, 7
    %v295 = vsub.s32 3, %v294
    %v296 = vrot.slane %v279, %v295
    %v302 = vcombine.high %v22, %v22
    %v304 = vunpack.c.l.s4 1966171168
    %v305 = vunpack.c.0.s8 %v304
    %v306 = vlaneseq
    %v307 = vshrl.u32 %v306, 7
    %v308 = vsub.s32 %v305, %v307
    %v309 = vrot.slane %v22, %v308
    %v311 = vunpack.c.l.s4 1966171168
    %v312 = vunpack.c.0.s8 %v311
    %v313 = vlaneseq
    %v314 = vshrl.u32 %v313, 7
    %v315 = vsub.s32 %v312, %v314
    %v316 = vrot.slane %v302, %v315
    %v317 = vcombine.high %v309, %v309
    %v318 = vcombine.high %v316, %v316
    %v320 = vunpack.c.l.s4 1966171168
    %v321 = vunpack.c.0.s8 %v320
    %v322 = vlaneseq
    %v323 = vshrl.u32 %v322, 7
    %v324 = vsub.s32 %v321, %v323
    %v325 = vrot.slane %v309, %v324
    %v327 = vunpack.c.l.s4 1966171168
    %v328 = vunpack.c.0.s8 %v327
    %v329 = vlaneseq
    %v330 = vshrl.u32 %v329, 7
    %v331 = vsub.s32 %v328, %v330
    %v332 = vrot.slane %v316, %v331
    %v334 = vunpack.c.l.s4 1966171168
    %v335 = vunpack.c.0.s8 %v334
    %v336 = vlaneseq
    %v337 = vshrl.u32 %v336, 7
    %v338 = vsub.s32 %v335, %v337
    %v339 = vrot.slane %v317, %v338
    %v341 = vunpack.c.l.s4 1966171168
    %v342 = vunpack.c.0.s8 %v341
    %v343 = vlaneseq
    %v344 = vshrl.u32 %v343, 7
    %v345 = vsub.s32 %v342, %v344
    %v346 = vrot.slane %v318, %v345
    %v347 = vcombine.high %v325, %v325
    %v348 = vcombine.high %v332, %v332
    %v349 = vcombine.high %v339, %v339
    %v350 = vcombine.high %v346, %v346
    %v615 = vunpack.c.l.b16 %v23
    %v616 = vunpack.c.h.b16 %v23
    %v617 = vunpack.c.l.b16 %v24
    %v618 = vunpack.c.h.b16 %v24
    %v619 = vunpack.c.l.b16 %v25
    %v620 = vunpack.c.h.b16 %v25
    %v621 = vunpack.c.l.b16 %v26
    %v622 = vunpack.c.h.b16 %v26
    %v623 = vunpack.c.l.b16 %v27
    %v624 = vunpack.c.h.b16 %v27
    %v625 = vunpack.c.l.b16 %v28
    %v626 = vunpack.c.h.b16 %v28
    %v627 = vunpack.c.l.b16 %v29
    %v628 = vunpack.c.h.b16 %v29
    %v629 = vunpack.c.l.b16 %v30
    %v630 = vunpack.c.h.b16 %v30
    %v631 = vunpack.c.l.b16 %v31
    %v632 = vunpack.c.h.b16 %v31
    %v633 = vunpack.c.l.b16 %v32
    %v634 = vunpack.c.h.b16 %v32
    %v635 = vunpack.c.l.b16 %v33
    %v636 = vunpack.c.h.b16 %v33
    %v637 = vunpack.c.l.b16 %v34
    %v638 = vunpack.c.h.b16 %v34
    %v639 = vunpack.c.l.b16 %v35
    %v640 = vunpack.c.h.b16 %v35
    %v641 = vunpack.c.l.b16 %v36
    %v642 = vunpack.c.h.b16 %v36
    %v643 = vunpack.c.l.b16 %v37
    %v644 = vunpack.c.h.b16 %v37
    %v645 = vunpack.c.l.b16 %v38
    %v646 = vunpack.c.h.b16 %v38
    %v647 = vunpack.c.l.b16 %v39
    %v648 = vunpack.c.h.b16 %v39
    %v649 = vunpack.c.l.b16 %v40
    %v650 = vunpack.c.h.b16 %v40
    %v651 = vunpack.c.l.b16 %v41
    %v652 = vunpack.c.h.b16 %v41
    %v653 = vunpack.c.l.b16 %v42
    %v654 = vunpack.c.h.b16 %v42
    %v655 = vunpack.c.l.b16 %v43
    %v656 = vunpack.c.h.b16 %v43
    %v657 = vunpack.c.l.b16 %v44
    %v658 = vunpack.c.h.b16 %v44
    %v659 = vunpack.c.l.b16 %v45
    %v660 = vunpack.c.h.b16 %v45
    %v661 = vunpack.c.l.b16 %v46
    %v662 = vunpack.c.h.b16 %v46
    %v663 = vunpack.c.l.b16 %v47
    %v664 = vunpack.c.h.b16 %v47
    %v665 = vunpack.c.l.b16 %v48
    %v666 = vunpack.c.h.b16 %v48
    %v667 = vunpack.c.l.b16 %v49
    %v668 = vunpack.c.h.b16 %v49
    %v669 = vunpack.c.l.b16 %v50
    %v670 = vunpack.c.h.b16 %v50
    %v671 = vunpack.c.l.b16 %v51
    %v672 = vunpack.c.h.b16 %v51
    %v673 = vunpack.c.l.b16 %v52
    %v674 = vunpack.c.h.b16 %v52
    %v675 = vunpack.c.l.b16 %v53
    %v676 = vunpack.c.h.b16 %v53
    %v677 = vunpack.c.l.b16 %v54
    %v678 = vunpack.c.h.b16 %v54
    %v679 = vunpack.c.l.b16 %v55
    %v680 = vunpack.c.h.b16 %v55
    %v681 = vunpack.c.l.b16 %v56
    %v682 = vunpack.c.h.b16 %v56
    %v683 = vunpack.c.l.b16 %v57
    %v684 = vunpack.c.h.b16 %v57
    %v685 = vunpack.c.l.b16 %v58
    %v686 = vunpack.c.h.b16 %v58
    %v687 = vunpack.c.l.b16 %v59
    %v688 = vunpack.c.h.b16 %v59
    %v689 = vunpack.c.l.b16 %v60
    %v690 = vunpack.c.h.b16 %v60
    %v691 = vunpack.c.l.b16 %v61
    %v692 = vunpack.c.h.b16 %v61
    %v693 = vunpack.c.l.b16 %v62
    %v694 = vunpack.c.h.b16 %v62
    %v695 = vunpack.c.l.b16 %v63
    %v696 = vunpack.c.h.b16 %v63
    %v697 = vunpack.c.l.b16 %v64
    %v698 = vunpack.c.h.b16 %v64
    %v699 = vunpack.c.l.b16 %v65
    %v700 = vunpack.c.h.b16 %v65
    %v701 = vunpack.c.l.b16 %v66
    %v702 = vunpack.c.h.b16 %v66
    %v703 = vunpack.c.l.b16 %v67
    %v704 = vunpack.c.h.b16 %v67
    %v705 = vunpack.c.l.b16 %v68
    %v706 = vunpack.c.h.b16 %v68
    %v707 = vunpack.c.l.b16 %v69
    %v708 = vunpack.c.h.b16 %v69
    %v709 = vunpack.c.l.b16 %v70
    %v710 = vunpack.c.h.b16 %v70
    %v711 = vunpack.c.l.b16 %v71
    %v712 = vunpack.c.h.b16 %v71
    %v713 = vunpack.c.l.b16 %v72
    %v714 = vunpack.c.h.b16 %v72
    %v715 = vunpack.c.l.b16 %v73
    %v716 = vunpack.c.h.b16 %v73
    %v717 = vunpack.c.l.b16 %v74
    %v718 = vunpack.c.h.b16 %v74
    %v719 = vunpack.c.l.b16 %v75
    %v720 = vunpack.c.h.b16 %v75
    %v721 = vunpack.c.l.b16 %v76
    %v722 = vunpack.c.h.b16 %v76
    %v723 = vunpack.c.l.b16 %v77
    %v724 = vunpack.c.h.b16 %v77
    %v725 = vunpack.c.l.b16 %v78
    %v726 = vunpack.c.h.b16 %v78
    %v727 = vunpack.c.l.b16 %v79
    %v728 = vunpack.c.h.b16 %v79
    %v729 = vunpack.c.l.b16 %v80
    %v730 = vunpack.c.h.b16 %v80
    %v731 = vunpack.c.l.b16 %v81
    %v732 = vunpack.c.h.b16 %v81
    %v733 = vunpack.c.l.b16 %v82
    %v734 = vunpack.c.h.b16 %v82
    %v735 = vunpack.c.l.b16 %v83
    %v736 = vunpack.c.h.b16 %v83
    %v737 = vunpack.c.l.b16 %v84
    %v738 = vunpack.c.h.b16 %v84
    %v739 = vunpack.c.l.b16 %v85
    %v740 = vunpack.c.h.b16 %v85
    %v741 = vunpack.c.l.b16 %v86
    %v742 = vunpack.c.h.b16 %v86
    %v743 = vunpack.c.l.b16 %v87
    %v744 = vunpack.c.h.b16 %v87
    %v745 = vunpack.c.l.b16 %v88
    %v746 = vunpack.c.h.b16 %v88
    %v747 = vunpack.c.l.b16 %v89
    %v748 = vunpack.c.h.b16 %v89
    %v749 = vunpack.c.l.b16 %v90
    %v750 = vunpack.c.h.b16 %v90
    %v751 = vunpack.c.l.b16 %v91
    %v752 = vunpack.c.h.b16 %v91
    %v753 = vunpack.c.l.b16 %v92
    %v754 = vunpack.c.h.b16 %v92
    %v755 = vunpack.c.l.b16 %v93
    %v756 = vunpack.c.h.b16 %v93
    %v757 = vunpack.c.l.b16 %v94
    %v758 = vunpack.c.h.b16 %v94
    %v759 = vunpack.c.l.b16 %v95
    %v760 = vunpack.c.h.b16 %v95
    %v761 = vunpack.c.l.b16 %v96
    %v762 = vunpack.c.h.b16 %v96
    %v763 = vunpack.c.l.b16 %v97
    %v764 = vunpack.c.h.b16 %v97
    %v765 = vunpack.c.l.b16 %v98
    %v766 = vunpack.c.h.b16 %v98
    %v767 = vunpack.c.l.b16 %v99
    %v768 = vunpack.c.h.b16 %v99
    %v769 = vunpack.c.l.b16 %v100
    %v770 = vunpack.c.h.b16 %v100
    %v771 = vunpack.c.l.b16 %v101
    %v772 = vunpack.c.h.b16 %v101
    %v773 = vunpack.c.l.b16 %v102
    %v774 = vunpack.c.h.b16 %v102
    %v775 = vunpack.c.l.b16 %v103
    %v776 = vunpack.c.h.b16 %v103
    %v777 = vunpack.c.l.b16 %v104
    %v778 = vunpack.c.h.b16 %v104
    %v779 = vunpack.c.l.b16 %v105
    %v780 = vunpack.c.h.b16 %v105
    %v781 = vunpack.c.l.b16 %v106
    %v782 = vunpack.c.h.b16 %v106
    %v783 = vunpack.c.l.b16 %v107
    %v784 = vunpack.c.h.b16 %v107
    %v785 = vunpack.c.l.b16 %v108
    %v786 = vunpack.c.h.b16 %v108
    %v787 = vunpack.c.l.b16 %v109
    %v788 = vunpack.c.h.b16 %v109
    %v789 = vunpack.c.l.b16 %v110
    %v790 = vunpack.c.h.b16 %v110
    %v791 = vunpack.c.l.b16 %v111
    %v792 = vunpack.c.h.b16 %v111
    %v793 = vunpack.c.l.b16 %v112
    %v794 = vunpack.c.h.b16 %v112
    %v795 = vunpack.c.l.b16 %v113
    %v796 = vunpack.c.h.b16 %v113
    %v797 = vunpack.c.l.b16 %v114
    %v798 = vunpack.c.h.b16 %v114
    %v799 = vunpack.c.l.b16 %v115
    %v800 = vunpack.c.h.b16 %v115
    %v801 = vunpack.c.l.b16 %v116
    %v802 = vunpack.c.h.b16 %v116
    %v803 = vunpack.c.l.b16 %v117
    %v804 = vunpack.c.h.b16 %v117
    %v805 = vunpack.c.l.b16 %v118
    %v806 = vunpack.c.h.b16 %v118
    %v807 = vunpack.c.l.b16 %v119
    %v808 = vunpack.c.h.b16 %v119
    %v809 = vunpack.c.l.b16 %v120
    %v810 = vunpack.c.h.b16 %v120
    %v811 = vunpack.c.l.b16 %v121
    %v812 = vunpack.c.h.b16 %v121
    %v813 = vunpack.c.l.b16 %v122
    %v814 = vunpack.c.h.b16 %v122
    %v815 = vunpack.c.l.b16 %v123
    %v816 = vunpack.c.h.b16 %v123
    %v817 = vunpack.c.l.b16 %v124
    %v818 = vunpack.c.h.b16 %v124
    %v819 = vunpack.c.l.b16 %v125
    %v820 = vunpack.c.h.b16 %v125
    %v821 = vunpack.c.l.b16 %v126
    %v822 = vunpack.c.h.b16 %v126
    %v823 = vunpack.c.l.b16 %v127
    %v824 = vunpack.c.h.b16 %v127
    %v825 = vunpack.c.l.b16 %v128
    %v826 = vunpack.c.h.b16 %v128
    %v827 = vunpack.c.l.b16 %v129
    %v828 = vunpack.c.h.b16 %v129
    %v829 = vunpack.c.l.b16 %v130
    %v830 = vunpack.c.h.b16 %v130
    %v831 = vunpack.c.l.b16 %v131
    %v832 = vunpack.c.h.b16 %v131
    %v833 = vunpack.c.l.b16 %v132
    %v834 = vunpack.c.h.b16 %v132
    %v835 = vunpack.c.l.b16 %v133
    %v836 = vunpack.c.h.b16 %v133
    %v837 = vunpack.c.l.b16 %v134
    %v838 = vunpack.c.h.b16 %v134
    %v839 = vunpack.c.l.b16 %v135
    %v840 = vunpack.c.h.b16 %v135
    %v841 = vunpack.c.l.b16 %v136
    %v842 = vunpack.c.h.b16 %v136
    %v843 = vunpack.c.l.b16 %v137
    %v844 = vunpack.c.h.b16 %v137
    %v845 = vunpack.c.l.b16 %v138
    %v846 = vunpack.c.h.b16 %v138
    %v847 = vunpack.c.l.b16 %v139
    %v848 = vunpack.c.h.b16 %v139
    %v849 = vunpack.c.l.b16 %v140
    %v850 = vunpack.c.h.b16 %v140
    %v851 = vunpack.c.l.b16 %v141
    %v852 = vunpack.c.h.b16 %v141
    %v853 = vunpack.c.l.b16 %v142
    %v854 = vunpack.c.h.b16 %v142
    %v855 = vunpack.c.l.b16 %v143
    %v856 = vunpack.c.h.b16 %v143
    %v857 = vunpack.c.l.b16 %v144
    %v858 = vunpack.c.h.b16 %v144
    %v859 = vunpack.c.l.b16 %v145
    %v860 = vunpack.c.h.b16 %v145
    %v861 = vunpack.c.l.b16 %v146
    %v862 = vunpack.c.h.b16 %v146
    %v863 = vunpack.c.l.b16 %v147
    %v864 = vunpack.c.h.b16 %v147
    %v865 = vunpack.c.l.b16 %v148
    %v866 = vunpack.c.h.b16 %v148
    %v867 = vunpack.c.l.b16 %v149
    %v868 = vunpack.c.h.b16 %v149
    %v869 = vunpack.c.l.b16 %v150
    %v870 = vunpack.c.h.b16 %v150
    %v871 = vunpack.c.l.b16 %v151
    %v872 = vunpack.c.h.b16 %v151
    %v873 = vunpack.c.l.b16 %v152
    %v874 = vunpack.c.h.b16 %v152
    %v875 = vunpack.c.l.b16 %v153
    %v876 = vunpack.c.h.b16 %v153
    %v877 = vunpack.c.l.b16 %v154
    %v878 = vunpack.c.h.b16 %v154
    %v879 = vunpack.c.l.b16 %v155
    %v880 = vunpack.c.h.b16 %v155
    %v881 = vunpack.c.l.b16 %v156
    %v882 = vunpack.c.h.b16 %v156
    %v883 = vunpack.c.l.b16 %v157
    %v884 = vunpack.c.h.b16 %v157
    %v885 = vunpack.c.l.b16 %v158
    %v886 = vunpack.c.h.b16 %v158
    %v887 = vunpack.c.l.b16 %v159
    %v888 = vunpack.c.h.b16 %v159
    %v889 = vunpack.c.l.b16 %v160
    %v890 = vunpack.c.h.b16 %v160
    %v891 = vunpack.c.l.b16 %v161
    %v892 = vunpack.c.h.b16 %v161
    %v893 = vunpack.c.l.b16 %v162
    %v894 = vunpack.c.h.b16 %v162
    %v895 = vunpack.c.l.b16 %v163
    %v896 = vunpack.c.h.b16 %v163
    %v897 = vunpack.c.l.b16 %v164
    %v898 = vunpack.c.h.b16 %v164
    %v899 = vunpack.c.l.b16 %v165
    %v900 = vunpack.c.h.b16 %v165
    %v901 = vunpack.c.l.b16 %v166
    %v902 = vunpack.c.h.b16 %v166
    %v903 = vunpack.c.l.b16 %v167
    %v904 = vunpack.c.h.b16 %v167
    %v905 = vunpack.c.l.b16 %v168
    %v906 = vunpack.c.h.b16 %v168
    %v907 = vunpack.c.l.b16 %v169
    %v908 = vunpack.c.h.b16 %v169
    %v909 = vunpack.c.l.b16 %v170
    %v910 = vunpack.c.h.b16 %v170
    %v911 = vunpack.c.l.b16 %v171
    %v912 = vunpack.c.h.b16 %v171
    %v913 = vunpack.c.l.b16 %v172
    %v914 = vunpack.c.h.b16 %v172
    %v915 = vunpack.c.l.b16 %v173
    %v916 = vunpack.c.h.b16 %v173
    %v917 = vunpack.c.l.b16 %v174
    %v918 = vunpack.c.h.b16 %v174
    %v919 = vunpack.c.l.b16 %v175
    %v920 = vunpack.c.h.b16 %v175
    %v921 = vunpack.c.l.b16 %v176
    %v922 = vunpack.c.h.b16 %v176
    %v923 = vunpack.c.l.b16 %v177
    %v924 = vunpack.c.h.b16 %v177
    %v925 = vunpack.c.l.b16 %v178
    %v926 = vunpack.c.h.b16 %v178
    %v927 = vunpack.c.l.b16 %v179
    %v928 = vunpack.c.h.b16 %v179
    %v929 = vunpack.c.l.b16 %v180
    %v930 = vunpack.c.h.b16 %v180
    %v931 = vunpack.c.l.b16 %v181
    %v932 = vunpack.c.h.b16 %v181
    %v933 = vunpack.c.l.b16 %v182
    %v934 = vunpack.c.h.b16 %v182
    %v935 = vunpack.c.l.b16 %v183
    %v936 = vunpack.c.h.b16 %v183
    %v937 = vunpack.c.l.b16 %v184
    %v938 = vunpack.c.h.b16 %v184
    %v939 = vunpack.c.l.b16 %v185
    %v940 = vunpack.c.h.b16 %v185
    %v941 = vunpack.c.l.b16 %v186
    %v942 = vunpack.c.h.b16 %v186
    %v943 = vunpack.c.l.b16 %v187
    %v944 = vunpack.c.h.b16 %v187
    %v945 = vunpack.c.l.b16 %v188
    %v946 = vunpack.c.h.b16 %v188
    %v947 = vunpack.c.l.b16 %v189
    %v948 = vunpack.c.h.b16 %v189
    %v949 = vunpack.c.l.b16 %v190
    %v950 = vunpack.c.h.b16 %v190
    %v951 = vunpack.c.l.b16 %v191
    %v952 = vunpack.c.h.b16 %v191
    %v953 = vunpack.c.l.b16 %v192
    %v954 = vunpack.c.h.b16 %v192
    %v955 = vunpack.c.l.b16 %v193
    %v956 = vunpack.c.h.b16 %v193
    %v957 = vunpack.c.l.b16 %v194
    %v958 = vunpack.c.h.b16 %v194
    %v959 = vunpack.c.l.b16 %v195
    %v960 = vunpack.c.h.b16 %v195
    %v961 = vunpack.c.l.b16 %v196
    %v962 = vunpack.c.h.b16 %v196
    %v963 = vunpack.c.l.b16 %v197
    %v964 = vunpack.c.h.b16 %v197
    %v965 = vunpack.c.l.b16 %v198
    %v966 = vunpack.c.h.b16 %v198
    %v967 = vunpack.c.l.b16 %v199
    %v968 = vunpack.c.h.b16 %v199
    %v969 = vunpack.c.l.b16 %v200
    %v970 = vunpack.c.h.b16 %v200
    %v971 = vunpack.c.l.b16 %v201
    %v972 = vunpack.c.h.b16 %v201
    %v973 = vunpack.c.l.b16 %v202
    %v974 = vunpack.c.h.b16 %v202
    %v975 = vunpack.c.l.b16 %v203
    %v976 = vunpack.c.h.b16 %v203
    %v977 = vunpack.c.l.b16 %v204
    %v978 = vunpack.c.h.b16 %v204
    %v979 = vunpack.c.l.b16 %v205
    %v980 = vunpack.c.h.b16 %v205
    %v981 = vunpack.c.l.b16 %v206
    %v982 = vunpack.c.h.b16 %v206
    %v983 = vunpack.c.l.b16 %v207
    %v984 = vunpack.c.h.b16 %v207
    %v985 = vunpack.c.l.b16 %v208
    %v986 = vunpack.c.h.b16 %v208
    %v987 = vunpack.c.l.b16 %v209
    %v988 = vunpack.c.h.b16 %v209
    %v989 = vunpack.c.l.b16 %v210
    %v990 = vunpack.c.h.b16 %v210
    %v991 = vunpack.c.l.b16 %v211
    %v992 = vunpack.c.h.b16 %v211
    %v993 = vunpack.c.l.b16 %v212
    %v994 = vunpack.c.h.b16 %v212
    %v995 = vunpack.c.l.b16 %v213
    %v996 = vunpack.c.h.b16 %v213
    %v997 = vunpack.c.l.b16 %v214
    %v998 = vunpack.c.h.b16 %v214
    %v999 = vunpack.c.l.b16 %v215
    %v1000 = vunpack.c.h.b16 %v215
    %v1001 = vunpack.c.l.b16 %v216
    %v1002 = vunpack.c.h.b16 %v216
    %v1003 = vunpack.c.l.b16 %v217
    %v1004 = vunpack.c.h.b16 %v217
    %v1005 = vunpack.c.l.b16 %v218
    %v1006 = vunpack.c.h.b16 %v218
    %v1007 = vunpack.c.l.b16 %v219
    %v1008 = vunpack.c.h.b16 %v219
    %v1009 = vunpack.c.l.b16 %v220
    %v1010 = vunpack.c.h.b16 %v220
    %v1011 = vunpack.c.l.b16 %v221
    %v1012 = vunpack.c.h.b16 %v221
    %v1013 = vunpack.c.l.b16 %v222
    %v1014 = vunpack.c.h.b16 %v222
    %v1015 = vunpack.c.l.b16 %v223
    %v1016 = vunpack.c.h.b16 %v223
    %v1017 = vunpack.c.l.b16 %v224
    %v1018 = vunpack.c.h.b16 %v224
    %v1019 = vunpack.c.l.b16 %v225
    %v1020 = vunpack.c.h.b16 %v225
    %v1021 = vunpack.c.l.b16 %v226
    %v1022 = vunpack.c.h.b16 %v226
    %v1023 = vunpack.c.l.b16 %v227
    %v1024 = vunpack.c.h.b16 %v227
    %v1025 = vunpack.c.l.b16 %v228
    %v1026 = vunpack.c.h.b16 %v228
    %v1027 = vunpack.c.l.b16 %v229
    %v1028 = vunpack.c.h.b16 %v229
    %v1029 = vunpack.c.l.b16 %v230
    %v1030 = vunpack.c.h.b16 %v230
    %v1031 = vunpack.c.l.b16 %v231
    %v1032 = vunpack.c.h.b16 %v231
    %v1033 = vunpack.c.l.b16 %v232
    %v1034 = vunpack.c.h.b16 %v232
    %v1035 = vunpack.c.l.b16 %v233
    %v1036 = vunpack.c.h.b16 %v233
    %v1037 = vunpack.c.l.b16 %v234
    %v1038 = vunpack.c.h.b16 %v234
    %v1039 = vunpack.c.l.b16 %v235
    %v1040 = vunpack.c.h.b16 %v235
    %v1041 = vunpack.c.l.b16 %v236
    %v1042 = vunpack.c.h.b16 %v236
    %v1043 = vunpack.c.l.b16 %v237
    %v1044 = vunpack.c.h.b16 %v237
    %v1045 = vunpack.c.l.b16 %v238
    %v1046 = vunpack.c.h.b16 %v238
    %v1047 = vunpack.c.l.b16 %v239
    %v1048 = vunpack.c.h.b16 %v239
    %v1049 = vunpack.c.l.b16 %v240
    %v1050 = vunpack.c.h.b16 %v240
    %v1051 = vunpack.c.l.b16 %v241
    %v1052 = vunpack.c.h.b16 %v241
    %v1053 = vunpack.c.l.b16 %v242
    %v1054 = vunpack.c.h.b16 %v242
    %v1055 = vunpack.c.l.b16 %v243
    %v1056 = vunpack.c.h.b16 %v243
    %v1057 = vunpack.c.l.b16 %v244
    %v1058 = vunpack.c.h.b16 %v244
    %v1059 = vunpack.c.l.b16 %v245
    %v1060 = vunpack.c.h.b16 %v245
    %v1061 = vunpack.c.l.b16 %v246
    %v1062 = vunpack.c.h.b16 %v246
    %v1063 = vunpack.c.l.b16 %v247
    %v1064 = vunpack.c.h.b16 %v247
    %v1065 = vunpack.c.l.b16 %v248
    %v1066 = vunpack.c.h.b16 %v248
    %v1067 = vunpack.c.l.b16 %v249
    %v1068 = vunpack.c.h.b16 %v249
    %v1069 = vunpack.c.l.b16 %v250
    %v1070 = vunpack.c.h.b16 %v250
    %v1071 = vunpack.c.l.b16 %v251
    %v1072 = vunpack.c.h.b16 %v251
    %v1073 = vunpack.c.l.b16 %v252
    %v1074 = vunpack.c.h.b16 %v252
    %v1075 = vunpack.c.l.b16 %v253
    %v1076 = vunpack.c.h.b16 %v253
    %v1077 = vunpack.c.l.b16 %v254
    %v1078 = vunpack.c.h.b16 %v254
    %v1079 = vunpack.c.l.b16 %v255
    %v1080 = vunpack.c.h.b16 %v255
    %v1081 = vunpack.c.l.b16 %v256
    %v1082 = vunpack.c.h.b16 %v256
    %v1083 = vunpack.c.l.b16 %v257
    %v1084 = vunpack.c.h.b16 %v257
    %v1085 = vunpack.c.l.b16 %v258
    %v1086 = vunpack.c.h.b16 %v258
    %v1087 = vunpack.c.l.b16 %v259
    %v1088 = vunpack.c.h.b16 %v259
    %v1089 = vunpack.c.l.b16 %v260
    %v1090 = vunpack.c.h.b16 %v260
    %v1091 = vunpack.c.l.b16 %v261
    %v1092 = vunpack.c.h.b16 %v261
    %v1093 = vunpack.c.l.b16 %v262
    %v1094 = vunpack.c.h.b16 %v262
    %v1095 = vunpack.c.l.b16 %v263
    %v1096 = vunpack.c.h.b16 %v263
    %v1097 = vunpack.c.l.b16 %v264
    %v1098 = vunpack.c.h.b16 %v264
    %v1099 = vunpack.c.l.b16 %v265
    %v1100 = vunpack.c.h.b16 %v265
    %v1101 = vunpack.c.l.b16 %v266
    %v1102 = vunpack.c.h.b16 %v266
    %v1103 = vunpack.c.l.b16 %v267
    %v1104 = vunpack.c.h.b16 %v267
    %v1105 = vunpack.c.l.b16 %v268
    %v1106 = vunpack.c.h.b16 %v268
    %v1107 = vunpack.c.l.b16 %v269
    %v1108 = vunpack.c.h.b16 %v269
    %v1109 = vunpack.c.l.b16 %v270
    %v1110 = vunpack.c.h.b16 %v270
    %v1111 = vunpack.c.l.b16 %v271
    %v1112 = vunpack.c.h.b16 %v271
    %v1113 = vunpack.c.l.b16 %v272
    %v1114 = vunpack.c.h.b16 %v272
    %v1115 = vunpack.c.l.b16 %v273
    %v1116 = vunpack.c.h.b16 %v273
    %v1117 = vunpack.c.l.b16 %v274
    %v1118 = vunpack.c.h.b16 %v274
    %v1119 = vunpack.c.l.b16 %v275
    %v1120 = vunpack.c.h.b16 %v275
    %v1121 = vunpack.c.l.b16 %v276
    %v1122 = vunpack.c.h.b16 %v276
    %v1123 = vunpack.c.l.b16 %v277
    %v1124 = vunpack.c.h.b16 %v277
    %v1125 = vunpack.c.l.b16 %v278
    %v1126 = vunpack.c.h.b16 %v278
    %v1127 = vpack.c.b16 %v619, %v615
    %v1128 = vpack.c.b16 %v620, %v616
    %v1129 = vpack.c.b16 %v621, %v617
    %v1130 = vpack.c.b16 %v622, %v618
    %v1131 = vpack.c.b16 %v627, %v623
    %v1132 = vpack.c.b16 %v628, %v624
    %v1133 = vpack.c.b16 %v629, %v625
    %v1134 = vpack.c.b16 %v630, %v626
    %v1135 = vpack.c.b16 %v635, %v631
    %v1136 = vpack.c.b16 %v636, %v632
    %v1137 = vpack.c.b16 %v637, %v633
    %v1138 = vpack.c.b16 %v638, %v634
    %v1139 = vpack.c.b16 %v643, %v639
    %v1140 = vpack.c.b16 %v644, %v640
    %v1141 = vpack.c.b16 %v645, %v641
    %v1142 = vpack.c.b16 %v646, %v642
    %v1143 = vpack.c.b16 %v651, %v647
    %v1144 = vpack.c.b16 %v652, %v648
    %v1145 = vpack.c.b16 %v653, %v649
    %v1146 = vpack.c.b16 %v654, %v650
    %v1147 = vpack.c.b16 %v659, %v655
    %v1148 = vpack.c.b16 %v660, %v656
    %v1149 = vpack.c.b16 %v661, %v657
    %v1150 = vpack.c.b16 %v662, %v658
    %v1151 = vpack.c.b16 %v667, %v663
    %v1152 = vpack.c.b16 %v668, %v664
    %v1153 = vpack.c.b16 %v669, %v665
    %v1154 = vpack.c.b16 %v670, %v666
    %v1155 = vpack.c.b16 %v675, %v671
    %v1156 = vpack.c.b16 %v676, %v672
    %v1157 = vpack.c.b16 %v677, %v673
    %v1158 = vpack.c.b16 %v678, %v674
    %v1159 = vpack.c.b16 %v683, %v679
    %v1160 = vpack.c.b16 %v684, %v680
    %v1161 = vpack.c.b16 %v685, %v681
    %v1162 = vpack.c.b16 %v686, %v682
    %v1163 = vpack.c.b16 %v691, %v687
    %v1164 = vpack.c.b16 %v692, %v688
    %v1165 = vpack.c.b16 %v693, %v689
    %v1166 = vpack.c.b16 %v694, %v690
    %v1167 = vpack.c.b16 %v699, %v695
    %v1168 = vpack.c.b16 %v700, %v696
    %v1169 = vpack.c.b16 %v701, %v697
    %v1170 = vpack.c.b16 %v702, %v698
    %v1171 = vpack.c.b16 %v707, %v703
    %v1172 = vpack.c.b16 %v708, %v704
    %v1173 = vpack.c.b16 %v709, %v705
    %v1174 = vpack.c.b16 %v710, %v706
    %v1175 = vpack.c.b16 %v715, %v711
    %v1176 = vpack.c.b16 %v716, %v712
    %v1177 = vpack.c.b16 %v717, %v713
    %v1178 = vpack.c.b16 %v718, %v714
    %v1179 = vpack.c.b16 %v723, %v719
    %v1180 = vpack.c.b16 %v724, %v720
    %v1181 = vpack.c.b16 %v725, %v721
    %v1182 = vpack.c.b16 %v726, %v722
    %v1183 = vpack.c.b16 %v731, %v727
    %v1184 = vpack.c.b16 %v732, %v728
    %v1185 = vpack.c.b16 %v733, %v729
    %v1186 = vpack.c.b16 %v734, %v730
    %v1187 = vpack.c.b16 %v739, %v735
    %v1188 = vpack.c.b16 %v740, %v736
    %v1189 = vpack.c.b16 %v741, %v737
    %v1190 = vpack.c.b16 %v742, %v738
    %v1191 = vpack.c.b16 %v747, %v743
    %v1192 = vpack.c.b16 %v748, %v744
    %v1193 = vpack.c.b16 %v749, %v745
    %v1194 = vpack.c.b16 %v750, %v746
    %v1195 = vpack.c.b16 %v755, %v751
    %v1196 = vpack.c.b16 %v756, %v752
    %v1197 = vpack.c.b16 %v757, %v753
    %v1198 = vpack.c.b16 %v758, %v754
    %v1199 = vpack.c.b16 %v763, %v759
    %v1200 = vpack.c.b16 %v764, %v760
    %v1201 = vpack.c.b16 %v765, %v761
    %v1202 = vpack.c.b16 %v766, %v762
    %v1203 = vpack.c.b16 %v771, %v767
    %v1204 = vpack.c.b16 %v772, %v768
    %v1205 = vpack.c.b16 %v773, %v769
    %v1206 = vpack.c.b16 %v774, %v770
    %v1207 = vpack.c.b16 %v779, %v775
    %v1208 = vpack.c.b16 %v780, %v776
    %v1209 = vpack.c.b16 %v781, %v777
    %v1210 = vpack.c.b16 %v782, %v778
    %v1211 = vpack.c.b16 %v787, %v783
    %v1212 = vpack.c.b16 %v788, %v784
    %v1213 = vpack.c.b16 %v789, %v785
    %v1214 = vpack.c.b16 %v790, %v786
    %v1215 = vpack.c.b16 %v795, %v791
    %v1216 = vpack.c.b16 %v796, %v792
    %v1217 = vpack.c.b16 %v797, %v793
    %v1218 = vpack.c.b16 %v798, %v794
    %v1219 = vpack.c.b16 %v803, %v799
    %v1220 = vpack.c.b16 %v804, %v800
    %v1221 = vpack.c.b16 %v805, %v801
    %v1222 = vpack.c.b16 %v806, %v802
    %v1223 = vpack.c.b16 %v811, %v807
    %v1224 = vpack.c.b16 %v812, %v808
    %v1225 = vpack.c.b16 %v813, %v809
    %v1226 = vpack.c.b16 %v814, %v810
    %v1227 = vpack.c.b16 %v819, %v815
    %v1228 = vpack.c.b16 %v820, %v816
    %v1229 = vpack.c.b16 %v821, %v817
    %v1230 = vpack.c.b16 %v822, %v818
    %v1231 = vpack.c.b16 %v827, %v823
    %v1232 = vpack.c.b16 %v828, %v824
    %v1233 = vpack.c.b16 %v829, %v825
    %v1234 = vpack.c.b16 %v830, %v826
    %v1235 = vpack.c.b16 %v835, %v831
    %v1236 = vpack.c.b16 %v836, %v832
    %v1237 = vpack.c.b16 %v837, %v833
    %v1238 = vpack.c.b16 %v838, %v834
    %v1239 = vpack.c.b16 %v843, %v839
    %v1240 = vpack.c.b16 %v844, %v840
    %v1241 = vpack.c.b16 %v845, %v841
    %v1242 = vpack.c.b16 %v846, %v842
    %v1243 = vpack.c.b16 %v851, %v847
    %v1244 = vpack.c.b16 %v852, %v848
    %v1245 = vpack.c.b16 %v853, %v849
    %v1246 = vpack.c.b16 %v854, %v850
    %v1247 = vpack.c.b16 %v859, %v855
    %v1248 = vpack.c.b16 %v860, %v856
    %v1249 = vpack.c.b16 %v861, %v857
    %v1250 = vpack.c.b16 %v862, %v858
    %v1251 = vpack.c.b16 %v867, %v863
    %v1252 = vpack.c.b16 %v868, %v864
    %v1253 = vpack.c.b16 %v869, %v865
    %v1254 = vpack.c.b16 %v870, %v866
    %v1255 = vpack.c.b16 %v875, %v871
    %v1256 = vpack.c.b16 %v876, %v872
    %v1257 = vpack.c.b16 %v877, %v873
    %v1258 = vpack.c.b16 %v878, %v874
    %v1259 = vpack.c.b16 %v883, %v879
    %v1260 = vpack.c.b16 %v884, %v880
    %v1261 = vpack.c.b16 %v885, %v881
    %v1262 = vpack.c.b16 %v886, %v882
    %v1263 = vpack.c.b16 %v891, %v887
    %v1264 = vpack.c.b16 %v892, %v888
    %v1265 = vpack.c.b16 %v893, %v889
    %v1266 = vpack.c.b16 %v894, %v890
    %v1267 = vpack.c.b16 %v899, %v895
    %v1268 = vpack.c.b16 %v900, %v896
    %v1269 = vpack.c.b16 %v901, %v897
    %v1270 = vpack.c.b16 %v902, %v898
    %v1271 = vpack.c.b16 %v907, %v903
    %v1272 = vpack.c.b16 %v908, %v904
    %v1273 = vpack.c.b16 %v909, %v905
    %v1274 = vpack.c.b16 %v910, %v906
    %v1275 = vpack.c.b16 %v915, %v911
    %v1276 = vpack.c.b16 %v916, %v912
    %v1277 = vpack.c.b16 %v917, %v913
    %v1278 = vpack.c.b16 %v918, %v914
    %v1279 = vpack.c.b16 %v923, %v919
    %v1280 = vpack.c.b16 %v924, %v920
    %v1281 = vpack.c.b16 %v925, %v921
    %v1282 = vpack.c.b16 %v926, %v922
    %v1283 = vpack.c.b16 %v931, %v927
    %v1284 = vpack.c.b16 %v932, %v928
    %v1285 = vpack.c.b16 %v933, %v929
    %v1286 = vpack.c.b16 %v934, %v930
    %v1287 = vpack.c.b16 %v939, %v935
    %v1288 = vpack.c.b16 %v940, %v936
    %v1289 = vpack.c.b16 %v941, %v937
    %v1290 = vpack.c.b16 %v942, %v938
    %v1291 = vpack.c.b16 %v947, %v943
    %v1292 = vpack.c.b16 %v948, %v944
    %v1293 = vpack.c.b16 %v949, %v945
    %v1294 = vpack.c.b16 %v950, %v946
    %v1295 = vpack.c.b16 %v955, %v951
    %v1296 = vpack.c.b16 %v956, %v952
    %v1297 = vpack.c.b16 %v957, %v953
    %v1298 = vpack.c.b16 %v958, %v954
    %v1299 = vpack.c.b16 %v963, %v959
    %v1300 = vpack.c.b16 %v964, %v960
    %v1301 = vpack.c.b16 %v965, %v961
    %v1302 = vpack.c.b16 %v966, %v962
    %v1303 = vpack.c.b16 %v971, %v967
    %v1304 = vpack.c.b16 %v972, %v968
    %v1305 = vpack.c.b16 %v973, %v969
    %v1306 = vpack.c.b16 %v974, %v970
    %v1307 = vpack.c.b16 %v979, %v975
    %v1308 = vpack.c.b16 %v980, %v976
    %v1309 = vpack.c.b16 %v981, %v977
    %v1310 = vpack.c.b16 %v982, %v978
    %v1311 = vpack.c.b16 %v987, %v983
    %v1312 = vpack.c.b16 %v988, %v984
    %v1313 = vpack.c.b16 %v989, %v985
    %v1314 = vpack.c.b16 %v990, %v986
    %v1315 = vpack.c.b16 %v995, %v991
    %v1316 = vpack.c.b16 %v996, %v992
    %v1317 = vpack.c.b16 %v997, %v993
    %v1318 = vpack.c.b16 %v998, %v994
    %v1319 = vpack.c.b16 %v1003, %v999
    %v1320 = vpack.c.b16 %v1004, %v1000
    %v1321 = vpack.c.b16 %v1005, %v1001
    %v1322 = vpack.c.b16 %v1006, %v1002
    %v1323 = vpack.c.b16 %v1011, %v1007
    %v1324 = vpack.c.b16 %v1012, %v1008
    %v1325 = vpack.c.b16 %v1013, %v1009
    %v1326 = vpack.c.b16 %v1014, %v1010
    %v1327 = vpack.c.b16 %v1019, %v1015
    %v1328 = vpack.c.b16 %v1020, %v1016
    %v1329 = vpack.c.b16 %v1021, %v1017
    %v1330 = vpack.c.b16 %v1022, %v1018
    %v1331 = vpack.c.b16 %v1027, %v1023
    %v1332 = vpack.c.b16 %v1028, %v1024
    %v1333 = vpack.c.b16 %v1029, %v1025
    %v1334 = vpack.c.b16 %v1030, %v1026
    %v1335 = vpack.c.b16 %v1035, %v1031
    %v1336 = vpack.c.b16 %v1036, %v1032
    %v1337 = vpack.c.b16 %v1037, %v1033
    %v1338 = vpack.c.b16 %v1038, %v1034
    %v1339 = vpack.c.b16 %v1043, %v1039
    %v1340 = vpack.c.b16 %v1044, %v1040
    %v1341 = vpack.c.b16 %v1045, %v1041
    %v1342 = vpack.c.b16 %v1046, %v1042
    %v1343 = vpack.c.b16 %v1051, %v1047
    %v1344 = vpack.c.b16 %v1052, %v1048
    %v1345 = vpack.c.b16 %v1053, %v1049
    %v1346 = vpack.c.b16 %v1054, %v1050
    %v1347 = vpack.c.b16 %v1059, %v1055
    %v1348 = vpack.c.b16 %v1060, %v1056
    %v1349 = vpack.c.b16 %v1061, %v1057
    %v1350 = vpack.c.b16 %v1062, %v1058
    %v1351 = vpack.c.b16 %v1067, %v1063
    %v1352 = vpack.c.b16 %v1068, %v1064
    %v1353 = vpack.c.b16 %v1069, %v1065
    %v1354 = vpack.c.b16 %v1070, %v1066
    %v1355 = vpack.c.b16 %v1075, %v1071
    %v1356 = vpack.c.b16 %v1076, %v1072
    %v1357 = vpack.c.b16 %v1077, %v1073
    %v1358 = vpack.c.b16 %v1078, %v1074
    %v1359 = vpack.c.b16 %v1083, %v1079
    %v1360 = vpack.c.b16 %v1084, %v1080
    %v1361 = vpack.c.b16 %v1085, %v1081
    %v1362 = vpack.c.b16 %v1086, %v1082
    %v1363 = vpack.c.b16 %v1091, %v1087
    %v1364 = vpack.c.b16 %v1092, %v1088
    %v1365 = vpack.c.b16 %v1093, %v1089
    %v1366 = vpack.c.b16 %v1094, %v1090
    %v1367 = vpack.c.b16 %v1099, %v1095
    %v1368 = vpack.c.b16 %v1100, %v1096
    %v1369 = vpack.c.b16 %v1101, %v1097
    %v1370 = vpack.c.b16 %v1102, %v1098
    %v1371 = vpack.c.b16 %v1107, %v1103
    %v1372 = vpack.c.b16 %v1108, %v1104
    %v1373 = vpack.c.b16 %v1109, %v1105
    %v1374 = vpack.c.b16 %v1110, %v1106
    %v1375 = vpack.c.b16 %v1115, %v1111
    %v1376 = vpack.c.b16 %v1116, %v1112
    %v1377 = vpack.c.b16 %v1117, %v1113
    %v1378 = vpack.c.b16 %v1118, %v1114
    %v1379 = vpack.c.b16 %v1123, %v1119
    %v1380 = vpack.c.b16 %v1124, %v1120
    %v1381 = vpack.c.b16 %v1125, %v1121
    %v1382 = vpack.c.b16 %v1126, %v1122
    %1639 = vmatprep.subr.bf16.mxu0 %v1128
    %1640 = vmatpush1.bf16.msra.mxu0 %v1127
    %1641 = vmatprep.subr.bf16.mxu0 %v1132
    %1642 = vmatpush1.bf16.msra.mxu0 %v1131
    %1643 = vmatprep.subr.bf16.mxu0 %v1136
    %1644 = vmatpush1.bf16.msra.mxu0 %v1135
    %1645 = vmatprep.subr.bf16.mxu0 %v1140
    %1646 = vmatpush1.bf16.msra.mxu0 %v1139
    %1647 = vmatprep.subr.bf16.mxu0 %v1144
    %1648 = vmatpush1.bf16.msra.mxu0 %v1143
    %1649 = vmatprep.subr.bf16.mxu0 %v1148
    %1650 = vmatpush1.bf16.msra.mxu0 %v1147
    %1651 = vmatprep.subr.bf16.mxu0 %v1152
    %1652 = vmatpush1.bf16.msra.mxu0 %v1151
    %1653 = vmatprep.subr.bf16.mxu0 %v1156
    %1654 = vmatpush1.bf16.msra.mxu0 %v1155
    %1655 = vmatprep.subr.bf16.mxu0 %v1160
    %1656 = vmatpush1.bf16.msra.mxu0 %v1159
    %1657 = vmatprep.subr.bf16.mxu0 %v1164
    %1658 = vmatpush1.bf16.msra.mxu0 %v1163
    %1659 = vmatprep.subr.bf16.mxu0 %v1168
    %1660 = vmatpush1.bf16.msra.mxu0 %v1167
    %1661 = vmatprep.subr.bf16.mxu0 %v1172
    %1662 = vmatpush1.bf16.msra.mxu0 %v1171
    %1663 = vmatprep.subr.bf16.mxu0 %v1176
    %1664 = vmatpush1.bf16.msra.mxu0 %v1175
    %1665 = vmatprep.subr.bf16.mxu0 %v1180
    %1666 = vmatpush1.bf16.msra.mxu0 %v1179
    %1667 = vmatprep.subr.bf16.mxu0 %v1184
    %1668 = vmatpush1.bf16.msra.mxu0 %v1183
    %1669 = vmatprep.subr.bf16.mxu0 %v1188
    %1670 = vmatpush1.bf16.msra.mxu0 %v1187
    %1671 = vmatprep.mubr.bf16.mxu0 %v339
    %1672 = vmatmul.mubr.bf16.gmra.mrb[0].mxu0 %v325
    %v1673 = vpop.f32.mrb[0].mxu0
    %v1674 = vadd.f32 %v284, %v1673
    %v1675 = vpop.f32.mrb[0].mxu0
    %v1676 = vadd.f32 %v288, %v1675
    %v1677 = vpop.f32.mrb[0].mxu0
    %v1678 = vpop.f32.mrb[0].mxu0
    %1679 = vdwg.mxu0
    %1680 = vmatprep.subr.bf16.mxu0 %v1192
    %1681 = vmatpush1.bf16.msra.mxu0 %v1191
    %1682 = vmatprep.subr.bf16.mxu0 %v1196
    %1683 = vmatpush1.bf16.msra.mxu0 %v1195
    %1684 = vmatprep.subr.bf16.mxu0 %v1200
    %1685 = vmatpush1.bf16.msra.mxu0 %v1199
    %1686 = vmatprep.subr.bf16.mxu0 %v1204
    %1687 = vmatpush1.bf16.msra.mxu0 %v1203
    %1688 = vmatprep.subr.bf16.mxu0 %v1208
    %1689 = vmatpush1.bf16.msra.mxu0 %v1207
    %1690 = vmatprep.subr.bf16.mxu0 %v1212
    %1691 = vmatpush1.bf16.msra.mxu0 %v1211
    %1692 = vmatprep.subr.bf16.mxu0 %v1216
    %1693 = vmatpush1.bf16.msra.mxu0 %v1215
    %1694 = vmatprep.subr.bf16.mxu0 %v1220
    %1695 = vmatpush1.bf16.msra.mxu0 %v1219
    %1696 = vmatprep.subr.bf16.mxu0 %v1224
    %1697 = vmatpush1.bf16.msra.mxu0 %v1223
    %1698 = vmatprep.subr.bf16.mxu0 %v1228
    %1699 = vmatpush1.bf16.msra.mxu0 %v1227
    %1700 = vmatprep.subr.bf16.mxu0 %v1232
    %1701 = vmatpush1.bf16.msra.mxu0 %v1231
    %1702 = vmatprep.subr.bf16.mxu0 %v1236
    %1703 = vmatpush1.bf16.msra.mxu0 %v1235
    %1704 = vmatprep.subr.bf16.mxu0 %v1240
    %1705 = vmatpush1.bf16.msra.mxu0 %v1239
    %1706 = vmatprep.subr.bf16.mxu0 %v1244
    %1707 = vmatpush1.bf16.msra.mxu0 %v1243
    %1708 = vmatprep.subr.bf16.mxu0 %v1248
    %1709 = vmatpush1.bf16.msra.mxu0 %v1247
    %1710 = vmatprep.subr.bf16.mxu0 %v1252
    %1711 = vmatpush1.bf16.msra.mxu0 %v1251
    %1712 = vmatprep.mubr.bf16.mxu0 %v349
    %1713 = vmatmul.mubr.bf16.gmra.mrb[0].mxu0 %v347
    %v1714 = vpop.f32.mrb[0].mxu0
    %v1715 = vadd.f32 %v1674, %v1714
    %v1716 = vpop.f32.mrb[0].mxu0
    %v1717 = vadd.f32 %v1676, %v1716
    %v1718 = vpop.f32.mrb[0].mxu0
    %v1719 = vpop.f32.mrb[0].mxu0
    %1720 = vdwg.mxu0
    %1721 = vmatprep.subr.bf16.mxu0 %v1256
    %1722 = vmatpush1.bf16.msra.mxu0 %v1255
    %1723 = vmatprep.subr.bf16.mxu0 %v1260
    %1724 = vmatpush1.bf16.msra.mxu0 %v1259
    %1725 = vmatprep.subr.bf16.mxu0 %v1264
    %1726 = vmatpush1.bf16.msra.mxu0 %v1263
    %1727 = vmatprep.subr.bf16.mxu0 %v1268
    %1728 = vmatpush1.bf16.msra.mxu0 %v1267
    %1729 = vmatprep.subr.bf16.mxu0 %v1272
    %1730 = vmatpush1.bf16.msra.mxu0 %v1271
    %1731 = vmatprep.subr.bf16.mxu0 %v1276
    %1732 = vmatpush1.bf16.msra.mxu0 %v1275
    %1733 = vmatprep.subr.bf16.mxu0 %v1280
    %1734 = vmatpush1.bf16.msra.mxu0 %v1279
    %1735 = vmatprep.subr.bf16.mxu0 %v1284
    %1736 = vmatpush1.bf16.msra.mxu0 %v1283
    %1737 = vmatprep.subr.bf16.mxu0 %v1288
    %1738 = vmatpush1.bf16.msra.mxu0 %v1287
    %1739 = vmatprep.subr.bf16.mxu0 %v1292
    %1740 = vmatpush1.bf16.msra.mxu0 %v1291
    %1741 = vmatprep.subr.bf16.mxu0 %v1296
    %1742 = vmatpush1.bf16.msra.mxu0 %v1295
    %1743 = vmatprep.subr.bf16.mxu0 %v1300
    %1744 = vmatpush1.bf16.msra.mxu0 %v1299
    %1745 = vmatprep.subr.bf16.mxu0 %v1304
    %1746 = vmatpush1.bf16.msra.mxu0 %v1303
    %1747 = vmatprep.subr.bf16.mxu0 %v1308
    %1748 = vmatpush1.bf16.msra.mxu0 %v1307
    %1749 = vmatprep.subr.bf16.mxu0 %v1312
    %1750 = vmatpush1.bf16.msra.mxu0 %v1311
    %1751 = vmatprep.subr.bf16.mxu0 %v1316
    %1752 = vmatpush1.bf16.msra.mxu0 %v1315
    %1753 = vmatprep.mubr.bf16.mxu0 %v346
    %1754 = vmatmul.mubr.bf16.gmra.mrb[0].mxu0 %v332
    %v1755 = vpop.f32.mrb[0].mxu0
    %v1756 = vadd.f32 %v1715, %v1755
    %v1757 = vpop.f32.mrb[0].mxu0
    %v1758 = vadd.f32 %v1717, %v1757
    %v1759 = vpop.f32.mrb[0].mxu0
    %v1760 = vpop.f32.mrb[0].mxu0
    %1761 = vdwg.mxu0
    %1762 = vmatprep.subr.bf16.mxu0 %v1320
    %1763 = vmatpush1.bf16.msra.mxu0 %v1319
    %1764 = vmatprep.subr.bf16.mxu0 %v1324
    %1765 = vmatpush1.bf16.msra.mxu0 %v1323
    %1766 = vmatprep.subr.bf16.mxu0 %v1328
    %1767 = vmatpush1.bf16.msra.mxu0 %v1327
    %1768 = vmatprep.subr.bf16.mxu0 %v1332
    %1769 = vmatpush1.bf16.msra.mxu0 %v1331
    %1770 = vmatprep.subr.bf16.mxu0 %v1336
    %1771 = vmatpush1.bf16.msra.mxu0 %v1335
    %1772 = vmatprep.subr.bf16.mxu0 %v1340
    %1773 = vmatpush1.bf16.msra.mxu0 %v1339
    %1774 = vmatprep.subr.bf16.mxu0 %v1344
    %1775 = vmatpush1.bf16.msra.mxu0 %v1343
    %1776 = vmatprep.subr.bf16.mxu0 %v1348
    %1777 = vmatpush1.bf16.msra.mxu0 %v1347
    %1778 = vmatprep.subr.bf16.mxu0 %v1352
    %1779 = vmatpush1.bf16.msra.mxu0 %v1351
    %1780 = vmatprep.subr.bf16.mxu0 %v1356
    %1781 = vmatpush1.bf16.msra.mxu0 %v1355
    %1782 = vmatprep.subr.bf16.mxu0 %v1360
    %1783 = vmatpush1.bf16.msra.mxu0 %v1359
    %1784 = vmatprep.subr.bf16.mxu0 %v1364
    %1785 = vmatpush1.bf16.msra.mxu0 %v1363
    %1786 = vmatprep.subr.bf16.mxu0 %v1368
    %1787 = vmatpush1.bf16.msra.mxu0 %v1367
    %1788 = vmatprep.subr.bf16.mxu0 %v1372
    %1789 = vmatpush1.bf16.msra.mxu0 %v1371
    %1790 = vmatprep.subr.bf16.mxu0 %v1376
    %1791 = vmatpush1.bf16.msra.mxu0 %v1375
    %1792 = vmatprep.subr.bf16.mxu0 %v1380
    %1793 = vmatpush1.bf16.msra.mxu0 %v1379
    %1794 = vmatprep.mubr.bf16.mxu0 %v350
    %1795 = vmatmul.mubr.bf16.gmra.mrb[0].mxu0 %v348
    %v1796 = vpop.f32.mrb[0].mxu0
    %v1797 = vadd.f32 %v1756, %v1796
    %v1798 = vpop.f32.mrb[0].mxu0
    %v1799 = vadd.f32 %v1758, %v1798
    %v1800 = vpop.f32.mrb[0].mxu0
    %v1801 = vpop.f32.mrb[0].mxu0
    %1802 = vdwg.mxu0
    %1803 = vmatprep.subr.bf16.mxu0 %v1130
    %1804 = vmatpush1.bf16.msra.mxu0 %v1129
    %1805 = vmatprep.subr.bf16.mxu0 %v1134
    %1806 = vmatpush1.bf16.msra.mxu0 %v1133
    %1807 = vmatprep.subr.bf16.mxu0 %v1138
    %1808 = vmatpush1.bf16.msra.mxu0 %v1137
    %1809 = vmatprep.subr.bf16.mxu0 %v1142
    %1810 = vmatpush1.bf16.msra.mxu0 %v1141
    %1811 = vmatprep.subr.bf16.mxu0 %v1146
    %1812 = vmatpush1.bf16.msra.mxu0 %v1145
    %1813 = vmatprep.subr.bf16.mxu0 %v1150
    %1814 = vmatpush1.bf16.msra.mxu0 %v1149
    %1815 = vmatprep.subr.bf16.mxu0 %v1154
    %1816 = vmatpush1.bf16.msra.mxu0 %v1153
    %1817 = vmatprep.subr.bf16.mxu0 %v1158
    %1818 = vmatpush1.bf16.msra.mxu0 %v1157
    %1819 = vmatprep.subr.bf16.mxu0 %v1162
    %1820 = vmatpush1.bf16.msra.mxu0 %v1161
    %1821 = vmatprep.subr.bf16.mxu0 %v1166
    %1822 = vmatpush1.bf16.msra.mxu0 %v1165
    %1823 = vmatprep.subr.bf16.mxu0 %v1170
    %1824 = vmatpush1.bf16.msra.mxu0 %v1169
    %1825 = vmatprep.subr.bf16.mxu0 %v1174
    %1826 = vmatpush1.bf16.msra.mxu0 %v1173
    %1827 = vmatprep.subr.bf16.mxu0 %v1178
    %1828 = vmatpush1.bf16.msra.mxu0 %v1177
    %1829 = vmatprep.subr.bf16.mxu0 %v1182
    %1830 = vmatpush1.bf16.msra.mxu0 %v1181
    %1831 = vmatprep.subr.bf16.mxu0 %v1186
    %1832 = vmatpush1.bf16.msra.mxu0 %v1185
    %1833 = vmatprep.subr.bf16.mxu0 %v1190
    %1834 = vmatpush1.bf16.msra.mxu0 %v1189
    %1835 = vmatprep.mubr.bf16.mxu0 %v339
    %1836 = vmatmul.mubr.bf16.gmra.mrb[0].mxu0 %v325
    %v1837 = vpop.f32.mrb[0].mxu0
    %v1838 = vadd.f32 %v292, %v1837
    %v1839 = vpop.f32.mrb[0].mxu0
    %v1840 = vadd.f32 %v296, %v1839
    %v1841 = vpop.f32.mrb[0].mxu0
    %v1842 = vpop.f32.mrb[0].mxu0
    %1843 = vdwg.mxu0
    %1844 = vmatprep.subr.bf16.mxu0 %v1194
    %1845 = vmatpush1.bf16.msra.mxu0 %v1193
    %1846 = vmatprep.subr.bf16.mxu0 %v1198
    %1847 = vmatpush1.bf16.msra.mxu0 %v1197
    %1848 = vmatprep.subr.bf16.mxu0 %v1202
    %1849 = vmatpush1.bf16.msra.mxu0 %v1201
    %1850 = vmatprep.subr.bf16.mxu0 %v1206
    %1851 = vmatpush1.bf16.msra.mxu0 %v1205
    %1852 = vmatprep.subr.bf16.mxu0 %v1210
    %1853 = vmatpush1.bf16.msra.mxu0 %v1209
    %1854 = vmatprep.subr.bf16.mxu0 %v1214
    %1855 = vmatpush1.bf16.msra.mxu0 %v1213
    %1856 = vmatprep.subr.bf16.mxu0 %v1218
    %1857 = vmatpush1.bf16.msra.mxu0 %v1217
    %1858 = vmatprep.subr.bf16.mxu0 %v1222
    %1859 = vmatpush1.bf16.msra.mxu0 %v1221
    %1860 = vmatprep.subr.bf16.mxu0 %v1226
    %1861 = vmatpush1.bf16.msra.mxu0 %v1225
    %1862 = vmatprep.subr.bf16.mxu0 %v1230
    %1863 = vmatpush1.bf16.msra.mxu0 %v1229
    %1864 = vmatprep.subr.bf16.mxu0 %v1234
    %1865 = vmatpush1.bf16.msra.mxu0 %v1233
    %1866 = vmatprep.subr.bf16.mxu0 %v1238
    %1867 = vmatpush1.bf16.msra.mxu0 %v1237
    %1868 = vmatprep.subr.bf16.mxu0 %v1242
    %1869 = vmatpush1.bf16.msra.mxu0 %v1241
    %1870 = vmatprep.subr.bf16.mxu0 %v1246
    %1871 = vmatpush1.bf16.msra.mxu0 %v1245
    %1872 = vmatprep.subr.bf16.mxu0 %v1250
    %1873 = vmatpush1.bf16.msra.mxu0 %v1249
    %1874 = vmatprep.subr.bf16.mxu0 %v1254
    %1875 = vmatpush1.bf16.msra.mxu0 %v1253
    %1876 = vmatprep.mubr.bf16.mxu0 %v349
    %1877 = vmatmul.mubr.bf16.gmra.mrb[0].mxu0 %v347
    %v1878 = vpop.f32.mrb[0].mxu0
    %v1879 = vadd.f32 %v1838, %v1878
    %v1880 = vpop.f32.mrb[0].mxu0
    %v1881 = vadd.f32 %v1840, %v1880
    %v1882 = vpop.f32.mrb[0].mxu0
    %v1883 = vpop.f32.mrb[0].mxu0
    %1884 = vdwg.mxu0
    %1885 = vmatprep.subr.bf16.mxu0 %v1258
    %1886 = vmatpush1.bf16.msra.mxu0 %v1257
    %1887 = vmatprep.subr.bf16.mxu0 %v1262
    %1888 = vmatpush1.bf16.msra.mxu0 %v1261
    %1889 = vmatprep.subr.bf16.mxu0 %v1266
    %1890 = vmatpush1.bf16.msra.mxu0 %v1265
    %1891 = vmatprep.subr.bf16.mxu0 %v1270
    %1892 = vmatpush1.bf16.msra.mxu0 %v1269
    %1893 = vmatprep.subr.bf16.mxu0 %v1274
    %1894 = vmatpush1.bf16.msra.mxu0 %v1273
    %1895 = vmatprep.subr.bf16.mxu0 %v1278
    %1896 = vmatpush1.bf16.msra.mxu0 %v1277
    %1897 = vmatprep.subr.bf16.mxu0 %v1282
    %1898 = vmatpush1.bf16.msra.mxu0 %v1281
    %1899 = vmatprep.subr.bf16.mxu0 %v1286
    %1900 = vmatpush1.bf16.msra.mxu0 %v1285
    %1901 = vmatprep.subr.bf16.mxu0 %v1290
    %1902 = vmatpush1.bf16.msra.mxu0 %v1289
    %1903 = vmatprep.subr.bf16.mxu0 %v1294
    %1904 = vmatpush1.bf16.msra.mxu0 %v1293
    %1905 = vmatprep.subr.bf16.mxu0 %v1298
    %1906 = vmatpush1.bf16.msra.mxu0 %v1297
    %1907 = vmatprep.subr.bf16.mxu0 %v1302
    %1908 = vmatpush1.bf16.msra.mxu0 %v1301
    %1909 = vmatprep.subr.bf16.mxu0 %v1306
    %1910 = vmatpush1.bf16.msra.mxu0 %v1305
    %1911 = vmatprep.subr.bf16.mxu0 %v1310
    %1912 = vmatpush1.bf16.msra.mxu0 %v1309
    %1913 = vmatprep.subr.bf16.mxu0 %v1314
    %1914 = vmatpush1.bf16.msra.mxu0 %v1313
    %1915 = vmatprep.subr.bf16.mxu0 %v1318
    %1916 = vmatpush1.bf16.msra.mxu0 %v1317
    %1917 = vmatprep.mubr.bf16.mxu0 %v346
    %1918 = vmatmul.mubr.bf16.gmra.mrb[0].mxu0 %v332
    %v1919 = vpop.f32.mrb[0].mxu0
    %v1920 = vadd.f32 %v1879, %v1919
    %v1921 = vpop.f32.mrb[0].mxu0
    %v1922 = vadd.f32 %v1881, %v1921
    %v1923 = vpop.f32.mrb[0].mxu0
    %v1924 = vpop.f32.mrb[0].mxu0
    %1925 = vdwg.mxu0
    %1926 = vmatprep.subr.bf16.mxu0 %v1322
    %1927 = vmatpush1.bf16.msra.mxu0 %v1321
    %1928 = vmatprep.subr.bf16.mxu0 %v1326
    %1929 = vmatpush1.bf16.msra.mxu0 %v1325
    %1930 = vmatprep.subr.bf16.mxu0 %v1330
    %1931 = vmatpush1.bf16.msra.mxu0 %v1329
    %1932 = vmatprep.subr.bf16.mxu0 %v1334
    %1933 = vmatpush1.bf16.msra.mxu0 %v1333
    %1934 = vmatprep.subr.bf16.mxu0 %v1338
    %1935 = vmatpush1.bf16.msra.mxu0 %v1337
    %1936 = vmatprep.subr.bf16.mxu0 %v1342
    %1937 = vmatpush1.bf16.msra.mxu0 %v1341
    %1938 = vmatprep.subr.bf16.mxu0 %v1346
    %1939 = vmatpush1.bf16.msra.mxu0 %v1345
    %1940 = vmatprep.subr.bf16.mxu0 %v1350
    %1941 = vmatpush1.bf16.msra.mxu0 %v1349
    %1942 = vmatprep.subr.bf16.mxu0 %v1354
    %1943 = vmatpush1.bf16.msra.mxu0 %v1353
    %1944 = vmatprep.subr.bf16.mxu0 %v1358
    %1945 = vmatpush1.bf16.msra.mxu0 %v1357
    %1946 = vmatprep.subr.bf16.mxu0 %v1362
    %1947 = vmatpush1.bf16.msra.mxu0 %v1361
    %1948 = vmatprep.subr.bf16.mxu0 %v1366
    %1949 = vmatpush1.bf16.msra.mxu0 %v1365
    %1950 = vmatprep.subr.bf16.mxu0 %v1370
    %1951 = vmatpush1.bf16.msra.mxu0 %v1369
    %1952 = vmatprep.subr.bf16.mxu0 %v1374
    %1953 = vmatpush1.bf16.msra.mxu0 %v1373
    %1954 = vmatprep.subr.bf16.mxu0 %v1378
    %1955 = vmatpush1.bf16.msra.mxu0 %v1377
    %1956 = vmatprep.subr.bf16.mxu0 %v1382
    %1957 = vmatpush1.bf16.msra.mxu0 %v1381
    %1958 = vmatprep.mubr.bf16.mxu0 %v350
    %1959 = vmatmul.mubr.bf16.gmra.mrb[0].mxu0 %v348
    %v1960 = vpop.f32.mrb[0].mxu0
    %v1961 = vadd.f32 %v1920, %v1960
    %v1962 = vpop.f32.mrb[0].mxu0
    %v1963 = vadd.f32 %v1922, %v1962
    %v1964 = vpop.f32.mrb[0].mxu0
    %v1965 = vpop.f32.mrb[0].mxu0
    %1966 = vdwg.mxu0
    %v1967 = vmax.f32 %v1797, 0.0
    %v1968 = vmax.f32 %v1799, 0.0
    %v1969 = vmax.f32 %v1961, 0.0
    %v1970 = vmax.f32 %v1963, 0.0
    %v1971 = vpack.c.bf16 %v1967, %v1967
    %v1972 = vpack.c.bf16 %v1968, %v1968
    %v1973 = vpack.c.bf16 %v1969, %v1969
    %v1974 = vpack.c.bf16 %v1970, %v1970
    %v1975 = vld [vmem:[%s3] sm:$0xf]
    %v1976 = vld [vmem:[%s3 + $0x4] sm:$0xf]
    %v1977 = vld [vmem:[%s3 + $0x8] sm:$0xf]
    %v1978 = vld [vmem:[%s3 + $0xc] sm:$0xf]
    %v1979 = vld [vmem:[%s3 + $0x10] sm:$0xf]
    %v1980 = vld [vmem:[%s3 + $0x14] sm:$0xf]
    %v1981 = vld [vmem:[%s3 + $0x18] sm:$0xf]
    %v1982 = vld [vmem:[%s3 + $0x1c] sm:$0xf]
    %v1983 = vld [vmem:[%s3 + $0x20] sm:$0xf]
    %v1984 = vld [vmem:[%s3 + $0x24] sm:$0xf]
    %v1985 = vld [vmem:[%s3 + $0x28] sm:$0xf]
    %v1986 = vld [vmem:[%s3 + $0x2c] sm:$0xf]
    %v1987 = vld [vmem:[%s3 + $0x30] sm:$0xf]
    %v1988 = vld [vmem:[%s3 + $0x34] sm:$0xf]
    %v1989 = vld [vmem:[%s3 + $0x38] sm:$0xf]
    %v1990 = vld [vmem:[%s3 + $0x3c] sm:$0xf]
    %v1991 = vld [vmem:[%s3 + $0x40] sm:$0xf]
    %v1992 = vld [vmem:[%s3 + $0x44] sm:$0xf]
    %v1993 = vld [vmem:[%s3 + $0x48] sm:$0xf]
    %v1994 = vld [vmem:[%s3 + $0x4c] sm:$0xf]
    %v1995 = vld [vmem:[%s3 + $0x50] sm:$0xf]
    %v1996 = vld [vmem:[%s3 + $0x54] sm:$0xf]
    %v1997 = vld [vmem:[%s3 + $0x58] sm:$0xf]
    %v1998 = vld [vmem:[%s3 + $0x5c] sm:$0xf]
    %v1999 = vld [vmem:[%s3 + $0x60] sm:$0xf]
    %v2000 = vld [vmem:[%s3 + $0x64] sm:$0xf]
    %v2001 = vld [vmem:[%s3 + $0x68] sm:$0xf]
    %v2002 = vld [vmem:[%s3 + $0x6c] sm:$0xf]
    %v2003 = vld [vmem:[%s3 + $0x70] sm:$0xf]
    %v2004 = vld [vmem:[%s3 + $0x74] sm:$0xf]
    %v2005 = vld [vmem:[%s3 + $0x78] sm:$0xf]
    %v2006 = vld [vmem:[%s3 + $0x7c] sm:$0xf]
    %v2007 = vld [vmem:[%s3 + $0x80] sm:$0xf]
    %v2008 = vld [vmem:[%s3 + $0x84] sm:$0xf]
    %v2009 = vld [vmem:[%s3 + $0x88] sm:$0xf]
    %v2010 = vld [vmem:[%s3 + $0x8c] sm:$0xf]
    %v2011 = vld [vmem:[%s3 + $0x90] sm:$0xf]
    %v2012 = vld [vmem:[%s3 + $0x94] sm:$0xf]
    %v2013 = vld [vmem:[%s3 + $0x98] sm:$0xf]
    %v2014 = vld [vmem:[%s3 + $0x9c] sm:$0xf]
    %v2015 = vld [vmem:[%s3 + $0xa0] sm:$0xf]
    %v2016 = vld [vmem:[%s3 + $0xa4] sm:$0xf]
    %v2017 = vld [vmem:[%s3 + $0xa8] sm:$0xf]
    %v2018 = vld [vmem:[%s3 + $0xac] sm:$0xf]
    %v2019 = vld [vmem:[%s3 + $0xb0] sm:$0xf]
    %v2020 = vld [vmem:[%s3 + $0xb4] sm:$0xf]
    %v2021 = vld [vmem:[%s3 + $0xb8] sm:$0xf]
    %v2022 = vld [vmem:[%s3 + $0xbc] sm:$0xf]
    %v2023 = vld [vmem:[%s3 + $0xc0] sm:$0xf]
    %v2024 = vld [vmem:[%s3 + $0xc4] sm:$0xf]
    %v2025 = vld [vmem:[%s3 + $0xc8] sm:$0xf]
    %v2026 = vld [vmem:[%s3 + $0xcc] sm:$0xf]
    %v2027 = vld [vmem:[%s3 + $0xd0] sm:$0xf]
    %v2028 = vld [vmem:[%s3 + $0xd4] sm:$0xf]
    %v2029 = vld [vmem:[%s3 + $0xd8] sm:$0xf]
    %v2030 = vld [vmem:[%s3 + $0xdc] sm:$0xf]
    %v2031 = vld [vmem:[%s3 + $0xe0] sm:$0xf]
    %v2032 = vld [vmem:[%s3 + $0xe4] sm:$0xf]
    %v2033 = vld [vmem:[%s3 + $0xe8] sm:$0xf]
    %v2034 = vld [vmem:[%s3 + $0xec] sm:$0xf]
    %v2035 = vld [vmem:[%s3 + $0xf0] sm:$0xf]
    %v2036 = vld [vmem:[%s3 + $0xf4] sm:$0xf]
    %v2037 = vld [vmem:[%s3 + $0xf8] sm:$0xf]
    %v2038 = vld [vmem:[%s3 + $0xfc] sm:$0xf]
    %v2039 = vld [vmem:[%s4] sm:$0x1]
    %v2041 = vlaneseq
    %v2042 = vshrl.u32 %v2041, 7
    %v2043 = vsub.s32 0, %v2042
    %v2044 = vrot.slane %v2039, %v2043
    %v2110 = vunpack.c.l.b16 %v1975
    %v2111 = vunpack.c.l.b16 %v1976
    %v2112 = vunpack.c.l.b16 %v1977
    %v2113 = vunpack.c.l.b16 %v1978
    %v2114 = vunpack.c.l.b16 %v1979
    %v2115 = vunpack.c.l.b16 %v1980
    %v2116 = vunpack.c.l.b16 %v1981
    %v2117 = vunpack.c.l.b16 %v1982
    %v2118 = vunpack.c.l.b16 %v1983
    %v2119 = vunpack.c.l.b16 %v1984
    %v2120 = vunpack.c.l.b16 %v1985
    %v2121 = vunpack.c.l.b16 %v1986
    %v2122 = vunpack.c.l.b16 %v1987
    %v2123 = vunpack.c.l.b16 %v1988
    %v2124 = vunpack.c.l.b16 %v1989
    %v2125 = vunpack.c.l.b16 %v1990
    %v2126 = vunpack.c.l.b16 %v1991
    %v2127 = vunpack.c.l.b16 %v1992
    %v2128 = vunpack.c.l.b16 %v1993
    %v2129 = vunpack.c.l.b16 %v1994
    %v2130 = vunpack.c.l.b16 %v1995
    %v2131 = vunpack.c.l.b16 %v1996
    %v2132 = vunpack.c.l.b16 %v1997
    %v2133 = vunpack.c.l.b16 %v1998
    %v2134 = vunpack.c.l.b16 %v1999
    %v2135 = vunpack.c.l.b16 %v2000
    %v2136 = vunpack.c.l.b16 %v2001
    %v2137 = vunpack.c.l.b16 %v2002
    %v2138 = vunpack.c.l.b16 %v2003
    %v2139 = vunpack.c.l.b16 %v2004
    %v2140 = vunpack.c.l.b16 %v2005
    %v2141 = vunpack.c.l.b16 %v2006
    %v2142 = vunpack.c.l.b16 %v2007
    %v2143 = vunpack.c.l.b16 %v2008
    %v2144 = vunpack.c.l.b16 %v2009
    %v2145 = vunpack.c.l.b16 %v2010
    %v2146 = vunpack.c.l.b16 %v2011
    %v2147 = vunpack.c.l.b16 %v2012
    %v2148 = vunpack.c.l.b16 %v2013
    %v2149 = vunpack.c.l.b16 %v2014
    %v2150 = vunpack.c.l.b16 %v2015
    %v2151 = vunpack.c.l.b16 %v2016
    %v2152 = vunpack.c.l.b16 %v2017
    %v2153 = vunpack.c.l.b16 %v2018
    %v2154 = vunpack.c.l.b16 %v2019
    %v2155 = vunpack.c.l.b16 %v2020
    %v2156 = vunpack.c.l.b16 %v2021
    %v2157 = vunpack.c.l.b16 %v2022
    %v2158 = vunpack.c.l.b16 %v2023
    %v2159 = vunpack.c.l.b16 %v2024
    %v2160 = vunpack.c.l.b16 %v2025
    %v2161 = vunpack.c.l.b16 %v2026
    %v2162 = vunpack.c.l.b16 %v2027
    %v2163 = vunpack.c.l.b16 %v2028
    %v2164 = vunpack.c.l.b16 %v2029
    %v2165 = vunpack.c.l.b16 %v2030
    %v2166 = vunpack.c.l.b16 %v2031
    %v2167 = vunpack.c.l.b16 %v2032
    %v2168 = vunpack.c.l.b16 %v2033
    %v2169 = vunpack.c.l.b16 %v2034
    %v2170 = vunpack.c.l.b16 %v2035
    %v2171 = vunpack.c.l.b16 %v2036
    %v2172 = vunpack.c.l.b16 %v2037
    %v2173 = vunpack.c.l.b16 %v2038
    %v2174 = vpack.c.b16 %v2111, %v2110
    %v2175 = vpack.c.b16 %v2113, %v2112
    %v2176 = vpack.c.b16 %v2115, %v2114
    %v2177 = vpack.c.b16 %v2117, %v2116
    %v2178 = vpack.c.b16 %v2119, %v2118
    %v2179 = vpack.c.b16 %v2121, %v2120
    %v2180 = vpack.c.b16 %v2123, %v2122
    %v2181 = vpack.c.b16 %v2125, %v2124
    %v2182 = vpack.c.b16 %v2127, %v2126
    %v2183 = vpack.c.b16 %v2129, %v2128
    %v2184 = vpack.c.b16 %v2131, %v2130
    %v2185 = vpack.c.b16 %v2133, %v2132
    %v2186 = vpack.c.b16 %v2135, %v2134
    %v2187 = vpack.c.b16 %v2137, %v2136
    %v2188 = vpack.c.b16 %v2139, %v2138
    %v2189 = vpack.c.b16 %v2141, %v2140
    %v2190 = vpack.c.b16 %v2143, %v2142
    %v2191 = vpack.c.b16 %v2145, %v2144
    %v2192 = vpack.c.b16 %v2147, %v2146
    %v2193 = vpack.c.b16 %v2149, %v2148
    %v2194 = vpack.c.b16 %v2151, %v2150
    %v2195 = vpack.c.b16 %v2153, %v2152
    %v2196 = vpack.c.b16 %v2155, %v2154
    %v2197 = vpack.c.b16 %v2157, %v2156
    %v2198 = vpack.c.b16 %v2159, %v2158
    %v2199 = vpack.c.b16 %v2161, %v2160
    %v2200 = vpack.c.b16 %v2163, %v2162
    %v2201 = vpack.c.b16 %v2165, %v2164
    %v2202 = vpack.c.b16 %v2167, %v2166
    %v2203 = vpack.c.b16 %v2169, %v2168
    %v2204 = vpack.c.b16 %v2171, %v2170
    %v2205 = vpack.c.b16 %v2173, %v2172
    %2238 = vmatprep.subr.bf16.mxu0 0
    %2239 = vmatpush1.bf16.msra.mxu0 %v2174
    %2240 = vmatprep.subr.bf16.mxu0 0
    %2241 = vmatpush1.bf16.msra.mxu0 %v2175
    %2242 = vmatprep.subr.bf16.mxu0 0
    %2243 = vmatpush1.bf16.msra.mxu0 %v2176
    %2244 = vmatprep.subr.bf16.mxu0 0
    %2245 = vmatpush1.bf16.msra.mxu0 %v2177
    %2246 = vmatprep.subr.bf16.mxu0 0
    %2247 = vmatpush1.bf16.msra.mxu0 %v2178
    %2248 = vmatprep.subr.bf16.mxu0 0
    %2249 = vmatpush1.bf16.msra.mxu0 %v2179
    %2250 = vmatprep.subr.bf16.mxu0 0
    %2251 = vmatpush1.bf16.msra.mxu0 %v2180
    %2252 = vmatprep.subr.bf16.mxu0 0
    %2253 = vmatpush1.bf16.msra.mxu0 %v2181
    %2254 = vmatprep.subr.bf16.mxu0 0
    %2255 = vmatpush1.bf16.msra.mxu0 %v2182
    %2256 = vmatprep.subr.bf16.mxu0 0
    %2257 = vmatpush1.bf16.msra.mxu0 %v2183
    %2258 = vmatprep.subr.bf16.mxu0 0
    %2259 = vmatpush1.bf16.msra.mxu0 %v2184
    %2260 = vmatprep.subr.bf16.mxu0 0
    %2261 = vmatpush1.bf16.msra.mxu0 %v2185
    %2262 = vmatprep.subr.bf16.mxu0 0
    %2263 = vmatpush1.bf16.msra.mxu0 %v2186
    %2264 = vmatprep.subr.bf16.mxu0 0
    %2265 = vmatpush1.bf16.msra.mxu0 %v2187
    %2266 = vmatprep.subr.bf16.mxu0 0
    %2267 = vmatpush1.bf16.msra.mxu0 %v2188
    %2268 = vmatprep.subr.bf16.mxu0 0
    %2269 = vmatpush1.bf16.msra.mxu0 %v2189
    %2270 = vmatprep.mubr.bf16.mxu0 %v1972
    %2271 = vmatmul.mubr.bf16.gmra.mrb[0].mxu0 %v1971
    %v2272 = vpop.f32.mrb[0].mxu0
    %v2273 = vadd.f32 %v2044, %v2272
    %v2274 = vpop.f32.mrb[0].mxu0
    %v2275 = vpop.f32.mrb[0].mxu0
    %v2276 = vpop.f32.mrb[0].mxu0
    %2277 = vdwg.mxu0
    %2278 = vmatprep.subr.bf16.mxu0 0
    %2279 = vmatpush1.bf16.msra.mxu0 %v2190
    %2280 = vmatprep.subr.bf16.mxu0 0
    %2281 = vmatpush1.bf16.msra.mxu0 %v2191
    %2282 = vmatprep.subr.bf16.mxu0 0
    %2283 = vmatpush1.bf16.msra.mxu0 %v2192
    %2284 = vmatprep.subr.bf16.mxu0 0
    %2285 = vmatpush1.bf16.msra.mxu0 %v2193
    %2286 = vmatprep.subr.bf16.mxu0 0
    %2287 = vmatpush1.bf16.msra.mxu0 %v2194
    %2288 = vmatprep.subr.bf16.mxu0 0
    %2289 = vmatpush1.bf16.msra.mxu0 %v2195
    %2290 = vmatprep.subr.bf16.mxu0 0
    %2291 = vmatpush1.bf16.msra.mxu0 %v2196
    %2292 = vmatprep.subr.bf16.mxu0 0
    %2293 = vmatpush1.bf16.msra.mxu0 %v2197
    %2294 = vmatprep.subr.bf16.mxu0 0
    %2295 = vmatpush1.bf16.msra.mxu0 %v2198
    %2296 = vmatprep.subr.bf16.mxu0 0
    %2297 = vmatpush1.bf16.msra.mxu0 %v2199
    %2298 = vmatprep.subr.bf16.mxu0 0
    %2299 = vmatpush1.bf16.msra.mxu0 %v2200
    %2300 = vmatprep.subr.bf16.mxu0 0
    %2301 = vmatpush1.bf16.msra.mxu0 %v2201
    %2302 = vmatprep.subr.bf16.mxu0 0
    %2303 = vmatpush1.bf16.msra.mxu0 %v2202
    %2304 = vmatprep.subr.bf16.mxu0 0
    %2305 = vmatpush1.bf16.msra.mxu0 %v2203
    %2306 = vmatprep.subr.bf16.mxu0 0
    %2307 = vmatpush1.bf16.msra.mxu0 %v2204
    %2308 = vmatprep.subr.bf16.mxu0 0
    %2309 = vmatpush1.bf16.msra.mxu0 %v2205
    %2310 = vmatprep.mubr.bf16.mxu0 %v1974
    %2311 = vmatmul.mubr.bf16.gmra.mrb[0].mxu0 %v1973
    %v2312 = vpop.f32.mrb[0].mxu0
    %v2313 = vadd.f32 %v2273, %v2312
    %v2314 = vpop.f32.mrb[0].mxu0
    %v2315 = vpop.f32.mrb[0].mxu0
    %v2316 = vpop.f32.mrb[0].mxu0
    %2317 = vdwg.mxu0
    %v2318 = vmax.f32 %v2313, 0.0
    %2319 = vst [vmem:[#allocation2] sm:$0x3] %v2318
    // Predicated region
    $region22: #{lenet_forward.5} parent=1 // pred_check
      _
    $region23: #{lenet_forward.5} parent=1 // pred_check_branch
      %2321 = sbr.rel (0) target = $region25
    $region24: #{lenet_forward.5} parent=1 // pred_region
      %s2323 = ssub.s32 32, 32
      %2324 = vsyncadd [#allocation3], %s2323
      %s2326 = sshll.u32 [#allocation2], 4
      %s2327 = int_to_ptr.vmem [resolvable:$true] %s2326
      %2329 = dma.vmem_to_hbm [thread:$0]  %s2327, 32, %s5, [#allocation3]
    $region25: #{lenet_forward.5} parent=1 // pred_fallthru
      _
    // Predicated region
    $region26: #{lenet_forward.5} parent=1 // pred_check
      _
    $region27: #{lenet_forward.5} parent=1 // pred_check_branch
      %2331 = sbr.rel (0) target = $region29
    $region28: #{lenet_forward.5} parent=1 // pred_region
      %2332 = dma.done [#allocation3], 32
    $region29: #{lenet_forward.5} parent=1 // pred_fallthru
      _
    %2333 = vsyncpa [#allocation3], 1

</llo_original>
